<compile_context>
chip_gen: v7x
topology: tpu7x:2x2x1
jax: 0.10.0
libtpu: 0.0.40
codegen_flags: <defaults>
</compile_context>

<pallas_src>
import functools

import jax
import jax.numpy as jnp
from jax import lax
from jax.experimental import pallas as pl
from jax.experimental.pallas import tpu as pltpu


def _round_up(n, m):
    return (n + m - 1) // m * m


# ----------------------------------------------------------------------------
# Fused Pallas kernel: conv1x1+bn1+relu -> conv3x3+bn2+relu -> conv1x1+bn3
#                      -> +identity -> relu        (block_b images per step)
# ----------------------------------------------------------------------------
def _bottleneck_kernel(x_ref, w1_ref, b1_ref, w2_ref, b2_ref, w3_ref, b3_ref,
                       o_ref, halo_ref, *, H, W, Wp, base):
    # x_ref    : (blk, H, Wp, Cp) f32   width-padded input (junk cols are zero)
    # w1_ref   : (Cp, Wd)  bf16  (bn1 scale folded)
    # b1_ref   : (1, Wd)   f32
    # w2_ref   : (9, Wd, Wd) bf16 (bn2 scale folded), tap k = kh*3 + kw
    # b2_ref   : (1, Wd)   f32
    # w3_ref   : (Wd, Cp)  bf16  (bn3 scale folded)
    # b3_ref   : (1, Cp)   f32
    # o_ref    : (blk, H, Wp, Cp) f32   width-padded output (junk cols garbage)
    # halo_ref : (blk*Limg, Wd) bf16 VMEM scratch, flat per-image halo slabs.
    #            Flat row layout per image: pixel (h, w) of the conv2 input
    #            lives at row base + (h+1)*Wp + (w+1); the surrounding rows are
    #            the zero-padding ring.
    blk = x_ref.shape[0]
    Cp = x_ref.shape[3]
    Wd = w1_ref.shape[1]
    HWp = H * Wp
    M1 = blk * HWp
    Limg = halo_ref.shape[0] // blk
    istart = base + Wp + 1            # flat row of interior pixel (0, 0); 16-aligned

    # ---- conv1 (1x1) + bn1 bias + relu over the whole block (padded rows) ----
    x = x_ref[...].reshape(M1, Cp)                        # f32; also identity path
    y1 = jnp.dot(x.astype(jnp.bfloat16), w1_ref[...],
                 preferred_element_type=jnp.float32)
    y1 = jnp.maximum(y1 + b1_ref[...], 0.0)
    # Zero the padded-width junk columns (w >= W): when stored contiguously into
    # the halo they land exactly on the right-pad column and (wrapping) on the
    # next row's left-pad column, so the conv2 zero ring stays intact.
    row_in = lax.broadcasted_iota(jnp.int32, (M1, Wd), 0) % Wp
    y1 = jnp.where(row_in < W, y1, 0.0).astype(jnp.bfloat16)

    for b in range(blk):                                  # static unroll (blk small)
        ib = b * Limg

        # Zero ONLY the halo border strips (top ring / bottom ring + tap slack).
        # Done every step (cheap: two small aligned contiguous stores) so no
        # state is carried across grid iterations -> safe under megacore
        # parallel splitting and future spatial tiling.  The interior
        # [istart, istart+HWp) is fully overwritten right below.
        tail = Limg - istart - HWp
        halo_ref[ib:ib + istart, :] = jnp.zeros((istart, Wd), jnp.bfloat16)
        halo_ref[ib + istart + HWp:ib + Limg, :] = (
            jnp.zeros((tail, Wd), jnp.bfloat16))

        # Stage-1 activations -> halo: ONE aligned contiguous bf16 store.
        halo_ref[ib + istart:ib + istart + HWp, :] = y1[b * HWp:(b + 1) * HWp]

        # ---- conv2 (3x3, pad=1): 9 contiguous shifted taps, accumulating dots.
        # Tap k is a plain offset read of HWp flat rows starting at
        # base + kh*Wp + kw (no strided window, no reshape); output rows whose
        # in-row position >= W are junk and get dropped at the output slice.
        def tap(k):
            kh, kw = divmod(k, 3)
            off = ib + base + kh * Wp + kw
            return halo_ref[pl.ds(off, HWp), :]

        acc = jnp.dot(tap(0), w2_ref[0], preferred_element_type=jnp.float32)
        for k in range(1, 9):
            acc = acc + jnp.dot(tap(k), w2_ref[k],
                                preferred_element_type=jnp.float32)
        t = jnp.maximum(acc + b2_ref[...], 0.0).astype(jnp.bfloat16)

        # ---- conv3 (1x1) + bn3 bias + identity skip + relu ----
        y3 = jnp.dot(t, w3_ref[...], preferred_element_type=jnp.float32)
        y3 = y3 + b3_ref[...] + x[b * HWp:(b + 1) * HWp]
        o_ref[b] = jnp.maximum(y3, 0.0).reshape(H, Wp, Cp)


# ----------------------------------------------------------------------------
# Wrapper: NCHW <-> NHWC, channel/width padding, pallas_call
# ----------------------------------------------------------------------------
def _pick_block_b(B, max_blk=8):
    """Largest divisor of B <= max_blk that still leaves >= 2 grid steps."""
    best = 1
    for d in range(1, min(B, max_blk) + 1):
        if B % d == 0 and B // d >= 2:
            best = d
    return best


def bottleneck_forward(x_nchw, prep, block_b=None):
    """Fused Pallas Bottleneck forward. x_nchw: (B, Cin, H, W) float32 (NCHW)."""
    B, cin, H, W = x_nchw.shape
    Cp, Wd = prep["w1"].shape
    cout = prep["cout"]
    assert cin == prep["cin"]

    ALIGN = 16                                   # bf16 sublane packing
    Wp = _round_up(W + 2, 8)                     # padded halo-row width (>= W+2)
    base = (-(Wp + 1)) % ALIGN                   # makes the interior store aligned
    Limg = _round_up(base + (H + 2) * Wp + 2, ALIGN)   # halo rows per image

    if block_b is None:
        block_b = _pick_block_b(B)
    assert B % block_b == 0

    x_nhwc = jnp.transpose(x_nchw, (0, 2, 3, 1))                     # NCHW -> NHWC
    x_pad = jnp.pad(x_nhwc, ((0, 0), (0, 0), (0, Wp - W), (0, Cp - cin)))

    # --- explicit VMEM budget (double-buffered I/O blocks + weights + halo) ---
    blk_io = block_b * H * Wp * Cp * 4
    wbytes = ((prep["w1"].size + prep["w2"].size + prep["w3"].size) * 2
              + (prep["b1"].size + prep["b2"].size + prep["b3"].size) * 4)
    halo_bytes = block_b * Limg * Wd * 2
    tmp_bytes = block_b * H * Wp * (Cp + Wd) * 4 * 2    # live x/y1/acc/y3 values
    vmem_need = 4 * blk_io + 2 * wbytes + halo_bytes + tmp_bytes
    vmem_limit = int(min(100 * 1024 * 1024,
                         max(2 * vmem_need, 16 * 1024 * 1024)))

    flops = 2 * B * H * Wp * (Cp * Wd + 9 * Wd * Wd + Wd * Cp)
    bytes_accessed = 2 * B * H * Wp * Cp * 4 + wbytes

    kernel = functools.partial(_bottleneck_kernel, H=H, W=W, Wp=Wp, base=base)

    out_pad = pl.pallas_call(
        kernel,
        out_shape=jax.ShapeDtypeStruct((B, H, Wp, Cp), jnp.float32),
        grid=(B // block_b,),
        in_specs=[
            pl.BlockSpec((block_b, H, Wp, Cp), lambda i: (i, 0, 0, 0)),   # x block
            pl.BlockSpec((Cp, Wd), lambda i: (0, 0)),                     # w1
            pl.BlockSpec((1, Wd), lambda i: (0, 0)),                      # b1
            pl.BlockSpec((9, Wd, Wd), lambda i: (0, 0, 0)),               # w2
            pl.BlockSpec((1, Wd), lambda i: (0, 0)),                      # b2
            pl.BlockSpec((Wd, Cp), lambda i: (0, 0)),                     # w3
            pl.BlockSpec((1, Cp), lambda i: (0, 0)),                      # b3
        ],
        out_specs=pl.BlockSpec((block_b, H, Wp, Cp), lambda i: (i, 0, 0, 0)),
        scratch_shapes=[pltpu.VMEM((block_b * Limg, Wd), jnp.bfloat16)],
        compiler_params=pltpu.CompilerParams(
            dimension_semantics=("parallel",),          # megacore sharding on v7x
            vmem_limit_bytes=vmem_limit),
        cost_estimate=pl.CostEstimate(flops=flops, transcendentals=0,
                                      bytes_accessed=bytes_accessed),
    )(x_pad, prep["w1"], prep["b1"], prep["w2"], prep["b2"],
      prep["w3"], prep["b3"])

    out = out_pad[:, :, :W, :cout]                   # drop width/channel padding
    return jnp.transpose(out, (0, 3, 1, 2))          # back to NCHW


# ----------------------------------------------------------------------------
# Parameter prep (plain JAX, done once): BN folding, lane padding, bf16 cast
# ----------------------------------------------------------------------------
def _fold_bn(gamma, beta, mean, var, eps=1e-5):
    scale = gamma / jnp.sqrt(var + eps)
    bias = beta - mean * scale
    return scale, bias


def prepare_params(raw, lane=128):
    # TODO(synk): on v6e/v7x with true width >= 128 consider lane=256 to fill
    # the 256-wide MXU; on v5e keep 128 (or the true width) to avoid over-pad.
    cin, width = raw["w1"].shape
    cout = raw["w3"].shape[1]
    assert cin == cout, "identity skip path requires inplanes == planes * expansion"
    Cp = _round_up(cout, lane)
    Wd = _round_up(width, lane)

    s1, b1 = _fold_bn(*raw["bn1"])
    s2, b2 = _fold_bn(*raw["bn2"])
    s3, b3 = _fold_bn(*raw["bn3"])

    # fold BN scale into the weights, zero-pad channels to lane multiples
    w1 = jnp.zeros((Cp, Wd), jnp.float32).at[:cin, :width].set(raw["w1"] * s1)
    w2 = jnp.zeros((9, Wd, Wd), jnp.float32).at[:, :width, :width].set(
        (raw["w2_hwio"] * s2).reshape(9, width, width))   # tap k = kh*3 + kw
    w3 = jnp.zeros((Wd, Cp), jnp.float32).at[:width, :cout].set(raw["w3"] * s3)

    b1p = jnp.zeros((1, Wd), jnp.float32).at[0, :width].set(b1)
    b2p = jnp.zeros((1, Wd), jnp.float32).at[0, :width].set(b2)
    b3p = jnp.zeros((1, Cp), jnp.float32).at[0, :cout].set(b3)

    return {
        "w1": w1.astype(jnp.bfloat16), "w2": w2.astype(jnp.bfloat16),
        "w3": w3.astype(jnp.bfloat16),
        "b1": b1p, "b2": b2p, "b3": b3p,
        "cin": cin, "cout": cout, "width": width,
    }


# ----------------------------------------------------------------------------
# References for validation
# ----------------------------------------------------------------------------
def bottleneck_reference_mirrored(x_nchw, prep):
    """Mirrors the kernel numerics (bf16 matmul operands, f32 accumulation)."""
    dn = ("NHWC", "HWIO", "NHWC")
    Cp, Wd = prep["w1"].shape
    cin, cout = prep["cin"], prep["cout"]
    x = jnp.transpose(x_nchw, (0, 2, 3, 1))
    xp = jnp.pad(x, ((0, 0), (0, 0), (0, 0), (0, Cp - cin)))

    y = lax.conv_general_dilated(xp.astype(jnp.bfloat16),
                                 prep["w1"].reshape(1, 1, Cp, Wd), (1, 1),
                                 "VALID", dimension_numbers=dn,
                                 preferred_element_type=jnp.float32)
    y = jnp.maximum(y + prep["b1"][0], 0.0)
    y = lax.conv_general_dilated(y.astype(jnp.bfloat16),
                                 prep["w2"].reshape(3, 3, Wd, Wd), (1, 1),
                                 "SAME", dimension_numbers=dn,
                                 preferred_element_type=jnp.float32)
    y = jnp.maximum(y + prep["b2"][0], 0.0)
    y = lax.conv_general_dilated(y.astype(jnp.bfloat16),
                                 prep["w3"].reshape(1, 1, Wd, Cp), (1, 1),
                                 "VALID", dimension_numbers=dn,
                                 preferred_element_type=jnp.float32)
    y = jnp.maximum(y + prep["b3"][0] + xp, 0.0)[..., :cout]
    return jnp.transpose(y, (0, 3, 1, 2))


def bottleneck_reference_f32(x_nchw, raw):
    """Independent full-f32 reference (module semantics, BN in inference mode)."""
    dn = ("NHWC", "HWIO", "NHWC")
    cin, width = raw["w1"].shape
    cout = raw["w3"].shape[1]
    s1, b1 = _fold_bn(*raw["bn1"])
    s2, b2 = _fold_bn(*raw["bn2"])
    s3, b3 = _fold_bn(*raw["bn3"])
    x = jnp.transpose(x_nchw, (0, 2, 3, 1))
    y = lax.conv_general_dilated(x, raw["w1"].reshape(1, 1, cin, width),
                                 (1, 1), "VALID", dimension_numbers=dn)
    y = jnp.maximum(y * s1 + b1, 0.0)
    y = lax.conv_general_dilated(y, raw["w2_hwio"], (1, 1), "SAME",
                                 dimension_numbers=dn)
    y = jnp.maximum(y * s2 + b2, 0.0)
    y = lax.conv_general_dilated(y, raw["w3"].reshape(1, 1, width, cout),
                                 (1, 1), "VALID", dimension_numbers=dn)
    y = jnp.maximum(y * s3 + b3 + x, 0.0)
    return jnp.transpose(y, (0, 3, 1, 2))


# ----------------------------------------------------------------------------
def make_params(key, inplanes, planes, base_width=64, groups=1, expansion=4):
    width = int(planes * (base_width / 64.0)) * groups
    cout = planes * expansion
    ks = jax.random.split(key, 8)

    def bn(k, c):
        k0, k1, k2, k3 = jax.random.split(k, 4)
        gamma = jax.random.uniform(k0, (c,), minval=0.5, maxval=1.5)
        beta = 0.1 * jax.random.normal(k1, (c,))
        mean = 0.1 * jax.random.normal(k2, (c,))
        var = jax.random.uniform(k3, (c,), minval=0.5, maxval=1.5)
        return gamma, beta, mean, var

    return {
        "w1": 0.1 * jax.random.normal(ks[0], (inplanes, width), jnp.float32),
        "w2_hwio": 0.1 * jax.random.normal(ks[1], (3, 3, width, width), jnp.float32),
        "w3": 0.1 * jax.random.normal(ks[2], (width, cout), jnp.float32),
        "bn1": bn(ks[3], width), "bn2": bn(ks[4], width), "bn3": bn(ks[5], cout),
    }


if __name__ == "__main__":
    key = jax.random.PRNGKey(0)
    kx, kp = jax.random.split(key)

    B, planes, H, W = 2, 4, 16, 16
    expansion = 4
    inplanes = planes * expansion        # identity skip adds directly (no downsample)

    x = jax.random.normal(kx, (B, inplanes, H, W), jnp.float32)   # NCHW like PyTorch
    raw = make_params(kp, inplanes, planes)
    prep = prepare_params(raw)

    fwd = jax.jit(functools.partial(bottleneck_forward, prep=prep))
    out = jax.block_until_ready(fwd(x))
    assert out.shape == (B, planes * expansion, H, W)

    # tight check vs a reference mirroring the kernel's bf16/f32 numerics
    ref_m = bottleneck_reference_mirrored(x, prep)
    assert jnp.allclose(out, ref_m, atol=1e-3, rtol=1e-3), \
        "mismatch vs bf16-mirrored reference"

    # semantic check vs pure-f32 module math (bf16 weight/act quantization only;
    # BN scale is folded into bf16 weights, hence the looser tolerance)
    ref_f = bottleneck_reference_f32(x, raw)
    assert jnp.allclose(out, ref_f, atol=3e-2, rtol=3e-2), \
        "mismatch vs f32 reference"

    print("KERNEL_OK")
</pallas_src>

<mosaic_0001>
module attributes {stable_mosaic.version = 11 : i64} {
  func.func @_bottleneck_kernel(%arg0: i32, %arg1: memref<1x16x24x128xf32, #tpu.memory_space<vmem>>, %arg2: memref<128x128xbf16, #tpu.memory_space<vmem>>, %arg3: memref<1x128xf32, #tpu.memory_space<vmem>>, %arg4: memref<9x128x128xbf16, #tpu.memory_space<vmem>>, %arg5: memref<1x128xf32, #tpu.memory_space<vmem>>, %arg6: memref<128x128xbf16, #tpu.memory_space<vmem>>, %arg7: memref<1x128xf32, #tpu.memory_space<vmem>>, %arg8: memref<1x16x24x128xf32, #tpu.memory_space<vmem>>, %arg9: memref<448x128xbf16, #tpu.memory_space<vmem>>) attributes {dimension_semantics = [#tpu.dimension_semantics<parallel>], iteration_bounds = array<i64: 2>, scalar_prefetch = 0 : i64, scratch_operands = 1 : i64, tpu.core_type = #tpu.core_type<tc>, window_params = [{transform_indices = @transform_0, window_bounds = array<i64: 1, 16, 24, 128>}, {pipeline_mode = #tpu.pipeline_mode<synchronous>, transform_indices = @transform_1, window_bounds = array<i64: 128, 128>}, {pipeline_mode = #tpu.pipeline_mode<synchronous>, transform_indices = @transform_2, window_bounds = array<i64: 1, 128>}, {pipeline_mode = #tpu.pipeline_mode<synchronous>, transform_indices = @transform_3, window_bounds = array<i64: 9, 128, 128>}, {pipeline_mode = #tpu.pipeline_mode<synchronous>, transform_indices = @transform_4, window_bounds = array<i64: 1, 128>}, {pipeline_mode = #tpu.pipeline_mode<synchronous>, transform_indices = @transform_5, window_bounds = array<i64: 128, 128>}, {pipeline_mode = #tpu.pipeline_mode<synchronous>, transform_indices = @transform_6, window_bounds = array<i64: 1, 128>}, {transform_indices = @transform_7, window_bounds = array<i64: 1, 16, 24, 128>}]} {
    %c0 = arith.constant 0 : index
    %c0_0 = arith.constant 0 : index
    %c0_1 = arith.constant 0 : index
    %c0_2 = arith.constant 0 : index
    %0 = vector.load %arg1[%c0, %c0_0, %c0_1, %c0_2] : memref<1x16x24x128xf32, #tpu.memory_space<vmem>>, vector<1x16x24x128xf32>
    %1 = vector.shape_cast %0 : vector<1x16x24x128xf32> to vector<384x128xf32>
    %2 = arith.truncf %1 : vector<384x128xf32> to vector<384x128xbf16>
    %c0_3 = arith.constant 0 : index
    %c0_4 = arith.constant 0 : index
    %3 = vector.load %arg2[%c0_3, %c0_4] : memref<128x128xbf16, #tpu.memory_space<vmem>>, vector<128x128xbf16>
    %cst = arith.constant dense<0.000000e+00> : vector<384x128xf32>
    %4 = tpu.matmul %2, %3, %cst {dimension_numbers = #tpu.dot_dimension_numbers<[1], [0], [0], [1], [0, 0, 1, 1], [], []>} : vector<384x128xbf16>, vector<128x128xbf16>, vector<384x128xf32> -> vector<384x128xf32>
    %c0_5 = arith.constant 0 : index
    %c0_6 = arith.constant 0 : index
    %5 = vector.load %arg3[%c0_5, %c0_6] : memref<1x128xf32, #tpu.memory_space<vmem>>, vector<1x128xf32>
    %6 = vector.broadcast %5 : vector<1x128xf32> to vector<384x128xf32>
    %7 = arith.addf %4, %6 : vector<384x128xf32>
    %cst_7 = arith.constant 0.000000e+00 : f32
    %8 = vector.broadcast %cst_7 : f32 to vector<384x128xf32>
    %9 = arith.maximumf %7, %8 : vector<384x128xf32>
    %10 = tpu.iota {dimensions = array<i32: 0>} : vector<384x128xi32>
    %c24_i32 = arith.constant 24 : i32
    %c0_i32 = arith.constant 0 : i32
    %11 = arith.cmpi eq, %c24_i32, %c0_i32 : i32
    %c1_i32 = arith.constant 1 : i32
    %12 = arith.select %11, %c1_i32, %c24_i32 : i32
    %13 = vector.broadcast %12 : i32 to vector<384x128xi32>
    %14 = arith.remsi %10, %13 : vector<384x128xi32>
    %c0_i32_8 = arith.constant 0 : i32
    %15 = vector.broadcast %c0_i32_8 : i32 to vector<384x128xi32>
    %16 = arith.cmpi ne, %14, %15 : vector<384x128xi32>
    %c0_i32_9 = arith.constant 0 : i32
    %17 = vector.broadcast %c0_i32_9 : i32 to vector<384x128xi32>
    %18 = arith.cmpi slt, %14, %17 : vector<384x128xi32>
    %c0_i32_10 = arith.constant 0 : i32
    %19 = arith.cmpi slt, %12, %c0_i32_10 : i32
    %20 = vector.broadcast %19 : i1 to vector<384x128xi1>
    %21 = vector.broadcast %20 : vector<384x128xi1> to vector<384x128xi1>
    %22 = arith.xori %18, %21 : vector<384x128xi1>
    %23 = arith.andi %22, %16 : vector<384x128xi1>
    %24 = vector.broadcast %12 : i32 to vector<384x128xi32>
    %25 = arith.addi %14, %24 : vector<384x128xi32>
    %26 = arith.select %23, %25, %14 : vector<384x128xi1>, vector<384x128xi32>
    %c16_i32 = arith.constant 16 : i32
    %27 = vector.broadcast %c16_i32 : i32 to vector<384x128xi32>
    %28 = arith.cmpi slt, %26, %27 : vector<384x128xi32>
    %cst_11 = arith.constant 0.000000e+00 : f32
    %29 = vector.broadcast %cst_11 : f32 to vector<384x128xf32>
    %30 = arith.select %28, %9, %29 : vector<384x128xi1>, vector<384x128xf32>
    %31 = arith.truncf %30 : vector<384x128xf32> to vector<384x128xbf16>
    %cst_12 = arith.constant 0.000000e+00 : bf16
    %32 = vector.broadcast %cst_12 : bf16 to vector<32x128xbf16>
    %c0_13 = arith.constant 0 : index
    %c0_14 = arith.constant 0 : index
    %33 = vector.load %arg9[%c0_13, %c0_14] : memref<448x128xbf16, #tpu.memory_space<vmem>>, vector<32x128xbf16>
    tpu.vector_store %arg9[%c0_13, %c0_14], %32 {strides = array<i32>} : memref<448x128xbf16, #tpu.memory_space<vmem>>, vector<32x128xbf16>,
    %cst_15 = arith.constant 0.000000e+00 : bf16
    %34 = vector.broadcast %cst_15 : bf16 to vector<32x128xbf16>
    %c416 = arith.constant 416 : index
    %c0_16 = arith.constant 0 : index
    %35 = vector.load %arg9[%c416, %c0_16] : memref<448x128xbf16, #tpu.memory_space<vmem>>, vector<32x128xbf16>
    tpu.vector_store %arg9[%c416, %c0_16], %34 {strides = array<i32>} : memref<448x128xbf16, #tpu.memory_space<vmem>>, vector<32x128xbf16>,
    %c32 = arith.constant 32 : index
    %c0_17 = arith.constant 0 : index
    %36 = vector.load %arg9[%c32, %c0_17] : memref<448x128xbf16, #tpu.memory_space<vmem>>, vector<384x128xbf16>
    tpu.vector_store %arg9[%c32, %c0_17], %31 {strides = array<i32>} : memref<448x128xbf16, #tpu.memory_space<vmem>>, vector<384x128xbf16>,
    %c7 = arith.constant 7 : index
    %c0_18 = arith.constant 0 : index
    %37 = vector.load %arg9[%c7, %c0_18] : memref<448x128xbf16, #tpu.memory_space<vmem>>, vector<384x128xbf16>
    %c0_19 = arith.constant 0 : index
    %c0_20 = arith.constant 0 : index
    %c0_21 = arith.constant 0 : index
    %38 = vector.load %arg4[%c0_19, %c0_20, %c0_21] : memref<9x128x128xbf16, #tpu.memory_space<vmem>>, vector<1x128x128xbf16>
    %39 = vector.shape_cast %38 : vector<1x128x128xbf16> to vector<128x128xbf16>
    %cst_22 = arith.constant dense<0.000000e+00> : vector<384x128xf32>
    %40 = tpu.matmul %37, %39, %cst_22 {dimension_numbers = #tpu.dot_dimension_numbers<[1], [0], [0], [1], [0, 0, 1, 1], [], []>} : vector<384x128xbf16>, vector<128x128xbf16>, vector<384x128xf32> -> vector<384x128xf32>
    %c8 = arith.constant 8 : index
    %c0_23 = arith.constant 0 : index
    %41 = vector.load %arg9[%c8, %c0_23] : memref<448x128xbf16, #tpu.memory_space<vmem>>, vector<384x128xbf16>
    %c1 = arith.constant 1 : index
    %c0_24 = arith.constant 0 : index
    %c0_25 = arith.constant 0 : index
    %42 = vector.load %arg4[%c1, %c0_24, %c0_25] : memref<9x128x128xbf16, #tpu.memory_space<vmem>>, vector<1x128x128xbf16>
    %43 = vector.shape_cast %42 : vector<1x128x128xbf16> to vector<128x128xbf16>
    %cst_26 = arith.constant dense<0.000000e+00> : vector<384x128xf32>
    %44 = tpu.matmul %41, %43, %cst_26 {dimension_numbers = #tpu.dot_dimension_numbers<[1], [0], [0], [1], [0, 0, 1, 1], [], []>} : vector<384x128xbf16>, vector<128x128xbf16>, vector<384x128xf32> -> vector<384x128xf32>
    %45 = arith.addf %40, %44 : vector<384x128xf32>
    %c9 = arith.constant 9 : index
    %c0_27 = arith.constant 0 : index
    %46 = vector.load %arg9[%c9, %c0_27] : memref<448x128xbf16, #tpu.memory_space<vmem>>, vector<384x128xbf16>
    %c2 = arith.constant 2 : index
    %c0_28 = arith.constant 0 : index
    %c0_29 = arith.constant 0 : index
    %47 = vector.load %arg4[%c2, %c0_28, %c0_29] : memref<9x128x128xbf16, #tpu.memory_space<vmem>>, vector<1x128x128xbf16>
    %48 = vector.shape_cast %47 : vector<1x128x128xbf16> to vector<128x128xbf16>
    %cst_30 = arith.constant dense<0.000000e+00> : vector<384x128xf32>
    %49 = tpu.matmul %46, %48, %cst_30 {dimension_numbers = #tpu.dot_dimension_numbers<[1], [0], [0], [1], [0, 0, 1, 1], [], []>} : vector<384x128xbf16>, vector<128x128xbf16>, vector<384x128xf32> -> vector<384x128xf32>
    %50 = arith.addf %45, %49 : vector<384x128xf32>
    %c31 = arith.constant 31 : index
    %c0_31 = arith.constant 0 : index
    %51 = vector.load %arg9[%c31, %c0_31] : memref<448x128xbf16, #tpu.memory_space<vmem>>, vector<384x128xbf16>
    %c3 = arith.constant 3 : index
    %c0_32 = arith.constant 0 : index
    %c0_33 = arith.constant 0 : index
    %52 = vector.load %arg4[%c3, %c0_32, %c0_33] : memref<9x128x128xbf16, #tpu.memory_space<vmem>>, vector<1x128x128xbf16>
    %53 = vector.shape_cast %52 : vector<1x128x128xbf16> to vector<128x128xbf16>
    %cst_34 = arith.constant dense<0.000000e+00> : vector<384x128xf32>
    %54 = tpu.matmul %51, %53, %cst_34 {dimension_numbers = #tpu.dot_dimension_numbers<[1], [0], [0], [1], [0, 0, 1, 1], [], []>} : vector<384x128xbf16>, vector<128x128xbf16>, vector<384x128xf32> -> vector<384x128xf32>
    %55 = arith.addf %50, %54 : vector<384x128xf32>
    %c32_35 = arith.constant 32 : index
    %c0_36 = arith.constant 0 : index
    %56 = vector.load %arg9[%c32_35, %c0_36] : memref<448x128xbf16, #tpu.memory_space<vmem>>, vector<384x128xbf16>
    %c4 = arith.constant 4 : index
    %c0_37 = arith.constant 0 : index
    %c0_38 = arith.constant 0 : index
    %57 = vector.load %arg4[%c4, %c0_37, %c0_38] : memref<9x128x128xbf16, #tpu.memory_space<vmem>>, vector<1x128x128xbf16>
    %58 = vector.shape_cast %57 : vector<1x128x128xbf16> to vector<128x128xbf16>
    %cst_39 = arith.constant dense<0.000000e+00> : vector<384x128xf32>
    %59 = tpu.matmul %56, %58, %cst_39 {dimension_numbers = #tpu.dot_dimension_numbers<[1], [0], [0], [1], [0, 0, 1, 1], [], []>} : vector<384x128xbf16>, vector<128x128xbf16>, vector<384x128xf32> -> vector<384x128xf32>
    %60 = arith.addf %55, %59 : vector<384x128xf32>
    %c33 = arith.constant 33 : index
    %c0_40 = arith.constant 0 : index
    %61 = vector.load %arg9[%c33, %c0_40] : memref<448x128xbf16, #tpu.memory_space<vmem>>, vector<384x128xbf16>
    %c5 = arith.constant 5 : index
    %c0_41 = arith.constant 0 : index
    %c0_42 = arith.constant 0 : index
    %62 = vector.load %arg4[%c5, %c0_41, %c0_42] : memref<9x128x128xbf16, #tpu.memory_space<vmem>>, vector<1x128x128xbf16>
    %63 = vector.shape_cast %62 : vector<1x128x128xbf16> to vector<128x128xbf16>
    %cst_43 = arith.constant dense<0.000000e+00> : vector<384x128xf32>
    %64 = tpu.matmul %61, %63, %cst_43 {dimension_numbers = #tpu.dot_dimension_numbers<[1], [0], [0], [1], [0, 0, 1, 1], [], []>} : vector<384x128xbf16>, vector<128x128xbf16>, vector<384x128xf32> -> vector<384x128xf32>
    %65 = arith.addf %60, %64 : vector<384x128xf32>
    %c55 = arith.constant 55 : index
    %c0_44 = arith.constant 0 : index
    %66 = vector.load %arg9[%c55, %c0_44] : memref<448x128xbf16, #tpu.memory_space<vmem>>, vector<384x128xbf16>
    %c6 = arith.constant 6 : index
    %c0_45 = arith.constant 0 : index
    %c0_46 = arith.constant 0 : index
    %67 = vector.load %arg4[%c6, %c0_45, %c0_46] : memref<9x128x128xbf16, #tpu.memory_space<vmem>>, vector<1x128x128xbf16>
    %68 = vector.shape_cast %67 : vector<1x128x128xbf16> to vector<128x128xbf16>
    %cst_47 = arith.constant dense<0.000000e+00> : vector<384x128xf32>
    %69 = tpu.matmul %66, %68, %cst_47 {dimension_numbers = #tpu.dot_dimension_numbers<[1], [0], [0], [1], [0, 0, 1, 1], [], []>} : vector<384x128xbf16>, vector<128x128xbf16>, vector<384x128xf32> -> vector<384x128xf32>
    %70 = arith.addf %65, %69 : vector<384x128xf32>
    %c56 = arith.constant 56 : index
    %c0_48 = arith.constant 0 : index
    %71 = vector.load %arg9[%c56, %c0_48] : memref<448x128xbf16, #tpu.memory_space<vmem>>, vector<384x128xbf16>
    %c7_49 = arith.constant 7 : index
    %c0_50 = arith.constant 0 : index
    %c0_51 = arith.constant 0 : index
    %72 = vector.load %arg4[%c7_49, %c0_50, %c0_51] : memref<9x128x128xbf16, #tpu.memory_space<vmem>>, vector<1x128x128xbf16>
    %73 = vector.shape_cast %72 : vector<1x128x128xbf16> to vector<128x128xbf16>
    %cst_52 = arith.constant dense<0.000000e+00> : vector<384x128xf32>
    %74 = tpu.matmul %71, %73, %cst_52 {dimension_numbers = #tpu.dot_dimension_numbers<[1], [0], [0], [1], [0, 0, 1, 1], [], []>} : vector<384x128xbf16>, vector<128x128xbf16>, vector<384x128xf32> -> vector<384x128xf32>
    %75 = arith.addf %70, %74 : vector<384x128xf32>
    %c57 = arith.constant 57 : index
    %c0_53 = arith.constant 0 : index
    %76 = vector.load %arg9[%c57, %c0_53] : memref<448x128xbf16, #tpu.memory_space<vmem>>, vector<384x128xbf16>
    %c8_54 = arith.constant 8 : index
    %c0_55 = arith.constant 0 : index
    %c0_56 = arith.constant 0 : index
    %77 = vector.load %arg4[%c8_54, %c0_55, %c0_56] : memref<9x128x128xbf16, #tpu.memory_space<vmem>>, vector<1x128x128xbf16>
    %78 = vector.shape_cast %77 : vector<1x128x128xbf16> to vector<128x128xbf16>
    %cst_57 = arith.constant dense<0.000000e+00> : vector<384x128xf32>
    %79 = tpu.matmul %76, %78, %cst_57 {dimension_numbers = #tpu.dot_dimension_numbers<[1], [0], [0], [1], [0, 0, 1, 1], [], []>} : vector<384x128xbf16>, vector<128x128xbf16>, vector<384x128xf32> -> vector<384x128xf32>
    %80 = arith.addf %75, %79 : vector<384x128xf32>
    %c0_58 = arith.constant 0 : index
    %c0_59 = arith.constant 0 : index
    %81 = vector.load %arg5[%c0_58, %c0_59] : memref<1x128xf32, #tpu.memory_space<vmem>>, vector<1x128xf32>
    %82 = vector.broadcast %81 : vector<1x128xf32> to vector<384x128xf32>
    %83 = arith.addf %80, %82 : vector<384x128xf32>
    %cst_60 = arith.constant 0.000000e+00 : f32
    %84 = vector.broadcast %cst_60 : f32 to vector<384x128xf32>
    %85 = arith.maximumf %83, %84 : vector<384x128xf32>
    %86 = arith.truncf %85 : vector<384x128xf32> to vector<384x128xbf16>
    %c0_61 = arith.constant 0 : index
    %c0_62 = arith.constant 0 : index
    %87 = vector.load %arg6[%c0_61, %c0_62] : memref<128x128xbf16, #tpu.memory_space<vmem>>, vector<128x128xbf16>
    %cst_63 = arith.constant dense<0.000000e+00> : vector<384x128xf32>
    %88 = tpu.matmul %86, %87, %cst_63 {dimension_numbers = #tpu.dot_dimension_numbers<[1], [0], [0], [1], [0, 0, 1, 1], [], []>} : vector<384x128xbf16>, vector<128x128xbf16>, vector<384x128xf32> -> vector<384x128xf32>
    %c0_64 = arith.constant 0 : index
    %c0_65 = arith.constant 0 : index
    %89 = vector.load %arg7[%c0_64, %c0_65] : memref<1x128xf32, #tpu.memory_space<vmem>>, vector<1x128xf32>
    %90 = vector.broadcast %89 : vector<1x128xf32> to vector<384x128xf32>
    %91 = arith.addf %88, %90 : vector<384x128xf32>
    %92 = arith.addf %91, %1 : vector<384x128xf32>
    %cst_66 = arith.constant 0.000000e+00 : f32
    %93 = vector.broadcast %cst_66 : f32 to vector<384x128xf32>
    %94 = arith.maximumf %92, %93 : vector<384x128xf32>
    %95 = vector.shape_cast %94 : vector<384x128xf32> to vector<16x24x128xf32>
    %c0_67 = arith.constant 0 : index
    %c0_68 = arith.constant 0 : index
    %c0_69 = arith.constant 0 : index
    %c0_70 = arith.constant 0 : index
    %96 = vector.load %arg8[%c0_67, %c0_68, %c0_69, %c0_70] : memref<1x16x24x128xf32, #tpu.memory_space<vmem>>, vector<1x16x24x128xf32>
    %97 = vector.shape_cast %96 : vector<1x16x24x128xf32> to vector<16x24x128xf32>
    %98 = vector.shape_cast %95 : vector<16x24x128xf32> to vector<1x16x24x128xf32>
    tpu.vector_store %arg8[%c0_67, %c0_68, %c0_69, %c0_70], %98 {strides = array<i32>} : memref<1x16x24x128xf32, #tpu.memory_space<vmem>>, vector<1x16x24x128xf32>,
    return
  }
  func.func @transform_0(%arg0: i32) -> (i32, i32, i32, i32) {
    %c0_i32 = arith.constant 0 : i32
    %c0_i32_0 = arith.constant 0 : i32
    %c0_i32_1 = arith.constant 0 : i32
    %c0_i32_2 = arith.constant 0 : i32
    return %arg0, %c0_i32, %c0_i32_0, %c0_i32_1 : i32, i32, i32, i32
  }
  func.func @transform_1(%arg0: i32) -> (i32, i32) {
    %c0_i32 = arith.constant 0 : i32
    %c0_i32_0 = arith.constant 0 : i32
    %c0_i32_1 = arith.constant 0 : i32
    return %c0_i32, %c0_i32_0 : i32, i32
  }
  func.func @transform_2(%arg0: i32) -> (i32, i32) {
    %c0_i32 = arith.constant 0 : i32
    %c0_i32_0 = arith.constant 0 : i32
    %c0_i32_1 = arith.constant 0 : i32
    return %c0_i32, %c0_i32_0 : i32, i32
  }
  func.func @transform_3(%arg0: i32) -> (i32, i32, i32) {
    %c0_i32 = arith.constant 0 : i32
    %c0_i32_0 = arith.constant 0 : i32
    %c0_i32_1 = arith.constant 0 : i32
    %c0_i32_2 = arith.constant 0 : i32
    return %c0_i32, %c0_i32_0, %c0_i32_1 : i32, i32, i32
  }
  func.func @transform_4(%arg0: i32) -> (i32, i32) {
    %c0_i32 = arith.constant 0 : i32
    %c0_i32_0 = arith.constant 0 : i32
    %c0_i32_1 = arith.constant 0 : i32
    return %c0_i32, %c0_i32_0 : i32, i32
  }
  func.func @transform_5(%arg0: i32) -> (i32, i32) {
    %c0_i32 = arith.constant 0 : i32
    %c0_i32_0 = arith.constant 0 : i32
    %c0_i32_1 = arith.constant 0 : i32
    return %c0_i32, %c0_i32_0 : i32, i32
  }
  func.func @transform_6(%arg0: i32) -> (i32, i32) {
    %c0_i32 = arith.constant 0 : i32
    %c0_i32_0 = arith.constant 0 : i32
    %c0_i32_1 = arith.constant 0 : i32
    return %c0_i32, %c0_i32_0 : i32, i32
  }
  func.func @transform_7(%arg0: i32) -> (i32, i32, i32, i32) {
    %c0_i32 = arith.constant 0 : i32
    %c0_i32_0 = arith.constant 0 : i32
    %c0_i32_1 = arith.constant 0 : i32
    %c0_i32_2 = arith.constant 0 : i32
    return %arg0, %c0_i32, %c0_i32_0, %c0_i32_1 : i32, i32, i32, i32
  }
}

</mosaic_0001>

<llo_original>
// kernel: bottleneck_forward.1
$region0: #{bottleneck_forward.1}
  #allocation0 [shape = 'u32[]', space=smem, size = 0x4, offset = 0x4, fixed_abs, tag = 'smem constant byte address 0x4 - core index']
  #allocation1 [shape = 'u32[144,128]{1,0:T(1,128)}', space=vmem, size = 0x12000, scoped, tag = 'internal scratch']
  #allocation2 [shape = 'bf16[448,128]{1,0:T(16,128)(2,1)}', space=vmem, size = 0x1c000, scoped, tag = 'scratch operand']
  %s0 = inlined_call_operand.vmem [shape: f32[2,16,24,128], index: 0, kind: input, shape index: {}]
  %s1 = inlined_call_operand.vmem [shape: bf16[128,128], index: 1, kind: input, shape index: {}]
  %s2 = inlined_call_operand.vmem [shape: f32[1,128], index: 2, kind: input, shape index: {}]
  %s3 = inlined_call_operand.vmem [shape: bf16[9,128,128], index: 3, kind: input, shape index: {}]
  %s4 = inlined_call_operand.vmem [shape: f32[1,128], index: 4, kind: input, shape index: {}]
  %s5 = inlined_call_operand.vmem [shape: bf16[128,128], index: 5, kind: input, shape index: {}]
  %s6 = inlined_call_operand.vmem [shape: f32[1,128], index: 6, kind: input, shape index: {}]
  %s7 = inlined_call_operand.vmem [shape: f32[2,16,24,128], index: 7, kind: output, shape index: {}]
  %s8 = sld [smem:[#allocation0]]
  $region61: #{bottleneck_forward.1} parent=0
    _
  %s10 = ssub.s32 1, %s8
  %s11 = scalar_select 0, %s10, %s8
  loop: start=0, step=1, limit=4
  $region2: #{bottleneck_forward.1} parent=0 // loop_pre_header
    _
  $region3: #{bottleneck_forward.1} parent=0 // loop_header
    %s13 = sphi 0, %s17
    %p14 = scmp.ge.s32.totalorder %s13, 4
    %s23 = sphi 0, %s25
    %s26 = sphi 0, %s23
    %s27 = sphi 0, %s26
    %s43 = sphi 0, %s27
    %s47 = sphi 0, %s47
    %s49 = sphi 0, %s47
    %s50 = sphi 0, %s49
    %s64 = sphi 0, %s50
    %s68 = sphi 0, %s68
    %s70 = sphi 0, %s68
    %s71 = sphi 0, %s70
    %s85 = sphi 0, %s71
    %s89 = sphi 0, %s89
    %s91 = sphi 0, %s89
    %s92 = sphi 0, %s91
    %s106 = sphi 0, %s92
    %s110 = sphi 0, %s110
    %s112 = sphi 0, %s110
    %s113 = sphi 0, %s112
    %s127 = sphi 0, %s113
    %s131 = sphi 0, %s131
    %s133 = sphi 0, %s131
    %s134 = sphi 0, %s133
    %s148 = sphi 0, %s134
    %s152 = sphi 0, %s152
    %s154 = sphi 0, %s152
    %s155 = sphi 0, %s154
    %s169 = sphi 0, %s155
    %s175 = sphi 0, %s177
    %s178 = sphi 0, %s175
    %s179 = sphi 0, %s178
    %s195 = sphi 0, %s179
  $region4: #{bottleneck_forward.1} parent=0 // loop_header_branch
    %16 = sbr.rel (%p14) target = $region8
  $region5: #{bottleneck_forward.1} parent=0 // loop_body
    %s18 = ssub.s32 %s13, 1
    %s19 = ssub.s32 %s13, 2
    %s20 = sadd.s32 %s13, 1
    %s21 = ssub.s32 %s13, %s20
    %p22 = scmp.eq.s32.totalorder %s21, 0
    %s24 = sadd.s32 %s23, 1
    %s25 = scalar_select %p22, %s23, %s24
    %p28 = pneg %p22
    %p29 = scmp.eq.s32.totalorder %s13, 1
    %p30 = por %p28, %p29
    %p31 = scmp.ne.s32.totalorder %s23, %s26
    %p32 = scmp.eq.s32.totalorder %s13, 0
    %p33 = por %p31, %p32
    %p34 = scmp.ne.s32.totalorder %s23, %s26
    %p35 = scmp.eq.s32.totalorder %s18, 1
    %p36 = por %p34, %p35
    %p37 = scmp.ne.s32.totalorder %s26, %s27
    %p38 = scmp.eq.s32.totalorder %s18, 0
    %p39 = por %p37, %p38
    %p40 = scmp.ne.s32.totalorder %s26, %s27
    %p41 = scmp.eq.s32.totalorder %s19, 1
    %p42 = por %p40, %p41
    %p44 = scmp.ne.s32.totalorder %s27, %s43
    %p45 = scmp.eq.s32.totalorder %s19, 0
    %p46 = por %p44, %p45
    %s48 = sadd.s32 %s47, 1
    %p51 = scmp.eq.s32.totalorder %s13, 1
    %p52 = scmp.ne.s32.totalorder %s47, %s49
    %p53 = scmp.eq.s32.totalorder %s13, 0
    %p54 = por %p52, %p53
    %p55 = scmp.ne.s32.totalorder %s47, %s49
    %p56 = scmp.eq.s32.totalorder %s18, 1
    %p57 = por %p55, %p56
    %p58 = scmp.ne.s32.totalorder %s49, %s50
    %p59 = scmp.eq.s32.totalorder %s18, 0
    %p60 = por %p58, %p59
    %p61 = scmp.ne.s32.totalorder %s49, %s50
    %p62 = scmp.eq.s32.totalorder %s19, 1
    %p63 = por %p61, %p62
    %p65 = scmp.ne.s32.totalorder %s50, %s64
    %p66 = scmp.eq.s32.totalorder %s19, 0
    %p67 = por %p65, %p66
    %s69 = sadd.s32 %s68, 1
    %p72 = scmp.eq.s32.totalorder %s13, 1
    %p73 = scmp.ne.s32.totalorder %s68, %s70
    %p74 = scmp.eq.s32.totalorder %s13, 0
    %p75 = por %p73, %p74
    %p76 = scmp.ne.s32.totalorder %s68, %s70
    %p77 = scmp.eq.s32.totalorder %s18, 1
    %p78 = por %p76, %p77
    %p79 = scmp.ne.s32.totalorder %s70, %s71
    %p80 = scmp.eq.s32.totalorder %s18, 0
    %p81 = por %p79, %p80
    %p82 = scmp.ne.s32.totalorder %s70, %s71
    %p83 = scmp.eq.s32.totalorder %s19, 1
    %p84 = por %p82, %p83
    %p86 = scmp.ne.s32.totalorder %s71, %s85
    %p87 = scmp.eq.s32.totalorder %s19, 0
    %p88 = por %p86, %p87
    %s90 = sadd.s32 %s89, 1
    %p93 = scmp.eq.s32.totalorder %s13, 1
    %p94 = scmp.ne.s32.totalorder %s89, %s91
    %p95 = scmp.eq.s32.totalorder %s13, 0
    %p96 = por %p94, %p95
    %p97 = scmp.ne.s32.totalorder %s89, %s91
    %p98 = scmp.eq.s32.totalorder %s18, 1
    %p99 = por %p97, %p98
    %p100 = scmp.ne.s32.totalorder %s91, %s92
    %p101 = scmp.eq.s32.totalorder %s18, 0
    %p102 = por %p100, %p101
    %p103 = scmp.ne.s32.totalorder %s91, %s92
    %p104 = scmp.eq.s32.totalorder %s19, 1
    %p105 = por %p103, %p104
    %p107 = scmp.ne.s32.totalorder %s92, %s106
    %p108 = scmp.eq.s32.totalorder %s19, 0
    %p109 = por %p107, %p108
    %s111 = sadd.s32 %s110, 1
    %p114 = scmp.eq.s32.totalorder %s13, 1
    %p115 = scmp.ne.s32.totalorder %s110, %s112
    %p116 = scmp.eq.s32.totalorder %s13, 0
    %p117 = por %p115, %p116
    %p118 = scmp.ne.s32.totalorder %s110, %s112
    %p119 = scmp.eq.s32.totalorder %s18, 1
    %p120 = por %p118, %p119
    %p121 = scmp.ne.s32.totalorder %s112, %s113
    %p122 = scmp.eq.s32.totalorder %s18, 0
    %p123 = por %p121, %p122
    %p124 = scmp.ne.s32.totalorder %s112, %s113
    %p125 = scmp.eq.s32.totalorder %s19, 1
    %p126 = por %p124, %p125
    %p128 = scmp.ne.s32.totalorder %s113, %s127
    %p129 = scmp.eq.s32.totalorder %s19, 0
    %p130 = por %p128, %p129
    %s132 = sadd.s32 %s131, 1
    %p135 = scmp.eq.s32.totalorder %s13, 1
    %p136 = scmp.ne.s32.totalorder %s131, %s133
    %p137 = scmp.eq.s32.totalorder %s13, 0
    %p138 = por %p136, %p137
    %p139 = scmp.ne.s32.totalorder %s131, %s133
    %p140 = scmp.eq.s32.totalorder %s18, 1
    %p141 = por %p139, %p140
    %p142 = scmp.ne.s32.totalorder %s133, %s134
    %p143 = scmp.eq.s32.totalorder %s18, 0
    %p144 = por %p142, %p143
    %p145 = scmp.ne.s32.totalorder %s133, %s134
    %p146 = scmp.eq.s32.totalorder %s19, 1
    %p147 = por %p145, %p146
    %p149 = scmp.ne.s32.totalorder %s134, %s148
    %p150 = scmp.eq.s32.totalorder %s19, 0
    %p151 = por %p149, %p150
    %s153 = sadd.s32 %s152, 1
    %p156 = scmp.eq.s32.totalorder %s13, 1
    %p157 = scmp.ne.s32.totalorder %s152, %s154
    %p158 = scmp.eq.s32.totalorder %s13, 0
    %p159 = por %p157, %p158
    %p160 = scmp.ne.s32.totalorder %s152, %s154
    %p161 = scmp.eq.s32.totalorder %s18, 1
    %p162 = por %p160, %p161
    %p163 = scmp.ne.s32.totalorder %s154, %s155
    %p164 = scmp.eq.s32.totalorder %s18, 0
    %p165 = por %p163, %p164
    %p166 = scmp.ne.s32.totalorder %s154, %s155
    %p167 = scmp.eq.s32.totalorder %s19, 1
    %p168 = por %p166, %p167
    %p170 = scmp.ne.s32.totalorder %s155, %s169
    %p171 = scmp.eq.s32.totalorder %s19, 0
    %p172 = por %p170, %p171
    %s173 = ssub.s32 %s13, %s20
    %p174 = scmp.eq.s32.totalorder %s173, 0
    %s176 = sadd.s32 %s175, 1
    %s177 = scalar_select %p174, %s175, %s176
    %p180 = pneg %p174
    %p181 = scmp.eq.s32.totalorder %s13, 1
    %p182 = por %p180, %p181
    %p183 = scmp.ne.s32.totalorder %s175, %s178
    %p184 = scmp.eq.s32.totalorder %s13, 0
    %p185 = por %p183, %p184
    %p186 = scmp.ne.s32.totalorder %s175, %s178
    %p187 = scmp.eq.s32.totalorder %s18, 1
    %p188 = por %p186, %p187
    %p189 = scmp.ne.s32.totalorder %s178, %s179
    %p190 = scmp.eq.s32.totalorder %s18, 0
    %p191 = por %p189, %p190
    %p192 = scmp.ne.s32.totalorder %s178, %s179
    %p193 = scmp.eq.s32.totalorder %s19, 1
    %p194 = por %p192, %p193
    %p196 = scmp.ne.s32.totalorder %s179, %s195
    %p197 = scmp.eq.s32.totalorder %s19, 0
    %p198 = por %p196, %p197
    %p199 = scmp.le.s32.totalorder 1, %s13
    %p200 = scmp.lt.s32.totalorder %s13, 3
    %p201 = pnand %p199, %p200
    %p202 = pneg %p201
    // Predicated region
    $region9: #{bottleneck_forward.1} parent=5 // pred_check
      _
    $region10: #{bottleneck_forward.1} parent=5 // pred_check_branch
      %204 = sbr.rel (%p201) target = $region12
    $region11: #{bottleneck_forward.1} parent=5 // pred_region
      %s205 = ssub.s32 %s13, 1
      // Predicated region
      $region13: #{bottleneck_forward.1} parent=11 // pred_check
        %p206 = pneg %p60
      $region14: #{bottleneck_forward.1} parent=11 // pred_check_branch
        %208 = sbr.rel (%p206) target = $region16
      $region15: #{bottleneck_forward.1} parent=11 // pred_region
        _
      $region16: #{bottleneck_forward.1} parent=11 // pred_fallthru
        _
      // Predicated region
      $region17: #{bottleneck_forward.1} parent=11 // pred_check
        %p209 = pneg %p81
      $region18: #{bottleneck_forward.1} parent=11 // pred_check_branch
        %211 = sbr.rel (%p209) target = $region20
      $region19: #{bottleneck_forward.1} parent=11 // pred_region
        _
      $region20: #{bottleneck_forward.1} parent=11 // pred_fallthru
        _
      // Predicated region
      $region21: #{bottleneck_forward.1} parent=11 // pred_check
        %p212 = pneg %p102
      $region22: #{bottleneck_forward.1} parent=11 // pred_check_branch
        %214 = sbr.rel (%p212) target = $region24
      $region23: #{bottleneck_forward.1} parent=11 // pred_region
        _
      $region24: #{bottleneck_forward.1} parent=11 // pred_fallthru
        _
      // Predicated region
      $region25: #{bottleneck_forward.1} parent=11 // pred_check
        %p215 = pneg %p123
      $region26: #{bottleneck_forward.1} parent=11 // pred_check_branch
        %217 = sbr.rel (%p215) target = $region28
      $region27: #{bottleneck_forward.1} parent=11 // pred_region
        _
      $region28: #{bottleneck_forward.1} parent=11 // pred_fallthru
        _
      // Predicated region
      $region29: #{bottleneck_forward.1} parent=11 // pred_check
        %p218 = pneg %p144
      $region30: #{bottleneck_forward.1} parent=11 // pred_check_branch
        %220 = sbr.rel (%p218) target = $region32
      $region31: #{bottleneck_forward.1} parent=11 // pred_region
        _
      $region32: #{bottleneck_forward.1} parent=11 // pred_fallthru
        _
      // Predicated region
      $region33: #{bottleneck_forward.1} parent=11 // pred_check
        %p221 = pneg %p165
      $region34: #{bottleneck_forward.1} parent=11 // pred_check_branch
        %223 = sbr.rel (%p221) target = $region36
      $region35: #{bottleneck_forward.1} parent=11 // pred_region
        _
      $region36: #{bottleneck_forward.1} parent=11 // pred_fallthru
        _
    $region12: #{bottleneck_forward.1} parent=5 // pred_fallthru
      _
    %p224 = scmp.lt.s32.totalorder %s13, 2
    // Predicated region
    $region37: #{bottleneck_forward.1} parent=5 // pred_check
      %p225 = pneg %p224
    $region38: #{bottleneck_forward.1} parent=5 // pred_check_branch
      %227 = sbr.rel (%p225) target = $region40
    $region39: #{bottleneck_forward.1} parent=5 // pred_region
      // Predicated region
      $region41: #{bottleneck_forward.1} parent=39 // pred_check
        %p228 = pneg %p33
      $region42: #{bottleneck_forward.1} parent=39 // pred_check_branch
        %230 = sbr.rel (%p228) target = $region44
      $region43: #{bottleneck_forward.1} parent=39 // pred_region
        %p231 = scmp.lt.s32.totalorder %s13, 1
        %s232 = scalar_select %p231, %s13, 1
        %s233 = smul.addr %s232, 48
        %s234 = smul.addr %s233, 8
        %s235 = scalar_lea.vmem %s0, %s234
      $region44: #{bottleneck_forward.1} parent=39 // pred_fallthru
        _
    $region40: #{bottleneck_forward.1} parent=5 // pred_fallthru
      _
    %p236 = scmp.le.s32.totalorder 1, %s13
    %p237 = scmp.lt.s32.totalorder %s13, 3
    %p238 = pnand %p236, %p237
    %p239 = pneg %p238
    // Predicated region
    $region45: #{bottleneck_forward.1} parent=5 // pred_check
      _
    $region46: #{bottleneck_forward.1} parent=5 // pred_check_branch
      %241 = sbr.rel (%p238) target = $region48
    $region47: #{bottleneck_forward.1} parent=5 // pred_region
      %s242 = ssub.s32 %s13, 1
      %p243 = scmp.lt.s32.totalorder %s18, 1
      %s244 = scalar_select %p243, %s18, 1
      %s245 = smul.addr %s244, 48
      %s246 = smul.addr %s245, 8
      %s247 = scalar_lea.vmem %s0, %s246
      %p248 = pneg %p39
      %p249 = pneg %p36
      %p250 = pneg %p60
      %p251 = pneg %p57
      %p252 = pneg %p81
      %p253 = pneg %p78
      %p254 = pneg %p102
      %p255 = pneg %p99
      %p256 = pneg %p123
      %p257 = pneg %p120
      %p258 = pneg %p144
      %p259 = pneg %p141
      %p260 = pneg %p165
      %p261 = pneg %p162
      %p262 = pneg %p191
      %p263 = pneg %p188
      %p264 = scmp.lt.s32.totalorder %s18, 1
      %s265 = scalar_select %p264, %s18, 1
      %s266 = smul.addr %s265, 48
      %s267 = smul.addr %s266, 8
      %s268 = scalar_lea.vmem %s7, %s267
      %p269 = scmp.lt.s32.totalorder %s18, 1
      %s270 = scalar_select %p269, %s18, 1
      %s271 = smul.addr %s270, 48
      %s272 = smul.addr %s271, 8
      %s273 = scalar_lea.vmem %s0, %s272
      %p274 = scmp.lt.s32.totalorder %s18, 1
      %s275 = scalar_select %p274, %s18, 1
      %s276 = smul.addr %s275, 48
      %s277 = smul.addr %s276, 8
      %s278 = scalar_lea.vmem %s7, %s277
      %v280 = vld [vmem:[%s273] sm:$0xff]
      %v281 = vld [vmem:[%s273 + $0x8] sm:$0xff]
      %v282 = vld [vmem:[%s273 + $0x10] sm:$0xff]
      %v283 = vld [vmem:[%s273 + $0x18] sm:$0xff]
      %v284 = vld [vmem:[%s273 + $0x20] sm:$0xff]
      %v285 = vld [vmem:[%s273 + $0x28] sm:$0xff]
      %v286 = vld [vmem:[%s273 + $0x30] sm:$0xff]
      %v287 = vld [vmem:[%s273 + $0x38] sm:$0xff]
      %v288 = vld [vmem:[%s273 + $0x40] sm:$0xff]
      %v289 = vld [vmem:[%s273 + $0x48] sm:$0xff]
      %v290 = vld [vmem:[%s273 + $0x50] sm:$0xff]
      %v291 = vld [vmem:[%s273 + $0x58] sm:$0xff]
      %v292 = vld [vmem:[%s273 + $0x60] sm:$0xff]
      %v293 = vld [vmem:[%s273 + $0x68] sm:$0xff]
      %v294 = vld [vmem:[%s273 + $0x70] sm:$0xff]
      %v295 = vld [vmem:[%s273 + $0x78] sm:$0xff]
      %v296 = vld [vmem:[%s273 + $0x80] sm:$0xff]
      %v297 = vld [vmem:[%s273 + $0x88] sm:$0xff]
      %v298 = vld [vmem:[%s273 + $0x90] sm:$0xff]
      %v299 = vld [vmem:[%s273 + $0x98] sm:$0xff]
      %v300 = vld [vmem:[%s273 + $0xa0] sm:$0xff]
      %v301 = vld [vmem:[%s273 + $0xa8] sm:$0xff]
      %v302 = vld [vmem:[%s273 + $0xb0] sm:$0xff]
      %v303 = vld [vmem:[%s273 + $0xb8] sm:$0xff]
      %v304 = vld [vmem:[%s273 + $0xc0] sm:$0xff]
      %v305 = vld [vmem:[%s273 + $0xc8] sm:$0xff]
      %v306 = vld [vmem:[%s273 + $0xd0] sm:$0xff]
      %v307 = vld [vmem:[%s273 + $0xd8] sm:$0xff]
      %v308 = vld [vmem:[%s273 + $0xe0] sm:$0xff]
      %v309 = vld [vmem:[%s273 + $0xe8] sm:$0xff]
      %v310 = vld [vmem:[%s273 + $0xf0] sm:$0xff]
      %v311 = vld [vmem:[%s273 + $0xf8] sm:$0xff]
      %v312 = vld [vmem:[%s273 + $0x100] sm:$0xff]
      %v313 = vld [vmem:[%s273 + $0x108] sm:$0xff]
      %v314 = vld [vmem:[%s273 + $0x110] sm:$0xff]
      %v315 = vld [vmem:[%s273 + $0x118] sm:$0xff]
      %v316 = vld [vmem:[%s273 + $0x120] sm:$0xff]
      %v317 = vld [vmem:[%s273 + $0x128] sm:$0xff]
      %v318 = vld [vmem:[%s273 + $0x130] sm:$0xff]
      %v319 = vld [vmem:[%s273 + $0x138] sm:$0xff]
      %v320 = vld [vmem:[%s273 + $0x140] sm:$0xff]
      %v321 = vld [vmem:[%s273 + $0x148] sm:$0xff]
      %v322 = vld [vmem:[%s273 + $0x150] sm:$0xff]
      %v323 = vld [vmem:[%s273 + $0x158] sm:$0xff]
      %v324 = vld [vmem:[%s273 + $0x160] sm:$0xff]
      %v325 = vld [vmem:[%s273 + $0x168] sm:$0xff]
      %v326 = vld [vmem:[%s273 + $0x170] sm:$0xff]
      %v327 = vld [vmem:[%s273 + $0x178] sm:$0xff]
      %v328 = vpack.c.bf16 %v281, %v280
      %v329 = vpack.c.bf16 %v283, %v282
      %v330 = vpack.c.bf16 %v285, %v284
      %v331 = vpack.c.bf16 %v287, %v286
      %v332 = vpack.c.bf16 %v289, %v288
      %v333 = vpack.c.bf16 %v291, %v290
      %v334 = vpack.c.bf16 %v293, %v292
      %v335 = vpack.c.bf16 %v295, %v294
      %v336 = vpack.c.bf16 %v297, %v296
      %v337 = vpack.c.bf16 %v299, %v298
      %v338 = vpack.c.bf16 %v301, %v300
      %v339 = vpack.c.bf16 %v303, %v302
      %v340 = vpack.c.bf16 %v305, %v304
      %v341 = vpack.c.bf16 %v307, %v306
      %v342 = vpack.c.bf16 %v309, %v308
      %v343 = vpack.c.bf16 %v311, %v310
      %v344 = vpack.c.bf16 %v313, %v312
      %v345 = vpack.c.bf16 %v315, %v314
      %v346 = vpack.c.bf16 %v317, %v316
      %v347 = vpack.c.bf16 %v319, %v318
      %v348 = vpack.c.bf16 %v321, %v320
      %v349 = vpack.c.bf16 %v323, %v322
      %v350 = vpack.c.bf16 %v325, %v324
      %v351 = vpack.c.bf16 %v327, %v326
      %v352 = vld [vmem:[%s1] sm:$0xf]
      %v353 = vld [vmem:[%s1 + $0x4] sm:$0xf]
      %v354 = vld [vmem:[%s1 + $0x8] sm:$0xf]
      %v355 = vld [vmem:[%s1 + $0xc] sm:$0xf]
      %v356 = vld [vmem:[%s1 + $0x10] sm:$0xf]
      %v357 = vld [vmem:[%s1 + $0x14] sm:$0xf]
      %v358 = vld [vmem:[%s1 + $0x18] sm:$0xf]
      %v359 = vld [vmem:[%s1 + $0x1c] sm:$0xf]
      %v360 = vld [vmem:[%s1 + $0x20] sm:$0xf]
      %v361 = vld [vmem:[%s1 + $0x24] sm:$0xf]
      %v362 = vld [vmem:[%s1 + $0x28] sm:$0xf]
      %v363 = vld [vmem:[%s1 + $0x2c] sm:$0xf]
      %v364 = vld [vmem:[%s1 + $0x30] sm:$0xf]
      %v365 = vld [vmem:[%s1 + $0x34] sm:$0xf]
      %v366 = vld [vmem:[%s1 + $0x38] sm:$0xf]
      %v367 = vld [vmem:[%s1 + $0x3c] sm:$0xf]
      %v368 = vld [vmem:[%s2] sm:$0x1]
      %v370 = vlaneseq
      %v371 = vshrl.u32 %v370, 7
      %v372 = vsub.s32 0, %v371
      %v373 = vrot.slane %v368, %v372
      %v391 = vunpack.c.l.b16 %v352
      %v392 = vunpack.c.l.b16 %v353
      %v393 = vunpack.c.l.b16 %v354
      %v394 = vunpack.c.l.b16 %v355
      %v395 = vunpack.c.l.b16 %v356
      %v396 = vunpack.c.l.b16 %v357
      %v397 = vunpack.c.l.b16 %v358
      %v398 = vunpack.c.l.b16 %v359
      %v399 = vunpack.c.l.b16 %v360
      %v400 = vunpack.c.l.b16 %v361
      %v401 = vunpack.c.l.b16 %v362
      %v402 = vunpack.c.l.b16 %v363
      %v403 = vunpack.c.l.b16 %v364
      %v404 = vunpack.c.l.b16 %v365
      %v405 = vunpack.c.l.b16 %v366
      %v406 = vunpack.c.l.b16 %v367
      %v407 = vpack.c.b16 %v392, %v391
      %v408 = vpack.c.b16 %v394, %v393
      %v409 = vpack.c.b16 %v396, %v395
      %v410 = vpack.c.b16 %v398, %v397
      %v411 = vpack.c.b16 %v400, %v399
      %v412 = vpack.c.b16 %v402, %v401
      %v413 = vpack.c.b16 %v404, %v403
      %v414 = vpack.c.b16 %v406, %v405
      %423 = vmatprep.subr.bf16.mxu0 0
      %424 = vmatpush1.bf16.msra.mxu0 %v407
      %425 = vmatprep.subr.bf16.mxu0 0
      %426 = vmatpush1.bf16.msra.mxu0 %v408
      %427 = vmatprep.subr.bf16.mxu0 0
      %428 = vmatpush1.bf16.msra.mxu0 %v409
      %429 = vmatprep.subr.bf16.mxu0 0
      %430 = vmatpush1.bf16.msra.mxu0 %v410
      %431 = vmatprep.subr.bf16.mxu0 0
      %432 = vmatpush1.bf16.msra.mxu0 %v411
      %433 = vmatprep.subr.bf16.mxu0 0
      %434 = vmatpush1.bf16.msra.mxu0 %v412
      %435 = vmatprep.subr.bf16.mxu0 0
      %436 = vmatpush1.bf16.msra.mxu0 %v413
      %437 = vmatprep.subr.bf16.mxu0 0
      %438 = vmatpush1.bf16.msra.mxu0 %v414
      %439 = vmatprep.subr.bf16.mxu0 0
      %440 = vmatpush1.bf16.msra.mxu0 0
      %441 = vmatprep.subr.bf16.mxu0 0
      %442 = vmatpush1.bf16.msra.mxu0 0
      %443 = vmatprep.subr.bf16.mxu0 0
      %444 = vmatpush1.bf16.msra.mxu0 0
      %445 = vmatprep.subr.bf16.mxu0 0
      %446 = vmatpush1.bf16.msra.mxu0 0
      %447 = vmatprep.subr.bf16.mxu0 0
      %448 = vmatpush1.bf16.msra.mxu0 0
      %449 = vmatprep.subr.bf16.mxu0 0
      %450 = vmatpush1.bf16.msra.mxu0 0
      %451 = vmatprep.subr.bf16.mxu0 0
      %452 = vmatpush1.bf16.msra.mxu0 0
      %453 = vmatprep.subr.bf16.mxu0 0
      %454 = vmatpush1.bf16.msra.mxu0 0
      %455 = vmatprep.mubr.bf16.mxu0 0
      %456 = vmatmul.mubr.bf16.gmra.mrb[0].mxu0 %v328
      %v457 = vpop.f32.mrb[0].mxu0
      %v458 = vadd.f32 %v373, %v457
      %v459 = vpop.f32.mrb[0].mxu0
      %v460 = vpop.f32.mrb[0].mxu0
      %v461 = vadd.f32 %v373, %v460
      %v462 = vpop.f32.mrb[0].mxu0
      %463 = vmatprep.mubr.bf16.mxu0 0
      %464 = vmatmul.mubr.bf16.gmra.mrb[0].mxu0 %v329
      %v465 = vpop.f32.mrb[0].mxu0
      %v466 = vadd.f32 %v373, %v465
      %v467 = vpop.f32.mrb[0].mxu0
      %v468 = vpop.f32.mrb[0].mxu0
      %v469 = vadd.f32 %v373, %v468
      %v470 = vpop.f32.mrb[0].mxu0
      %471 = vmatprep.mubr.bf16.mxu0 0
      %472 = vmatmul.mubr.bf16.gmra.mrb[0].mxu0 %v330
      %v473 = vpop.f32.mrb[0].mxu0
      %v474 = vadd.f32 %v373, %v473
      %v475 = vpop.f32.mrb[0].mxu0
      %v476 = vpop.f32.mrb[0].mxu0
      %v477 = vadd.f32 %v373, %v476
      %v478 = vpop.f32.mrb[0].mxu0
      %479 = vmatprep.mubr.bf16.mxu0 0
      %480 = vmatmul.mubr.bf16.gmra.mrb[0].mxu0 %v331
      %v481 = vpop.f32.mrb[0].mxu0
      %v482 = vadd.f32 %v373, %v481
      %v483 = vpop.f32.mrb[0].mxu0
      %v484 = vpop.f32.mrb[0].mxu0
      %v485 = vadd.f32 %v373, %v484
      %v486 = vpop.f32.mrb[0].mxu0
      %487 = vmatprep.mubr.bf16.mxu0 0
      %488 = vmatmul.mubr.bf16.gmra.mrb[0].mxu0 %v332
      %v489 = vpop.f32.mrb[0].mxu0
      %v490 = vadd.f32 %v373, %v489
      %v491 = vpop.f32.mrb[0].mxu0
      %v492 = vpop.f32.mrb[0].mxu0
      %v493 = vadd.f32 %v373, %v492
      %v494 = vpop.f32.mrb[0].mxu0
      %495 = vmatprep.mubr.bf16.mxu0 0
      %496 = vmatmul.mubr.bf16.gmra.mrb[0].mxu0 %v333
      %v497 = vpop.f32.mrb[0].mxu0
      %v498 = vadd.f32 %v373, %v497
      %v499 = vpop.f32.mrb[0].mxu0
      %v500 = vpop.f32.mrb[0].mxu0
      %v501 = vadd.f32 %v373, %v500
      %v502 = vpop.f32.mrb[0].mxu0
      %503 = vmatprep.mubr.bf16.mxu0 0
      %504 = vmatmul.mubr.bf16.gmra.mrb[0].mxu0 %v334
      %v505 = vpop.f32.mrb[0].mxu0
      %v506 = vadd.f32 %v373, %v505
      %v507 = vpop.f32.mrb[0].mxu0
      %v508 = vpop.f32.mrb[0].mxu0
      %v509 = vadd.f32 %v373, %v508
      %v510 = vpop.f32.mrb[0].mxu0
      %511 = vmatprep.mubr.bf16.mxu0 0
      %512 = vmatmul.mubr.bf16.gmra.mrb[0].mxu0 %v335
      %v513 = vpop.f32.mrb[0].mxu0
      %v514 = vadd.f32 %v373, %v513
      %v515 = vpop.f32.mrb[0].mxu0
      %v516 = vpop.f32.mrb[0].mxu0
      %v517 = vadd.f32 %v373, %v516
      %v518 = vpop.f32.mrb[0].mxu0
      %519 = vmatprep.mubr.bf16.mxu0 0
      %520 = vmatmul.mubr.bf16.gmra.mrb[0].mxu0 %v336
      %v521 = vpop.f32.mrb[0].mxu0
      %v522 = vadd.f32 %v373, %v521
      %v523 = vpop.f32.mrb[0].mxu0
      %v524 = vpop.f32.mrb[0].mxu0
      %v525 = vadd.f32 %v373, %v524
      %v526 = vpop.f32.mrb[0].mxu0
      %527 = vmatprep.mubr.bf16.mxu0 0
      %528 = vmatmul.mubr.bf16.gmra.mrb[0].mxu0 %v337
      %v529 = vpop.f32.mrb[0].mxu0
      %v530 = vadd.f32 %v373, %v529
      %v531 = vpop.f32.mrb[0].mxu0
      %v532 = vpop.f32.mrb[0].mxu0
      %v533 = vadd.f32 %v373, %v532
      %v534 = vpop.f32.mrb[0].mxu0
      %535 = vmatprep.mubr.bf16.mxu0 0
      %536 = vmatmul.mubr.bf16.gmra.mrb[0].mxu0 %v338
      %v537 = vpop.f32.mrb[0].mxu0
      %v538 = vadd.f32 %v373, %v537
      %v539 = vpop.f32.mrb[0].mxu0
      %v540 = vpop.f32.mrb[0].mxu0
      %v541 = vadd.f32 %v373, %v540
      %v542 = vpop.f32.mrb[0].mxu0
      %543 = vmatprep.mubr.bf16.mxu0 0
      %544 = vmatmul.mubr.bf16.gmra.mrb[0].mxu0 %v339
      %v545 = vpop.f32.mrb[0].mxu0
      %v546 = vadd.f32 %v373, %v545
      %v547 = vpop.f32.mrb[0].mxu0
      %v548 = vpop.f32.mrb[0].mxu0
      %v549 = vadd.f32 %v373, %v548
      %v550 = vpop.f32.mrb[0].mxu0
      %551 = vmatprep.mubr.bf16.mxu0 0
      %552 = vmatmul.mubr.bf16.gmra.mrb[0].mxu0 %v340
      %v553 = vpop.f32.mrb[0].mxu0
      %v554 = vadd.f32 %v373, %v553
      %v555 = vpop.f32.mrb[0].mxu0
      %v556 = vpop.f32.mrb[0].mxu0
      %v557 = vadd.f32 %v373, %v556
      %v558 = vpop.f32.mrb[0].mxu0
      %559 = vmatprep.mubr.bf16.mxu0 0
      %560 = vmatmul.mubr.bf16.gmra.mrb[0].mxu0 %v341
      %v561 = vpop.f32.mrb[0].mxu0
      %v562 = vadd.f32 %v373, %v561
      %v563 = vpop.f32.mrb[0].mxu0
      %v564 = vpop.f32.mrb[0].mxu0
      %v565 = vadd.f32 %v373, %v564
      %v566 = vpop.f32.mrb[0].mxu0
      %567 = vmatprep.mubr.bf16.mxu0 0
      %568 = vmatmul.mubr.bf16.gmra.mrb[0].mxu0 %v342
      %v569 = vpop.f32.mrb[0].mxu0
      %v570 = vadd.f32 %v373, %v569
      %v571 = vpop.f32.mrb[0].mxu0
      %v572 = vpop.f32.mrb[0].mxu0
      %v573 = vadd.f32 %v373, %v572
      %v574 = vpop.f32.mrb[0].mxu0
      %575 = vmatprep.mubr.bf16.mxu0 0
      %576 = vmatmul.mubr.bf16.gmra.mrb[0].mxu0 %v343
      %v577 = vpop.f32.mrb[0].mxu0
      %v578 = vadd.f32 %v373, %v577
      %v579 = vpop.f32.mrb[0].mxu0
      %v580 = vpop.f32.mrb[0].mxu0
      %v581 = vadd.f32 %v373, %v580
      %v582 = vpop.f32.mrb[0].mxu0
      %583 = vmatprep.mubr.bf16.mxu0 0
      %584 = vmatmul.mubr.bf16.gmra.mrb[0].mxu0 %v344
      %v585 = vpop.f32.mrb[0].mxu0
      %v586 = vadd.f32 %v373, %v585
      %v587 = vpop.f32.mrb[0].mxu0
      %v588 = vpop.f32.mrb[0].mxu0
      %v589 = vadd.f32 %v373, %v588
      %v590 = vpop.f32.mrb[0].mxu0
      %591 = vmatprep.mubr.bf16.mxu0 0
      %592 = vmatmul.mubr.bf16.gmra.mrb[0].mxu0 %v345
      %v593 = vpop.f32.mrb[0].mxu0
      %v594 = vadd.f32 %v373, %v593
      %v595 = vpop.f32.mrb[0].mxu0
      %v596 = vpop.f32.mrb[0].mxu0
      %v597 = vadd.f32 %v373, %v596
      %v598 = vpop.f32.mrb[0].mxu0
      %599 = vmatprep.mubr.bf16.mxu0 0
      %600 = vmatmul.mubr.bf16.gmra.mrb[0].mxu0 %v346
      %v601 = vpop.f32.mrb[0].mxu0
      %v602 = vadd.f32 %v373, %v601
      %v603 = vpop.f32.mrb[0].mxu0
      %v604 = vpop.f32.mrb[0].mxu0
      %v605 = vadd.f32 %v373, %v604
      %v606 = vpop.f32.mrb[0].mxu0
      %607 = vmatprep.mubr.bf16.mxu0 0
      %608 = vmatmul.mubr.bf16.gmra.mrb[0].mxu0 %v347
      %v609 = vpop.f32.mrb[0].mxu0
      %v610 = vadd.f32 %v373, %v609
      %v611 = vpop.f32.mrb[0].mxu0
      %v612 = vpop.f32.mrb[0].mxu0
      %v613 = vadd.f32 %v373, %v612
      %v614 = vpop.f32.mrb[0].mxu0
      %615 = vmatprep.mubr.bf16.mxu0 0
      %616 = vmatmul.mubr.bf16.gmra.mrb[0].mxu0 %v348
      %v617 = vpop.f32.mrb[0].mxu0
      %v618 = vadd.f32 %v373, %v617
      %v619 = vpop.f32.mrb[0].mxu0
      %v620 = vpop.f32.mrb[0].mxu0
      %v621 = vadd.f32 %v373, %v620
      %v622 = vpop.f32.mrb[0].mxu0
      %623 = vmatprep.mubr.bf16.mxu0 0
      %624 = vmatmul.mubr.bf16.gmra.mrb[0].mxu0 %v349
      %v625 = vpop.f32.mrb[0].mxu0
      %v626 = vadd.f32 %v373, %v625
      %v627 = vpop.f32.mrb[0].mxu0
      %v628 = vpop.f32.mrb[0].mxu0
      %v629 = vadd.f32 %v373, %v628
      %v630 = vpop.f32.mrb[0].mxu0
      %631 = vmatprep.mubr.bf16.mxu0 0
      %632 = vmatmul.mubr.bf16.gmra.mrb[0].mxu0 %v350
      %v633 = vpop.f32.mrb[0].mxu0
      %v634 = vadd.f32 %v373, %v633
      %v635 = vpop.f32.mrb[0].mxu0
      %v636 = vpop.f32.mrb[0].mxu0
      %v637 = vadd.f32 %v373, %v636
      %v638 = vpop.f32.mrb[0].mxu0
      %639 = vmatprep.mubr.bf16.mxu0 0
      %640 = vmatmul.mubr.bf16.gmra.mrb[0].mxu0 %v351
      %v641 = vpop.f32.mrb[0].mxu0
      %v642 = vadd.f32 %v373, %v641
      %v643 = vpop.f32.mrb[0].mxu0
      %v644 = vpop.f32.mrb[0].mxu0
      %v645 = vadd.f32 %v373, %v644
      %v646 = vpop.f32.mrb[0].mxu0
      %647 = vdwg.mxu0
      %v648 = vmax.f32 %v458, 0.0
      %v649 = vmax.f32 %v461, 0.0
      %v650 = vmax.f32 %v466, 0.0
      %v651 = vmax.f32 %v469, 0.0
      %v652 = vmax.f32 %v474, 0.0
      %v653 = vmax.f32 %v477, 0.0
      %v654 = vmax.f32 %v482, 0.0
      %v655 = vmax.f32 %v485, 0.0
      %v656 = vmax.f32 %v490, 0.0
      %v657 = vmax.f32 %v493, 0.0
      %v658 = vmax.f32 %v498, 0.0
      %v659 = vmax.f32 %v501, 0.0
      %v660 = vmax.f32 %v506, 0.0
      %v661 = vmax.f32 %v509, 0.0
      %v662 = vmax.f32 %v514, 0.0
      %v663 = vmax.f32 %v517, 0.0
      %v664 = vmax.f32 %v522, 0.0
      %v665 = vmax.f32 %v525, 0.0
      %v666 = vmax.f32 %v530, 0.0
      %v667 = vmax.f32 %v533, 0.0
      %v668 = vmax.f32 %v538, 0.0
      %v669 = vmax.f32 %v541, 0.0
      %v670 = vmax.f32 %v546, 0.0
      %v671 = vmax.f32 %v549, 0.0
      %v672 = vmax.f32 %v554, 0.0
      %v673 = vmax.f32 %v557, 0.0
      %v674 = vmax.f32 %v562, 0.0
      %v675 = vmax.f32 %v565, 0.0
      %v676 = vmax.f32 %v570, 0.0
      %v677 = vmax.f32 %v573, 0.0
      %v678 = vmax.f32 %v578, 0.0
      %v679 = vmax.f32 %v581, 0.0
      %v680 = vmax.f32 %v586, 0.0
      %v681 = vmax.f32 %v589, 0.0
      %v682 = vmax.f32 %v594, 0.0
      %v683 = vmax.f32 %v597, 0.0
      %v684 = vmax.f32 %v602, 0.0
      %v685 = vmax.f32 %v605, 0.0
      %v686 = vmax.f32 %v610, 0.0
      %v687 = vmax.f32 %v613, 0.0
      %v688 = vmax.f32 %v618, 0.0
      %v689 = vmax.f32 %v621, 0.0
      %v690 = vmax.f32 %v626, 0.0
      %v691 = vmax.f32 %v629, 0.0
      %v692 = vmax.f32 %v634, 0.0
      %v693 = vmax.f32 %v637, 0.0
      %v694 = vmax.f32 %v642, 0.0
      %v695 = vmax.f32 %v645, 0.0
      %v696 = vlaneseq
      %v697 = vshrl.u32 %v696, 7
      %v698 = vadd.s32 %v697, 8
      %v699 = vadd.s32 %v697, 16
      %v700 = vadd.s32 %v697, 24
      %v701 = vadd.s32 %v697, 32
      %v702 = vadd.s32 %v697, 40
      %v703 = vadd.s32 %v697, 48
      %v704 = vadd.s32 %v697, 56
      %v705 = vadd.s32 %v697, 64
      %v706 = vadd.s32 %v697, 72
      %v707 = vadd.s32 %v697, 80
      %v708 = vadd.s32 %v697, 88
      %v709 = vadd.s32 %v697, 96
      %v710 = vadd.s32 %v697, 104
      %v711 = vadd.s32 %v697, 112
      %v712 = vadd.s32 %v697, 120
      %v713 = vadd.s32 %v697, 128
      %v714 = vadd.s32 %v697, 136
      %v715 = vadd.s32 %v697, 144
      %v716 = vadd.s32 %v697, 152
      %v717 = vadd.s32 %v697, 160
      %v718 = vadd.s32 %v697, 168
      %v719 = vadd.s32 %v697, 176
      %v720 = vadd.s32 %v697, 184
      %v721 = vadd.s32 %v697, 192
      %v722 = vadd.s32 %v697, 200
      %v723 = vadd.s32 %v697, 208
      %v724 = vadd.s32 %v697, 216
      %v725 = vadd.s32 %v697, 224
      %v726 = vadd.s32 %v697, 232
      %v727 = vadd.s32 %v697, 240
      %v728 = vadd.s32 %v697, 248
      %v729 = vadd.s32 %v697, 256
      %v730 = vadd.s32 %v697, 264
      %v731 = vadd.s32 %v697, 272
      %v732 = vadd.s32 %v697, 280
      %v733 = vadd.s32 %v697, 288
      %v734 = vadd.s32 %v697, 296
      %v735 = vadd.s32 %v697, 304
      %v736 = vadd.s32 %v697, 312
      %v737 = vadd.s32 %v697, 320
      %v738 = vadd.s32 %v697, 328
      %v739 = vadd.s32 %v697, 336
      %v740 = vadd.s32 %v697, 344
      %v741 = vadd.s32 %v697, 352
      %v742 = vadd.s32 %v697, 360
      %v743 = vadd.s32 %v697, 368
      %v744 = vadd.s32 %v697, 376
      %vm745 = vcmp.lt.s32.totalorder %v697, 0
      %v746 = vsub.s32 0, %v697
      %v747 = vsel %vm745, %v746, %v697
      %v748 = vmul.u32.u64.compose %v747, 2863311531
      %v749 = vextract.low.u32 %v748
      %v750 = vextract.high.u32 %v748
      %v751 = vshrl.u32 %v750, 4
      %v752 = vmul.u32 %v751, 24
      %v753 = vsub.s32 %v747, %v752
      %v754 = vsub.s32 0, %v753
      %v755 = vsel %vm745, %v754, %v753
      %vm756 = vcmp.lt.s32.totalorder %v698, 0
      %v757 = vsub.s32 0, %v698
      %v758 = vsel %vm756, %v757, %v698
      %v759 = vmul.u32.u64.compose %v758, 2863311531
      %v760 = vextract.low.u32 %v759
      %v761 = vextract.high.u32 %v759
      %v762 = vshrl.u32 %v761, 4
      %v763 = vmul.u32 %v762, 24
      %v764 = vsub.s32 %v758, %v763
      %v765 = vsub.s32 0, %v764
      %v766 = vsel %vm756, %v765, %v764
      %vm767 = vcmp.lt.s32.totalorder %v699, 0
      %v768 = vsub.s32 0, %v699
      %v769 = vsel %vm767, %v768, %v699
      %v770 = vmul.u32.u64.compose %v769, 2863311531
      %v771 = vextract.low.u32 %v770
      %v772 = vextract.high.u32 %v770
      %v773 = vshrl.u32 %v772, 4
      %v774 = vmul.u32 %v773, 24
      %v775 = vsub.s32 %v769, %v774
      %v776 = vsub.s32 0, %v775
      %v777 = vsel %vm767, %v776, %v775
      %vm778 = vcmp.lt.s32.totalorder %v700, 0
      %v779 = vsub.s32 0, %v700
      %v780 = vsel %vm778, %v779, %v700
      %v781 = vmul.u32.u64.compose %v780, 2863311531
      %v782 = vextract.low.u32 %v781
      %v783 = vextract.high.u32 %v781
      %v784 = vshrl.u32 %v783, 4
      %v785 = vmul.u32 %v784, 24
      %v786 = vsub.s32 %v780, %v785
      %v787 = vsub.s32 0, %v786
      %v788 = vsel %vm778, %v787, %v786
      %vm789 = vcmp.lt.s32.totalorder %v701, 0
      %v790 = vsub.s32 0, %v701
      %v791 = vsel %vm789, %v790, %v701
      %v792 = vmul.u32.u64.compose %v791, 2863311531
      %v793 = vextract.low.u32 %v792
      %v794 = vextract.high.u32 %v792
      %v795 = vshrl.u32 %v794, 4
      %v796 = vmul.u32 %v795, 24
      %v797 = vsub.s32 %v791, %v796
      %v798 = vsub.s32 0, %v797
      %v799 = vsel %vm789, %v798, %v797
      %vm800 = vcmp.lt.s32.totalorder %v702, 0
      %v801 = vsub.s32 0, %v702
      %v802 = vsel %vm800, %v801, %v702
      %v803 = vmul.u32.u64.compose %v802, 2863311531
      %v804 = vextract.low.u32 %v803
      %v805 = vextract.high.u32 %v803
      %v806 = vshrl.u32 %v805, 4
      %v807 = vmul.u32 %v806, 24
      %v808 = vsub.s32 %v802, %v807
      %v809 = vsub.s32 0, %v808
      %v810 = vsel %vm800, %v809, %v808
      %vm811 = vcmp.lt.s32.totalorder %v703, 0
      %v812 = vsub.s32 0, %v703
      %v813 = vsel %vm811, %v812, %v703
      %v814 = vmul.u32.u64.compose %v813, 2863311531
      %v815 = vextract.low.u32 %v814
      %v816 = vextract.high.u32 %v814
      %v817 = vshrl.u32 %v816, 4
      %v818 = vmul.u32 %v817, 24
      %v819 = vsub.s32 %v813, %v818
      %v820 = vsub.s32 0, %v819
      %v821 = vsel %vm811, %v820, %v819
      %vm822 = vcmp.lt.s32.totalorder %v704, 0
      %v823 = vsub.s32 0, %v704
      %v824 = vsel %vm822, %v823, %v704
      %v825 = vmul.u32.u64.compose %v824, 2863311531
      %v826 = vextract.low.u32 %v825
      %v827 = vextract.high.u32 %v825
      %v828 = vshrl.u32 %v827, 4
      %v829 = vmul.u32 %v828, 24
      %v830 = vsub.s32 %v824, %v829
      %v831 = vsub.s32 0, %v830
      %v832 = vsel %vm822, %v831, %v830
      %vm833 = vcmp.lt.s32.totalorder %v705, 0
      %v834 = vsub.s32 0, %v705
      %v835 = vsel %vm833, %v834, %v705
      %v836 = vmul.u32.u64.compose %v835, 2863311531
      %v837 = vextract.low.u32 %v836
      %v838 = vextract.high.u32 %v836
      %v839 = vshrl.u32 %v838, 4
      %v840 = vmul.u32 %v839, 24
      %v841 = vsub.s32 %v835, %v840
      %v842 = vsub.s32 0, %v841
      %v843 = vsel %vm833, %v842, %v841
      %vm844 = vcmp.lt.s32.totalorder %v706, 0
      %v845 = vsub.s32 0, %v706
      %v846 = vsel %vm844, %v845, %v706
      %v847 = vmul.u32.u64.compose %v846, 2863311531
      %v848 = vextract.low.u32 %v847
      %v849 = vextract.high.u32 %v847
      %v850 = vshrl.u32 %v849, 4
      %v851 = vmul.u32 %v850, 24
      %v852 = vsub.s32 %v846, %v851
      %v853 = vsub.s32 0, %v852
      %v854 = vsel %vm844, %v853, %v852
      %vm855 = vcmp.lt.s32.totalorder %v707, 0
      %v856 = vsub.s32 0, %v707
      %v857 = vsel %vm855, %v856, %v707
      %v858 = vmul.u32.u64.compose %v857, 2863311531
      %v859 = vextract.low.u32 %v858
      %v860 = vextract.high.u32 %v858
      %v861 = vshrl.u32 %v860, 4
      %v862 = vmul.u32 %v861, 24
      %v863 = vsub.s32 %v857, %v862
      %v864 = vsub.s32 0, %v863
      %v865 = vsel %vm855, %v864, %v863
      %vm866 = vcmp.lt.s32.totalorder %v708, 0
      %v867 = vsub.s32 0, %v708
      %v868 = vsel %vm866, %v867, %v708
      %v869 = vmul.u32.u64.compose %v868, 2863311531
      %v870 = vextract.low.u32 %v869
      %v871 = vextract.high.u32 %v869
      %v872 = vshrl.u32 %v871, 4
      %v873 = vmul.u32 %v872, 24
      %v874 = vsub.s32 %v868, %v873
      %v875 = vsub.s32 0, %v874
      %v876 = vsel %vm866, %v875, %v874
      %vm877 = vcmp.lt.s32.totalorder %v709, 0
      %v878 = vsub.s32 0, %v709
      %v879 = vsel %vm877, %v878, %v709
      %v880 = vmul.u32.u64.compose %v879, 2863311531
      %v881 = vextract.low.u32 %v880
      %v882 = vextract.high.u32 %v880
      %v883 = vshrl.u32 %v882, 4
      %v884 = vmul.u32 %v883, 24
      %v885 = vsub.s32 %v879, %v884
      %v886 = vsub.s32 0, %v885
      %v887 = vsel %vm877, %v886, %v885
      %vm888 = vcmp.lt.s32.totalorder %v710, 0
      %v889 = vsub.s32 0, %v710
      %v890 = vsel %vm888, %v889, %v710
      %v891 = vmul.u32.u64.compose %v890, 2863311531
      %v892 = vextract.low.u32 %v891
      %v893 = vextract.high.u32 %v891
      %v894 = vshrl.u32 %v893, 4
      %v895 = vmul.u32 %v894, 24
      %v896 = vsub.s32 %v890, %v895
      %v897 = vsub.s32 0, %v896
      %v898 = vsel %vm888, %v897, %v896
      %vm899 = vcmp.lt.s32.totalorder %v711, 0
      %v900 = vsub.s32 0, %v711
      %v901 = vsel %vm899, %v900, %v711
      %v902 = vmul.u32.u64.compose %v901, 2863311531
      %v903 = vextract.low.u32 %v902
      %v904 = vextract.high.u32 %v902
      %v905 = vshrl.u32 %v904, 4
      %v906 = vmul.u32 %v905, 24
      %v907 = vsub.s32 %v901, %v906
      %v908 = vsub.s32 0, %v907
      %v909 = vsel %vm899, %v908, %v907
      %vm910 = vcmp.lt.s32.totalorder %v712, 0
      %v911 = vsub.s32 0, %v712
      %v912 = vsel %vm910, %v911, %v712
      %v913 = vmul.u32.u64.compose %v912, 2863311531
      %v914 = vextract.low.u32 %v913
      %v915 = vextract.high.u32 %v913
      %v916 = vshrl.u32 %v915, 4
      %v917 = vmul.u32 %v916, 24
      %v918 = vsub.s32 %v912, %v917
      %v919 = vsub.s32 0, %v918
      %v920 = vsel %vm910, %v919, %v918
      %vm921 = vcmp.lt.s32.totalorder %v713, 0
      %v922 = vsub.s32 0, %v713
      %v923 = vsel %vm921, %v922, %v713
      %v924 = vmul.u32.u64.compose %v923, 2863311531
      %v925 = vextract.low.u32 %v924
      %v926 = vextract.high.u32 %v924
      %v927 = vshrl.u32 %v926, 4
      %v928 = vmul.u32 %v927, 24
      %v929 = vsub.s32 %v923, %v928
      %v930 = vsub.s32 0, %v929
      %v931 = vsel %vm921, %v930, %v929
      %vm932 = vcmp.lt.s32.totalorder %v714, 0
      %v933 = vsub.s32 0, %v714
      %v934 = vsel %vm932, %v933, %v714
      %v935 = vmul.u32.u64.compose %v934, 2863311531
      %v936 = vextract.low.u32 %v935
      %v937 = vextract.high.u32 %v935
      %v938 = vshrl.u32 %v937, 4
      %v939 = vmul.u32 %v938, 24
      %v940 = vsub.s32 %v934, %v939
      %v941 = vsub.s32 0, %v940
      %v942 = vsel %vm932, %v941, %v940
      %vm943 = vcmp.lt.s32.totalorder %v715, 0
      %v944 = vsub.s32 0, %v715
      %v945 = vsel %vm943, %v944, %v715
      %v946 = vmul.u32.u64.compose %v945, 2863311531
      %v947 = vextract.low.u32 %v946
      %v948 = vextract.high.u32 %v946
      %v949 = vshrl.u32 %v948, 4
      %v950 = vmul.u32 %v949, 24
      %v951 = vsub.s32 %v945, %v950
      %v952 = vsub.s32 0, %v951
      %v953 = vsel %vm943, %v952, %v951
      %vm954 = vcmp.lt.s32.totalorder %v716, 0
      %v955 = vsub.s32 0, %v716
      %v956 = vsel %vm954, %v955, %v716
      %v957 = vmul.u32.u64.compose %v956, 2863311531
      %v958 = vextract.low.u32 %v957
      %v959 = vextract.high.u32 %v957
      %v960 = vshrl.u32 %v959, 4
      %v961 = vmul.u32 %v960, 24
      %v962 = vsub.s32 %v956, %v961
      %v963 = vsub.s32 0, %v962
      %v964 = vsel %vm954, %v963, %v962
      %vm965 = vcmp.lt.s32.totalorder %v717, 0
      %v966 = vsub.s32 0, %v717
      %v967 = vsel %vm965, %v966, %v717
      %v968 = vmul.u32.u64.compose %v967, 2863311531
      %v969 = vextract.low.u32 %v968
      %v970 = vextract.high.u32 %v968
      %v971 = vshrl.u32 %v970, 4
      %v972 = vmul.u32 %v971, 24
      %v973 = vsub.s32 %v967, %v972
      %v974 = vsub.s32 0, %v973
      %v975 = vsel %vm965, %v974, %v973
      %vm976 = vcmp.lt.s32.totalorder %v718, 0
      %v977 = vsub.s32 0, %v718
      %v978 = vsel %vm976, %v977, %v718
      %v979 = vmul.u32.u64.compose %v978, 2863311531
      %v980 = vextract.low.u32 %v979
      %v981 = vextract.high.u32 %v979
      %v982 = vshrl.u32 %v981, 4
      %v983 = vmul.u32 %v982, 24
      %v984 = vsub.s32 %v978, %v983
      %v985 = vsub.s32 0, %v984
      %v986 = vsel %vm976, %v985, %v984
      %vm987 = vcmp.lt.s32.totalorder %v719, 0
      %v988 = vsub.s32 0, %v719
      %v989 = vsel %vm987, %v988, %v719
      %v990 = vmul.u32.u64.compose %v989, 2863311531
      %v991 = vextract.low.u32 %v990
      %v992 = vextract.high.u32 %v990
      %v993 = vshrl.u32 %v992, 4
      %v994 = vmul.u32 %v993, 24
      %v995 = vsub.s32 %v989, %v994
      %v996 = vsub.s32 0, %v995
      %v997 = vsel %vm987, %v996, %v995
      %vm998 = vcmp.lt.s32.totalorder %v720, 0
      %v999 = vsub.s32 0, %v720
      %v1000 = vsel %vm998, %v999, %v720
      %v1001 = vmul.u32.u64.compose %v1000, 2863311531
      %v1002 = vextract.low.u32 %v1001
      %v1003 = vextract.high.u32 %v1001
      %v1004 = vshrl.u32 %v1003, 4
      %v1005 = vmul.u32 %v1004, 24
      %v1006 = vsub.s32 %v1000, %v1005
      %v1007 = vsub.s32 0, %v1006
      %v1008 = vsel %vm998, %v1007, %v1006
      %vm1009 = vcmp.lt.s32.totalorder %v721, 0
      %v1010 = vsub.s32 0, %v721
      %v1011 = vsel %vm1009, %v1010, %v721
      %v1012 = vmul.u32.u64.compose %v1011, 2863311531
      %v1013 = vextract.low.u32 %v1012
      %v1014 = vextract.high.u32 %v1012
      %v1015 = vshrl.u32 %v1014, 4
      %v1016 = vmul.u32 %v1015, 24
      %v1017 = vsub.s32 %v1011, %v1016
      %v1018 = vsub.s32 0, %v1017
      %v1019 = vsel %vm1009, %v1018, %v1017
      %vm1020 = vcmp.lt.s32.totalorder %v722, 0
      %v1021 = vsub.s32 0, %v722
      %v1022 = vsel %vm1020, %v1021, %v722
      %v1023 = vmul.u32.u64.compose %v1022, 2863311531
      %v1024 = vextract.low.u32 %v1023
      %v1025 = vextract.high.u32 %v1023
      %v1026 = vshrl.u32 %v1025, 4
      %v1027 = vmul.u32 %v1026, 24
      %v1028 = vsub.s32 %v1022, %v1027
      %v1029 = vsub.s32 0, %v1028
      %v1030 = vsel %vm1020, %v1029, %v1028
      %vm1031 = vcmp.lt.s32.totalorder %v723, 0
      %v1032 = vsub.s32 0, %v723
      %v1033 = vsel %vm1031, %v1032, %v723
      %v1034 = vmul.u32.u64.compose %v1033, 2863311531
      %v1035 = vextract.low.u32 %v1034
      %v1036 = vextract.high.u32 %v1034
      %v1037 = vshrl.u32 %v1036, 4
      %v1038 = vmul.u32 %v1037, 24
      %v1039 = vsub.s32 %v1033, %v1038
      %v1040 = vsub.s32 0, %v1039
      %v1041 = vsel %vm1031, %v1040, %v1039
      %vm1042 = vcmp.lt.s32.totalorder %v724, 0
      %v1043 = vsub.s32 0, %v724
      %v1044 = vsel %vm1042, %v1043, %v724
      %v1045 = vmul.u32.u64.compose %v1044, 2863311531
      %v1046 = vextract.low.u32 %v1045
      %v1047 = vextract.high.u32 %v1045
      %v1048 = vshrl.u32 %v1047, 4
      %v1049 = vmul.u32 %v1048, 24
      %v1050 = vsub.s32 %v1044, %v1049
      %v1051 = vsub.s32 0, %v1050
      %v1052 = vsel %vm1042, %v1051, %v1050
      %vm1053 = vcmp.lt.s32.totalorder %v725, 0
      %v1054 = vsub.s32 0, %v725
      %v1055 = vsel %vm1053, %v1054, %v725
      %v1056 = vmul.u32.u64.compose %v1055, 2863311531
      %v1057 = vextract.low.u32 %v1056
      %v1058 = vextract.high.u32 %v1056
      %v1059 = vshrl.u32 %v1058, 4
      %v1060 = vmul.u32 %v1059, 24
      %v1061 = vsub.s32 %v1055, %v1060
      %v1062 = vsub.s32 0, %v1061
      %v1063 = vsel %vm1053, %v1062, %v1061
      %vm1064 = vcmp.lt.s32.totalorder %v726, 0
      %v1065 = vsub.s32 0, %v726
      %v1066 = vsel %vm1064, %v1065, %v726
      %v1067 = vmul.u32.u64.compose %v1066, 2863311531
      %v1068 = vextract.low.u32 %v1067
      %v1069 = vextract.high.u32 %v1067
      %v1070 = vshrl.u32 %v1069, 4
      %v1071 = vmul.u32 %v1070, 24
      %v1072 = vsub.s32 %v1066, %v1071
      %v1073 = vsub.s32 0, %v1072
      %v1074 = vsel %vm1064, %v1073, %v1072
      %vm1075 = vcmp.lt.s32.totalorder %v727, 0
      %v1076 = vsub.s32 0, %v727
      %v1077 = vsel %vm1075, %v1076, %v727
      %v1078 = vmul.u32.u64.compose %v1077, 2863311531
      %v1079 = vextract.low.u32 %v1078
      %v1080 = vextract.high.u32 %v1078
      %v1081 = vshrl.u32 %v1080, 4
      %v1082 = vmul.u32 %v1081, 24
      %v1083 = vsub.s32 %v1077, %v1082
      %v1084 = vsub.s32 0, %v1083
      %v1085 = vsel %vm1075, %v1084, %v1083
      %vm1086 = vcmp.lt.s32.totalorder %v728, 0
      %v1087 = vsub.s32 0, %v728
      %v1088 = vsel %vm1086, %v1087, %v728
      %v1089 = vmul.u32.u64.compose %v1088, 2863311531
      %v1090 = vextract.low.u32 %v1089
      %v1091 = vextract.high.u32 %v1089
      %v1092 = vshrl.u32 %v1091, 4
      %v1093 = vmul.u32 %v1092, 24
      %v1094 = vsub.s32 %v1088, %v1093
      %v1095 = vsub.s32 0, %v1094
      %v1096 = vsel %vm1086, %v1095, %v1094
      %vm1097 = vcmp.lt.s32.totalorder %v729, 0
      %v1098 = vsub.s32 0, %v729
      %v1099 = vsel %vm1097, %v1098, %v729
      %v1100 = vmul.u32.u64.compose %v1099, 2863311531
      %v1101 = vextract.low.u32 %v1100
      %v1102 = vextract.high.u32 %v1100
      %v1103 = vshrl.u32 %v1102, 4
      %v1104 = vmul.u32 %v1103, 24
      %v1105 = vsub.s32 %v1099, %v1104
      %v1106 = vsub.s32 0, %v1105
      %v1107 = vsel %vm1097, %v1106, %v1105
      %vm1108 = vcmp.lt.s32.totalorder %v730, 0
      %v1109 = vsub.s32 0, %v730
      %v1110 = vsel %vm1108, %v1109, %v730
      %v1111 = vmul.u32.u64.compose %v1110, 2863311531
      %v1112 = vextract.low.u32 %v1111
      %v1113 = vextract.high.u32 %v1111
      %v1114 = vshrl.u32 %v1113, 4
      %v1115 = vmul.u32 %v1114, 24
      %v1116 = vsub.s32 %v1110, %v1115
      %v1117 = vsub.s32 0, %v1116
      %v1118 = vsel %vm1108, %v1117, %v1116
      %vm1119 = vcmp.lt.s32.totalorder %v731, 0
      %v1120 = vsub.s32 0, %v731
      %v1121 = vsel %vm1119, %v1120, %v731
      %v1122 = vmul.u32.u64.compose %v1121, 2863311531
      %v1123 = vextract.low.u32 %v1122
      %v1124 = vextract.high.u32 %v1122
      %v1125 = vshrl.u32 %v1124, 4
      %v1126 = vmul.u32 %v1125, 24
      %v1127 = vsub.s32 %v1121, %v1126
      %v1128 = vsub.s32 0, %v1127
      %v1129 = vsel %vm1119, %v1128, %v1127
      %vm1130 = vcmp.lt.s32.totalorder %v732, 0
      %v1131 = vsub.s32 0, %v732
      %v1132 = vsel %vm1130, %v1131, %v732
      %v1133 = vmul.u32.u64.compose %v1132, 2863311531
      %v1134 = vextract.low.u32 %v1133
      %v1135 = vextract.high.u32 %v1133
      %v1136 = vshrl.u32 %v1135, 4
      %v1137 = vmul.u32 %v1136, 24
      %v1138 = vsub.s32 %v1132, %v1137
      %v1139 = vsub.s32 0, %v1138
      %v1140 = vsel %vm1130, %v1139, %v1138
      %vm1141 = vcmp.lt.s32.totalorder %v733, 0
      %v1142 = vsub.s32 0, %v733
      %v1143 = vsel %vm1141, %v1142, %v733
      %v1144 = vmul.u32.u64.compose %v1143, 2863311531
      %v1145 = vextract.low.u32 %v1144
      %v1146 = vextract.high.u32 %v1144
      %v1147 = vshrl.u32 %v1146, 4
      %v1148 = vmul.u32 %v1147, 24
      %v1149 = vsub.s32 %v1143, %v1148
      %v1150 = vsub.s32 0, %v1149
      %v1151 = vsel %vm1141, %v1150, %v1149
      %vm1152 = vcmp.lt.s32.totalorder %v734, 0
      %v1153 = vsub.s32 0, %v734
      %v1154 = vsel %vm1152, %v1153, %v734
      %v1155 = vmul.u32.u64.compose %v1154, 2863311531
      %v1156 = vextract.low.u32 %v1155
      %v1157 = vextract.high.u32 %v1155
      %v1158 = vshrl.u32 %v1157, 4
      %v1159 = vmul.u32 %v1158, 24
      %v1160 = vsub.s32 %v1154, %v1159
      %v1161 = vsub.s32 0, %v1160
      %v1162 = vsel %vm1152, %v1161, %v1160
      %vm1163 = vcmp.lt.s32.totalorder %v735, 0
      %v1164 = vsub.s32 0, %v735
      %v1165 = vsel %vm1163, %v1164, %v735
      %v1166 = vmul.u32.u64.compose %v1165, 2863311531
      %v1167 = vextract.low.u32 %v1166
      %v1168 = vextract.high.u32 %v1166
      %v1169 = vshrl.u32 %v1168, 4
      %v1170 = vmul.u32 %v1169, 24
      %v1171 = vsub.s32 %v1165, %v1170
      %v1172 = vsub.s32 0, %v1171
      %v1173 = vsel %vm1163, %v1172, %v1171
      %vm1174 = vcmp.lt.s32.totalorder %v736, 0
      %v1175 = vsub.s32 0, %v736
      %v1176 = vsel %vm1174, %v1175, %v736
      %v1177 = vmul.u32.u64.compose %v1176, 2863311531
      %v1178 = vextract.low.u32 %v1177
      %v1179 = vextract.high.u32 %v1177
      %v1180 = vshrl.u32 %v1179, 4
      %v1181 = vmul.u32 %v1180, 24
      %v1182 = vsub.s32 %v1176, %v1181
      %v1183 = vsub.s32 0, %v1182
      %v1184 = vsel %vm1174, %v1183, %v1182
      %vm1185 = vcmp.lt.s32.totalorder %v737, 0
      %v1186 = vsub.s32 0, %v737
      %v1187 = vsel %vm1185, %v1186, %v737
      %v1188 = vmul.u32.u64.compose %v1187, 2863311531
      %v1189 = vextract.low.u32 %v1188
      %v1190 = vextract.high.u32 %v1188
      %v1191 = vshrl.u32 %v1190, 4
      %v1192 = vmul.u32 %v1191, 24
      %v1193 = vsub.s32 %v1187, %v1192
      %v1194 = vsub.s32 0, %v1193
      %v1195 = vsel %vm1185, %v1194, %v1193
      %vm1196 = vcmp.lt.s32.totalorder %v738, 0
      %v1197 = vsub.s32 0, %v738
      %v1198 = vsel %vm1196, %v1197, %v738
      %v1199 = vmul.u32.u64.compose %v1198, 2863311531
      %v1200 = vextract.low.u32 %v1199
      %v1201 = vextract.high.u32 %v1199
      %v1202 = vshrl.u32 %v1201, 4
      %v1203 = vmul.u32 %v1202, 24
      %v1204 = vsub.s32 %v1198, %v1203
      %v1205 = vsub.s32 0, %v1204
      %v1206 = vsel %vm1196, %v1205, %v1204
      %vm1207 = vcmp.lt.s32.totalorder %v739, 0
      %v1208 = vsub.s32 0, %v739
      %v1209 = vsel %vm1207, %v1208, %v739
      %v1210 = vmul.u32.u64.compose %v1209, 2863311531
      %v1211 = vextract.low.u32 %v1210
      %v1212 = vextract.high.u32 %v1210
      %v1213 = vshrl.u32 %v1212, 4
      %v1214 = vmul.u32 %v1213, 24
      %v1215 = vsub.s32 %v1209, %v1214
      %v1216 = vsub.s32 0, %v1215
      %v1217 = vsel %vm1207, %v1216, %v1215
      %vm1218 = vcmp.lt.s32.totalorder %v740, 0
      %v1219 = vsub.s32 0, %v740
      %v1220 = vsel %vm1218, %v1219, %v740
      %v1221 = vmul.u32.u64.compose %v1220, 2863311531
      %v1222 = vextract.low.u32 %v1221
      %v1223 = vextract.high.u32 %v1221
      %v1224 = vshrl.u32 %v1223, 4
      %v1225 = vmul.u32 %v1224, 24
      %v1226 = vsub.s32 %v1220, %v1225
      %v1227 = vsub.s32 0, %v1226
      %v1228 = vsel %vm1218, %v1227, %v1226
      %vm1229 = vcmp.lt.s32.totalorder %v741, 0
      %v1230 = vsub.s32 0, %v741
      %v1231 = vsel %vm1229, %v1230, %v741
      %v1232 = vmul.u32.u64.compose %v1231, 2863311531
      %v1233 = vextract.low.u32 %v1232
      %v1234 = vextract.high.u32 %v1232
      %v1235 = vshrl.u32 %v1234, 4
      %v1236 = vmul.u32 %v1235, 24
      %v1237 = vsub.s32 %v1231, %v1236
      %v1238 = vsub.s32 0, %v1237
      %v1239 = vsel %vm1229, %v1238, %v1237
      %vm1240 = vcmp.lt.s32.totalorder %v742, 0
      %v1241 = vsub.s32 0, %v742
      %v1242 = vsel %vm1240, %v1241, %v742
      %v1243 = vmul.u32.u64.compose %v1242, 2863311531
      %v1244 = vextract.low.u32 %v1243
      %v1245 = vextract.high.u32 %v1243
      %v1246 = vshrl.u32 %v1245, 4
      %v1247 = vmul.u32 %v1246, 24
      %v1248 = vsub.s32 %v1242, %v1247
      %v1249 = vsub.s32 0, %v1248
      %v1250 = vsel %vm1240, %v1249, %v1248
      %vm1251 = vcmp.lt.s32.totalorder %v743, 0
      %v1252 = vsub.s32 0, %v743
      %v1253 = vsel %vm1251, %v1252, %v743
      %v1254 = vmul.u32.u64.compose %v1253, 2863311531
      %v1255 = vextract.low.u32 %v1254
      %v1256 = vextract.high.u32 %v1254
      %v1257 = vshrl.u32 %v1256, 4
      %v1258 = vmul.u32 %v1257, 24
      %v1259 = vsub.s32 %v1253, %v1258
      %v1260 = vsub.s32 0, %v1259
      %v1261 = vsel %vm1251, %v1260, %v1259
      %vm1262 = vcmp.lt.s32.totalorder %v744, 0
      %v1263 = vsub.s32 0, %v744
      %v1264 = vsel %vm1262, %v1263, %v744
      %v1265 = vmul.u32.u64.compose %v1264, 2863311531
      %v1266 = vextract.low.u32 %v1265
      %v1267 = vextract.high.u32 %v1265
      %v1268 = vshrl.u32 %v1267, 4
      %v1269 = vmul.u32 %v1268, 24
      %v1270 = vsub.s32 %v1264, %v1269
      %v1271 = vsub.s32 0, %v1270
      %v1272 = vsel %vm1262, %v1271, %v1270
      %vm1273 = vcmp.ne.s32.totalorder %v755, 0
      %vm1274 = vcmp.ne.s32.totalorder %v766, 0
      %vm1275 = vcmp.ne.s32.totalorder %v777, 0
      %vm1276 = vcmp.ne.s32.totalorder %v788, 0
      %vm1277 = vcmp.ne.s32.totalorder %v799, 0
      %vm1278 = vcmp.ne.s32.totalorder %v810, 0
      %vm1279 = vcmp.ne.s32.totalorder %v821, 0
      %vm1280 = vcmp.ne.s32.totalorder %v832, 0
      %vm1281 = vcmp.ne.s32.totalorder %v843, 0
      %vm1282 = vcmp.ne.s32.totalorder %v854, 0
      %vm1283 = vcmp.ne.s32.totalorder %v865, 0
      %vm1284 = vcmp.ne.s32.totalorder %v876, 0
      %vm1285 = vcmp.ne.s32.totalorder %v887, 0
      %vm1286 = vcmp.ne.s32.totalorder %v898, 0
      %vm1287 = vcmp.ne.s32.totalorder %v909, 0
      %vm1288 = vcmp.ne.s32.totalorder %v920, 0
      %vm1289 = vcmp.ne.s32.totalorder %v931, 0
      %vm1290 = vcmp.ne.s32.totalorder %v942, 0
      %vm1291 = vcmp.ne.s32.totalorder %v953, 0
      %vm1292 = vcmp.ne.s32.totalorder %v964, 0
      %vm1293 = vcmp.ne.s32.totalorder %v975, 0
      %vm1294 = vcmp.ne.s32.totalorder %v986, 0
      %vm1295 = vcmp.ne.s32.totalorder %v997, 0
      %vm1296 = vcmp.ne.s32.totalorder %v1008, 0
      %vm1297 = vcmp.ne.s32.totalorder %v1019, 0
      %vm1298 = vcmp.ne.s32.totalorder %v1030, 0
      %vm1299 = vcmp.ne.s32.totalorder %v1041, 0
      %vm1300 = vcmp.ne.s32.totalorder %v1052, 0
      %vm1301 = vcmp.ne.s32.totalorder %v1063, 0
      %vm1302 = vcmp.ne.s32.totalorder %v1074, 0
      %vm1303 = vcmp.ne.s32.totalorder %v1085, 0
      %vm1304 = vcmp.ne.s32.totalorder %v1096, 0
      %vm1305 = vcmp.ne.s32.totalorder %v1107, 0
      %vm1306 = vcmp.ne.s32.totalorder %v1118, 0
      %vm1307 = vcmp.ne.s32.totalorder %v1129, 0
      %vm1308 = vcmp.ne.s32.totalorder %v1140, 0
      %vm1309 = vcmp.ne.s32.totalorder %v1151, 0
      %vm1310 = vcmp.ne.s32.totalorder %v1162, 0
      %vm1311 = vcmp.ne.s32.totalorder %v1173, 0
      %vm1312 = vcmp.ne.s32.totalorder %v1184, 0
      %vm1313 = vcmp.ne.s32.totalorder %v1195, 0
      %vm1314 = vcmp.ne.s32.totalorder %v1206, 0
      %vm1315 = vcmp.ne.s32.totalorder %v1217, 0
      %vm1316 = vcmp.ne.s32.totalorder %v1228, 0
      %vm1317 = vcmp.ne.s32.totalorder %v1239, 0
      %vm1318 = vcmp.ne.s32.totalorder %v1250, 0
      %vm1319 = vcmp.ne.s32.totalorder %v1261, 0
      %vm1320 = vcmp.ne.s32.totalorder %v1272, 0
      %vm1321 = vcmp.lt.s32.totalorder %v755, 0
      %vm1322 = vcmp.lt.s32.totalorder %v766, 0
      %vm1323 = vcmp.lt.s32.totalorder %v777, 0
      %vm1324 = vcmp.lt.s32.totalorder %v788, 0
      %vm1325 = vcmp.lt.s32.totalorder %v799, 0
      %vm1326 = vcmp.lt.s32.totalorder %v810, 0
      %vm1327 = vcmp.lt.s32.totalorder %v821, 0
      %vm1328 = vcmp.lt.s32.totalorder %v832, 0
      %vm1329 = vcmp.lt.s32.totalorder %v843, 0
      %vm1330 = vcmp.lt.s32.totalorder %v854, 0
      %vm1331 = vcmp.lt.s32.totalorder %v865, 0
      %vm1332 = vcmp.lt.s32.totalorder %v876, 0
      %vm1333 = vcmp.lt.s32.totalorder %v887, 0
      %vm1334 = vcmp.lt.s32.totalorder %v898, 0
      %vm1335 = vcmp.lt.s32.totalorder %v909, 0
      %vm1336 = vcmp.lt.s32.totalorder %v920, 0
      %vm1337 = vcmp.lt.s32.totalorder %v931, 0
      %vm1338 = vcmp.lt.s32.totalorder %v942, 0
      %vm1339 = vcmp.lt.s32.totalorder %v953, 0
      %vm1340 = vcmp.lt.s32.totalorder %v964, 0
      %vm1341 = vcmp.lt.s32.totalorder %v975, 0
      %vm1342 = vcmp.lt.s32.totalorder %v986, 0
      %vm1343 = vcmp.lt.s32.totalorder %v997, 0
      %vm1344 = vcmp.lt.s32.totalorder %v1008, 0
      %vm1345 = vcmp.lt.s32.totalorder %v1019, 0
      %vm1346 = vcmp.lt.s32.totalorder %v1030, 0
      %vm1347 = vcmp.lt.s32.totalorder %v1041, 0
      %vm1348 = vcmp.lt.s32.totalorder %v1052, 0
      %vm1349 = vcmp.lt.s32.totalorder %v1063, 0
      %vm1350 = vcmp.lt.s32.totalorder %v1074, 0
      %vm1351 = vcmp.lt.s32.totalorder %v1085, 0
      %vm1352 = vcmp.lt.s32.totalorder %v1096, 0
      %vm1353 = vcmp.lt.s32.totalorder %v1107, 0
      %vm1354 = vcmp.lt.s32.totalorder %v1118, 0
      %vm1355 = vcmp.lt.s32.totalorder %v1129, 0
      %vm1356 = vcmp.lt.s32.totalorder %v1140, 0
      %vm1357 = vcmp.lt.s32.totalorder %v1151, 0
      %vm1358 = vcmp.lt.s32.totalorder %v1162, 0
      %vm1359 = vcmp.lt.s32.totalorder %v1173, 0
      %vm1360 = vcmp.lt.s32.totalorder %v1184, 0
      %vm1361 = vcmp.lt.s32.totalorder %v1195, 0
      %vm1362 = vcmp.lt.s32.totalorder %v1206, 0
      %vm1363 = vcmp.lt.s32.totalorder %v1217, 0
      %vm1364 = vcmp.lt.s32.totalorder %v1228, 0
      %vm1365 = vcmp.lt.s32.totalorder %v1239, 0
      %vm1366 = vcmp.lt.s32.totalorder %v1250, 0
      %vm1367 = vcmp.lt.s32.totalorder %v1261, 0
      %vm1368 = vcmp.lt.s32.totalorder %v1272, 0
      %vm1369 = vmand %vm1321, %vm1273
      %vm1370 = vmand %vm1322, %vm1274
      %vm1371 = vmand %vm1323, %vm1275
      %vm1372 = vmand %vm1324, %vm1276
      %vm1373 = vmand %vm1325, %vm1277
      %vm1374 = vmand %vm1326, %vm1278
      %vm1375 = vmand %vm1327, %vm1279
      %vm1376 = vmand %vm1328, %vm1280
      %vm1377 = vmand %vm1329, %vm1281
      %vm1378 = vmand %vm1330, %vm1282
      %vm1379 = vmand %vm1331, %vm1283
      %vm1380 = vmand %vm1332, %vm1284
      %vm1381 = vmand %vm1333, %vm1285
      %vm1382 = vmand %vm1334, %vm1286
      %vm1383 = vmand %vm1335, %vm1287
      %vm1384 = vmand %vm1336, %vm1288
      %vm1385 = vmand %vm1337, %vm1289
      %vm1386 = vmand %vm1338, %vm1290
      %vm1387 = vmand %vm1339, %vm1291
      %vm1388 = vmand %vm1340, %vm1292
      %vm1389 = vmand %vm1341, %vm1293
      %vm1390 = vmand %vm1342, %vm1294
      %vm1391 = vmand %vm1343, %vm1295
      %vm1392 = vmand %vm1344, %vm1296
      %vm1393 = vmand %vm1345, %vm1297
      %vm1394 = vmand %vm1346, %vm1298
      %vm1395 = vmand %vm1347, %vm1299
      %vm1396 = vmand %vm1348, %vm1300
      %vm1397 = vmand %vm1349, %vm1301
      %vm1398 = vmand %vm1350, %vm1302
      %vm1399 = vmand %vm1351, %vm1303
      %vm1400 = vmand %vm1352, %vm1304
      %vm1401 = vmand %vm1353, %vm1305
      %vm1402 = vmand %vm1354, %vm1306
      %vm1403 = vmand %vm1355, %vm1307
      %vm1404 = vmand %vm1356, %vm1308
      %vm1405 = vmand %vm1357, %vm1309
      %vm1406 = vmand %vm1358, %vm1310
      %vm1407 = vmand %vm1359, %vm1311
      %vm1408 = vmand %vm1360, %vm1312
      %vm1409 = vmand %vm1361, %vm1313
      %vm1410 = vmand %vm1362, %vm1314
      %vm1411 = vmand %vm1363, %vm1315
      %vm1412 = vmand %vm1364, %vm1316
      %vm1413 = vmand %vm1365, %vm1317
      %vm1414 = vmand %vm1366, %vm1318
      %vm1415 = vmand %vm1367, %vm1319
      %vm1416 = vmand %vm1368, %vm1320
      %v1417 = vadd.s32 %v755, 24
      %v1418 = vadd.s32 %v766, 24
      %v1419 = vadd.s32 %v777, 24
      %v1420 = vadd.s32 %v788, 24
      %v1421 = vadd.s32 %v799, 24
      %v1422 = vadd.s32 %v810, 24
      %v1423 = vadd.s32 %v821, 24
      %v1424 = vadd.s32 %v832, 24
      %v1425 = vadd.s32 %v843, 24
      %v1426 = vadd.s32 %v854, 24
      %v1427 = vadd.s32 %v865, 24
      %v1428 = vadd.s32 %v876, 24
      %v1429 = vadd.s32 %v887, 24
      %v1430 = vadd.s32 %v898, 24
      %v1431 = vadd.s32 %v909, 24
      %v1432 = vadd.s32 %v920, 24
      %v1433 = vadd.s32 %v931, 24
      %v1434 = vadd.s32 %v942, 24
      %v1435 = vadd.s32 %v953, 24
      %v1436 = vadd.s32 %v964, 24
      %v1437 = vadd.s32 %v975, 24
      %v1438 = vadd.s32 %v986, 24
      %v1439 = vadd.s32 %v997, 24
      %v1440 = vadd.s32 %v1008, 24
      %v1441 = vadd.s32 %v1019, 24
      %v1442 = vadd.s32 %v1030, 24
      %v1443 = vadd.s32 %v1041, 24
      %v1444 = vadd.s32 %v1052, 24
      %v1445 = vadd.s32 %v1063, 24
      %v1446 = vadd.s32 %v1074, 24
      %v1447 = vadd.s32 %v1085, 24
      %v1448 = vadd.s32 %v1096, 24
      %v1449 = vadd.s32 %v1107, 24
      %v1450 = vadd.s32 %v1118, 24
      %v1451 = vadd.s32 %v1129, 24
      %v1452 = vadd.s32 %v1140, 24
      %v1453 = vadd.s32 %v1151, 24
      %v1454 = vadd.s32 %v1162, 24
      %v1455 = vadd.s32 %v1173, 24
      %v1456 = vadd.s32 %v1184, 24
      %v1457 = vadd.s32 %v1195, 24
      %v1458 = vadd.s32 %v1206, 24
      %v1459 = vadd.s32 %v1217, 24
      %v1460 = vadd.s32 %v1228, 24
      %v1461 = vadd.s32 %v1239, 24
      %v1462 = vadd.s32 %v1250, 24
      %v1463 = vadd.s32 %v1261, 24
      %v1464 = vadd.s32 %v1272, 24
      %v1465 = vsel %vm1369, %v1417, %v755
      %v1466 = vsel %vm1370, %v1418, %v766
      %v1467 = vsel %vm1371, %v1419, %v777
      %v1468 = vsel %vm1372, %v1420, %v788
      %v1469 = vsel %vm1373, %v1421, %v799
      %v1470 = vsel %vm1374, %v1422, %v810
      %v1471 = vsel %vm1375, %v1423, %v821
      %v1472 = vsel %vm1376, %v1424, %v832
      %v1473 = vsel %vm1377, %v1425, %v843
      %v1474 = vsel %vm1378, %v1426, %v854
      %v1475 = vsel %vm1379, %v1427, %v865
      %v1476 = vsel %vm1380, %v1428, %v876
      %v1477 = vsel %vm1381, %v1429, %v887
      %v1478 = vsel %vm1382, %v1430, %v898
      %v1479 = vsel %vm1383, %v1431, %v909
      %v1480 = vsel %vm1384, %v1432, %v920
      %v1481 = vsel %vm1385, %v1433, %v931
      %v1482 = vsel %vm1386, %v1434, %v942
      %v1483 = vsel %vm1387, %v1435, %v953
      %v1484 = vsel %vm1388, %v1436, %v964
      %v1485 = vsel %vm1389, %v1437, %v975
      %v1486 = vsel %vm1390, %v1438, %v986
      %v1487 = vsel %vm1391, %v1439, %v997
      %v1488 = vsel %vm1392, %v1440, %v1008
      %v1489 = vsel %vm1393, %v1441, %v1019
      %v1490 = vsel %vm1394, %v1442, %v1030
      %v1491 = vsel %vm1395, %v1443, %v1041
      %v1492 = vsel %vm1396, %v1444, %v1052
      %v1493 = vsel %vm1397, %v1445, %v1063
      %v1494 = vsel %vm1398, %v1446, %v1074
      %v1495 = vsel %vm1399, %v1447, %v1085
      %v1496 = vsel %vm1400, %v1448, %v1096
      %v1497 = vsel %vm1401, %v1449, %v1107
      %v1498 = vsel %vm1402, %v1450, %v1118
      %v1499 = vsel %vm1403, %v1451, %v1129
      %v1500 = vsel %vm1404, %v1452, %v1140
      %v1501 = vsel %vm1405, %v1453, %v1151
      %v1502 = vsel %vm1406, %v1454, %v1162
      %v1503 = vsel %vm1407, %v1455, %v1173
      %v1504 = vsel %vm1408, %v1456, %v1184
      %v1505 = vsel %vm1409, %v1457, %v1195
      %v1506 = vsel %vm1410, %v1458, %v1206
      %v1507 = vsel %vm1411, %v1459, %v1217
      %v1508 = vsel %vm1412, %v1460, %v1228
      %v1509 = vsel %vm1413, %v1461, %v1239
      %v1510 = vsel %vm1414, %v1462, %v1250
      %v1511 = vsel %vm1415, %v1463, %v1261
      %v1512 = vsel %vm1416, %v1464, %v1272
      %vm1513 = vcmp.lt.s32.totalorder %v1465, 16
      %vm1514 = vcmp.lt.s32.totalorder %v1466, 16
      %vm1515 = vcmp.lt.s32.totalorder %v1467, 16
      %vm1516 = vcmp.lt.s32.totalorder %v1468, 16
      %vm1517 = vcmp.lt.s32.totalorder %v1469, 16
      %vm1518 = vcmp.lt.s32.totalorder %v1470, 16
      %vm1519 = vcmp.lt.s32.totalorder %v1471, 16
      %vm1520 = vcmp.lt.s32.totalorder %v1472, 16
      %vm1521 = vcmp.lt.s32.totalorder %v1473, 16
      %vm1522 = vcmp.lt.s32.totalorder %v1474, 16
      %vm1523 = vcmp.lt.s32.totalorder %v1475, 16
      %vm1524 = vcmp.lt.s32.totalorder %v1476, 16
      %vm1525 = vcmp.lt.s32.totalorder %v1477, 16
      %vm1526 = vcmp.lt.s32.totalorder %v1478, 16
      %vm1527 = vcmp.lt.s32.totalorder %v1479, 16
      %vm1528 = vcmp.lt.s32.totalorder %v1480, 16
      %vm1529 = vcmp.lt.s32.totalorder %v1481, 16
      %vm1530 = vcmp.lt.s32.totalorder %v1482, 16
      %vm1531 = vcmp.lt.s32.totalorder %v1483, 16
      %vm1532 = vcmp.lt.s32.totalorder %v1484, 16
      %vm1533 = vcmp.lt.s32.totalorder %v1485, 16
      %vm1534 = vcmp.lt.s32.totalorder %v1486, 16
      %vm1535 = vcmp.lt.s32.totalorder %v1487, 16
      %vm1536 = vcmp.lt.s32.totalorder %v1488, 16
      %vm1537 = vcmp.lt.s32.totalorder %v1489, 16
      %vm1538 = vcmp.lt.s32.totalorder %v1490, 16
      %vm1539 = vcmp.lt.s32.totalorder %v1491, 16
      %vm1540 = vcmp.lt.s32.totalorder %v1492, 16
      %vm1541 = vcmp.lt.s32.totalorder %v1493, 16
      %vm1542 = vcmp.lt.s32.totalorder %v1494, 16
      %vm1543 = vcmp.lt.s32.totalorder %v1495, 16
      %vm1544 = vcmp.lt.s32.totalorder %v1496, 16
      %vm1545 = vcmp.lt.s32.totalorder %v1497, 16
      %vm1546 = vcmp.lt.s32.totalorder %v1498, 16
      %vm1547 = vcmp.lt.s32.totalorder %v1499, 16
      %vm1548 = vcmp.lt.s32.totalorder %v1500, 16
      %vm1549 = vcmp.lt.s32.totalorder %v1501, 16
      %vm1550 = vcmp.lt.s32.totalorder %v1502, 16
      %vm1551 = vcmp.lt.s32.totalorder %v1503, 16
      %vm1552 = vcmp.lt.s32.totalorder %v1504, 16
      %vm1553 = vcmp.lt.s32.totalorder %v1505, 16
      %vm1554 = vcmp.lt.s32.totalorder %v1506, 16
      %vm1555 = vcmp.lt.s32.totalorder %v1507, 16
      %vm1556 = vcmp.lt.s32.totalorder %v1508, 16
      %vm1557 = vcmp.lt.s32.totalorder %v1509, 16
      %vm1558 = vcmp.lt.s32.totalorder %v1510, 16
      %vm1559 = vcmp.lt.s32.totalorder %v1511, 16
      %vm1560 = vcmp.lt.s32.totalorder %v1512, 16
      %v1561 = vsel %vm1513, %v648, 0.0
      %v1562 = vsel %vm1514, %v649, 0.0
      %v1563 = vsel %vm1515, %v650, 0.0
      %v1564 = vsel %vm1516, %v651, 0.0
      %v1565 = vsel %vm1517, %v652, 0.0
      %v1566 = vsel %vm1518, %v653, 0.0
      %v1567 = vsel %vm1519, %v654, 0.0
      %v1568 = vsel %vm1520, %v655, 0.0
      %v1569 = vsel %vm1521, %v656, 0.0
      %v1570 = vsel %vm1522, %v657, 0.0
      %v1571 = vsel %vm1523, %v658, 0.0
      %v1572 = vsel %vm1524, %v659, 0.0
      %v1573 = vsel %vm1525, %v660, 0.0
      %v1574 = vsel %vm1526, %v661, 0.0
      %v1575 = vsel %vm1527, %v662, 0.0
      %v1576 = vsel %vm1528, %v663, 0.0
      %v1577 = vsel %vm1529, %v664, 0.0
      %v1578 = vsel %vm1530, %v665, 0.0
      %v1579 = vsel %vm1531, %v666, 0.0
      %v1580 = vsel %vm1532, %v667, 0.0
      %v1581 = vsel %vm1533, %v668, 0.0
      %v1582 = vsel %vm1534, %v669, 0.0
      %v1583 = vsel %vm1535, %v670, 0.0
      %v1584 = vsel %vm1536, %v671, 0.0
      %v1585 = vsel %vm1537, %v672, 0.0
      %v1586 = vsel %vm1538, %v673, 0.0
      %v1587 = vsel %vm1539, %v674, 0.0
      %v1588 = vsel %vm1540, %v675, 0.0
      %v1589 = vsel %vm1541, %v676, 0.0
      %v1590 = vsel %vm1542, %v677, 0.0
      %v1591 = vsel %vm1543, %v678, 0.0
      %v1592 = vsel %vm1544, %v679, 0.0
      %v1593 = vsel %vm1545, %v680, 0.0
      %v1594 = vsel %vm1546, %v681, 0.0
      %v1595 = vsel %vm1547, %v682, 0.0
      %v1596 = vsel %vm1548, %v683, 0.0
      %v1597 = vsel %vm1549, %v684, 0.0
      %v1598 = vsel %vm1550, %v685, 0.0
      %v1599 = vsel %vm1551, %v686, 0.0
      %v1600 = vsel %vm1552, %v687, 0.0
      %v1601 = vsel %vm1553, %v688, 0.0
      %v1602 = vsel %vm1554, %v689, 0.0
      %v1603 = vsel %vm1555, %v690, 0.0
      %v1604 = vsel %vm1556, %v691, 0.0
      %v1605 = vsel %vm1557, %v692, 0.0
      %v1606 = vsel %vm1558, %v693, 0.0
      %v1607 = vsel %vm1559, %v694, 0.0
      %v1608 = vsel %vm1560, %v695, 0.0
      %v1609 = vpack.c.bf16 %v1562, %v1561
      %v1610 = vpack.c.bf16 %v1564, %v1563
      %v1611 = vpack.c.bf16 %v1566, %v1565
      %v1612 = vpack.c.bf16 %v1568, %v1567
      %v1613 = vpack.c.bf16 %v1570, %v1569
      %v1614 = vpack.c.bf16 %v1572, %v1571
      %v1615 = vpack.c.bf16 %v1574, %v1573
      %v1616 = vpack.c.bf16 %v1576, %v1575
      %v1617 = vpack.c.bf16 %v1578, %v1577
      %v1618 = vpack.c.bf16 %v1580, %v1579
      %v1619 = vpack.c.bf16 %v1582, %v1581
      %v1620 = vpack.c.bf16 %v1584, %v1583
      %v1621 = vpack.c.bf16 %v1586, %v1585
      %v1622 = vpack.c.bf16 %v1588, %v1587
      %v1623 = vpack.c.bf16 %v1590, %v1589
      %v1624 = vpack.c.bf16 %v1592, %v1591
      %v1625 = vpack.c.bf16 %v1594, %v1593
      %v1626 = vpack.c.bf16 %v1596, %v1595
      %v1627 = vpack.c.bf16 %v1598, %v1597
      %v1628 = vpack.c.bf16 %v1600, %v1599
      %v1629 = vpack.c.bf16 %v1602, %v1601
      %v1630 = vpack.c.bf16 %v1604, %v1603
      %v1631 = vpack.c.bf16 %v1606, %v1605
      %v1632 = vpack.c.bf16 %v1608, %v1607
      %1633 = vst [vmem:[#allocation2] sm:$0xff] 0
      %1634 = vst [vmem:[#allocation2 + $0x8] sm:$0xff] 0
      %1635 = vst [vmem:[#allocation2 + $0xd0] sm:$0xff] 0
      %1636 = vst [vmem:[#allocation2 + $0xd8] sm:$0xff] 0
      %1637 = vst [vmem:[#allocation2 + $0x10] sm:$0xff] %v1609
      %1638 = vst [vmem:[#allocation2 + $0x18] sm:$0xff] %v1610
      %1639 = vst [vmem:[#allocation2 + $0x20] sm:$0xff] %v1611
      %1640 = vst [vmem:[#allocation2 + $0x28] sm:$0xff] %v1612
      %1641 = vst [vmem:[#allocation2 + $0x30] sm:$0xff] %v1613
      %1642 = vst [vmem:[#allocation2 + $0x38] sm:$0xff] %v1614
      %1643 = vst [vmem:[#allocation2 + $0x40] sm:$0xff] %v1615
      %1644 = vst [vmem:[#allocation2 + $0x48] sm:$0xff] %v1616
      %1645 = vst [vmem:[#allocation2 + $0x50] sm:$0xff] %v1617
      %1646 = vst [vmem:[#allocation2 + $0x58] sm:$0xff] %v1618
      %1647 = vst [vmem:[#allocation2 + $0x60] sm:$0xff] %v1619
      %1648 = vst [vmem:[#allocation2 + $0x68] sm:$0xff] %v1620
      %1649 = vst [vmem:[#allocation2 + $0x70] sm:$0xff] %v1621
      %1650 = vst [vmem:[#allocation2 + $0x78] sm:$0xff] %v1622
      %1651 = vst [vmem:[#allocation2 + $0x80] sm:$0xff] %v1623
      %1652 = vst [vmem:[#allocation2 + $0x88] sm:$0xff] %v1624
      %1653 = vst [vmem:[#allocation2 + $0x90] sm:$0xff] %v1625
      %1654 = vst [vmem:[#allocation2 + $0x98] sm:$0xff] %v1626
      %1655 = vst [vmem:[#allocation2 + $0xa0] sm:$0xff] %v1627
      %1656 = vst [vmem:[#allocation2 + $0xa8] sm:$0xff] %v1628
      %1657 = vst [vmem:[#allocation2 + $0xb0] sm:$0xff] %v1629
      %1658 = vst [vmem:[#allocation2 + $0xb8] sm:$0xff] %v1630
      %1659 = vst [vmem:[#allocation2 + $0xc0] sm:$0xff] %v1631
      %1660 = vst [vmem:[#allocation2 + $0xc8] sm:$0xff] %v1632
      %v1661 = vld [vmem:[#allocation2] sm:$0xf8]
      %v1662 = vld [vmem:[#allocation2 + $0x8] sm:$0xff]
      %v1663 = vld [vmem:[#allocation2 + $0x10] sm:$0xff]
      %v1664 = vld [vmem:[#allocation2 + $0x18] sm:$0xff]
      %v1665 = vld [vmem:[#allocation2 + $0x20] sm:$0xff]
      %v1666 = vld [vmem:[#allocation2 + $0x28] sm:$0xff]
      %v1667 = vld [vmem:[#allocation2 + $0x30] sm:$0xff]
      %v1668 = vld [vmem:[#allocation2 + $0x38] sm:$0xff]
      %v1669 = vld [vmem:[#allocation2 + $0x40] sm:$0xff]
      %v1670 = vld [vmem:[#allocation2 + $0x48] sm:$0xff]
      %v1671 = vld [vmem:[#allocation2 + $0x50] sm:$0xff]
      %v1672 = vld [vmem:[#allocation2 + $0x58] sm:$0xff]
      %v1673 = vld [vmem:[#allocation2 + $0x60] sm:$0xff]
      %v1674 = vld [vmem:[#allocation2 + $0x68] sm:$0xff]
      %v1675 = vld [vmem:[#allocation2 + $0x70] sm:$0xff]
      %v1676 = vld [vmem:[#allocation2 + $0x78] sm:$0xff]
      %v1677 = vld [vmem:[#allocation2 + $0x80] sm:$0xff]
      %v1678 = vld [vmem:[#allocation2 + $0x88] sm:$0xff]
      %v1679 = vld [vmem:[#allocation2 + $0x90] sm:$0xff]
      %v1680 = vld [vmem:[#allocation2 + $0x98] sm:$0xff]
      %v1681 = vld [vmem:[#allocation2 + $0xa0] sm:$0xff]
      %v1682 = vld [vmem:[#allocation2 + $0xa8] sm:$0xff]
      %v1683 = vld [vmem:[#allocation2 + $0xb0] sm:$0xff]
      %v1684 = vld [vmem:[#allocation2 + $0xb8] sm:$0xff]
      %v1685 = vld [vmem:[#allocation2 + $0xc0] sm:$0xf]
      %v1686 = vld [vmem:[%s3] sm:$0xf]
      %v1687 = vld [vmem:[%s3 + $0x4] sm:$0xf]
      %v1688 = vld [vmem:[%s3 + $0x8] sm:$0xf]
      %v1689 = vld [vmem:[%s3 + $0xc] sm:$0xf]
      %v1690 = vld [vmem:[%s3 + $0x10] sm:$0xf]
      %v1691 = vld [vmem:[%s3 + $0x14] sm:$0xf]
      %v1692 = vld [vmem:[%s3 + $0x18] sm:$0xf]
      %v1693 = vld [vmem:[%s3 + $0x1c] sm:$0xf]
      %v1694 = vld [vmem:[%s3 + $0x20] sm:$0xf]
      %v1695 = vld [vmem:[%s3 + $0x24] sm:$0xf]
      %v1696 = vld [vmem:[%s3 + $0x28] sm:$0xf]
      %v1697 = vld [vmem:[%s3 + $0x2c] sm:$0xf]
      %v1698 = vld [vmem:[%s3 + $0x30] sm:$0xf]
      %v1699 = vld [vmem:[%s3 + $0x34] sm:$0xf]
      %v1700 = vld [vmem:[%s3 + $0x38] sm:$0xf]
      %v1701 = vld [vmem:[%s3 + $0x3c] sm:$0xf]
      %v1702 = vld [vmem:[#allocation2] sm:$0xf0]
      %s1703 = scalar_lea.vmem %s3, 64
      %v1704 = vld [vmem:[%s1703] sm:$0xf]
      %v1705 = vld [vmem:[%s1703 + $0x4] sm:$0xf]
      %v1706 = vld [vmem:[%s1703 + $0x8] sm:$0xf]
      %v1707 = vld [vmem:[%s1703 + $0xc] sm:$0xf]
      %v1708 = vld [vmem:[%s1703 + $0x10] sm:$0xf]
      %v1709 = vld [vmem:[%s1703 + $0x14] sm:$0xf]
      %v1710 = vld [vmem:[%s1703 + $0x18] sm:$0xf]
      %v1711 = vld [vmem:[%s1703 + $0x1c] sm:$0xf]
      %v1712 = vld [vmem:[%s1703 + $0x20] sm:$0xf]
      %v1713 = vld [vmem:[%s1703 + $0x24] sm:$0xf]
      %v1714 = vld [vmem:[%s1703 + $0x28] sm:$0xf]
      %v1715 = vld [vmem:[%s1703 + $0x2c] sm:$0xf]
      %v1716 = vld [vmem:[%s1703 + $0x30] sm:$0xf]
      %v1717 = vld [vmem:[%s1703 + $0x34] sm:$0xf]
      %v1718 = vld [vmem:[%s1703 + $0x38] sm:$0xf]
      %v1719 = vld [vmem:[%s1703 + $0x3c] sm:$0xf]
      %vm1745 = vcmask 1043456
      %v1746 = vrot.slane %v1702, 4
      %v1747 = vrot.slane %v1662, 4
      %v1748 = vsel %vm1745, %v1746, %v1747
      %v1749 = vrot.slane %v1663, 4
      %v1750 = vsel %vm1745, %v1747, %v1749
      %v1751 = vrot.slane %v1664, 4
      %v1752 = vsel %vm1745, %v1749, %v1751
      %v1753 = vrot.slane %v1665, 4
      %v1754 = vsel %vm1745, %v1751, %v1753
      %v1755 = vrot.slane %v1666, 4
      %v1756 = vsel %vm1745, %v1753, %v1755
      %v1757 = vrot.slane %v1667, 4
      %v1758 = vsel %vm1745, %v1755, %v1757
      %v1759 = vrot.slane %v1668, 4
      %v1760 = vsel %vm1745, %v1757, %v1759
      %v1761 = vrot.slane %v1669, 4
      %v1762 = vsel %vm1745, %v1759, %v1761
      %v1763 = vrot.slane %v1670, 4
      %v1764 = vsel %vm1745, %v1761, %v1763
      %v1765 = vrot.slane %v1671, 4
      %v1766 = vsel %vm1745, %v1763, %v1765
      %v1767 = vrot.slane %v1672, 4
      %v1768 = vsel %vm1745, %v1765, %v1767
      %v1769 = vrot.slane %v1673, 4
      %v1770 = vsel %vm1745, %v1767, %v1769
      %v1771 = vrot.slane %v1674, 4
      %v1772 = vsel %vm1745, %v1769, %v1771
      %v1773 = vrot.slane %v1675, 4
      %v1774 = vsel %vm1745, %v1771, %v1773
      %v1775 = vrot.slane %v1676, 4
      %v1776 = vsel %vm1745, %v1773, %v1775
      %v1777 = vrot.slane %v1677, 4
      %v1778 = vsel %vm1745, %v1775, %v1777
      %v1779 = vrot.slane %v1678, 4
      %v1780 = vsel %vm1745, %v1777, %v1779
      %v1781 = vrot.slane %v1679, 4
      %v1782 = vsel %vm1745, %v1779, %v1781
      %v1783 = vrot.slane %v1680, 4
      %v1784 = vsel %vm1745, %v1781, %v1783
      %v1785 = vrot.slane %v1681, 4
      %v1786 = vsel %vm1745, %v1783, %v1785
      %v1787 = vrot.slane %v1682, 4
      %v1788 = vsel %vm1745, %v1785, %v1787
      %v1789 = vrot.slane %v1683, 4
      %v1790 = vsel %vm1745, %v1787, %v1789
      %v1791 = vrot.slane %v1684, 4
      %v1792 = vsel %vm1745, %v1789, %v1791
      %v1793 = vrot.slane %v1685, 4
      %v1794 = vsel %vm1745, %v1791, %v1793
      %v1835 = vunpack.c.l.b16 %v1704
      %v1836 = vunpack.c.l.b16 %v1705
      %v1837 = vunpack.c.l.b16 %v1706
      %v1838 = vunpack.c.l.b16 %v1707
      %v1839 = vunpack.c.l.b16 %v1708
      %v1840 = vunpack.c.l.b16 %v1709
      %v1841 = vunpack.c.l.b16 %v1710
      %v1842 = vunpack.c.l.b16 %v1711
      %v1843 = vunpack.c.l.b16 %v1712
      %v1844 = vunpack.c.l.b16 %v1713
      %v1845 = vunpack.c.l.b16 %v1714
      %v1846 = vunpack.c.l.b16 %v1715
      %v1847 = vunpack.c.l.b16 %v1716
      %v1848 = vunpack.c.l.b16 %v1717
      %v1849 = vunpack.c.l.b16 %v1718
      %v1850 = vunpack.c.l.b16 %v1719
      %v1851 = vpack.c.b16 %v1836, %v1835
      %v1852 = vpack.c.b16 %v1838, %v1837
      %v1853 = vpack.c.b16 %v1840, %v1839
      %v1854 = vpack.c.b16 %v1842, %v1841
      %v1855 = vpack.c.b16 %v1844, %v1843
      %v1856 = vpack.c.b16 %v1846, %v1845
      %v1857 = vpack.c.b16 %v1848, %v1847
      %v1858 = vpack.c.b16 %v1850, %v1849
      %1867 = vmatprep.subr.bf16.mxu0 0
      %1868 = vmatpush1.bf16.msra.mxu0 %v1851
      %1869 = vmatprep.subr.bf16.mxu0 0
      %1870 = vmatpush1.bf16.msra.mxu0 %v1852
      %1871 = vmatprep.subr.bf16.mxu0 0
      %1872 = vmatpush1.bf16.msra.mxu0 %v1853
      %1873 = vmatprep.subr.bf16.mxu0 0
      %1874 = vmatpush1.bf16.msra.mxu0 %v1854
      %1875 = vmatprep.subr.bf16.mxu0 0
      %1876 = vmatpush1.bf16.msra.mxu0 %v1855
      %1877 = vmatprep.subr.bf16.mxu0 0
      %1878 = vmatpush1.bf16.msra.mxu0 %v1856
      %1879 = vmatprep.subr.bf16.mxu0 0
      %1880 = vmatpush1.bf16.msra.mxu0 %v1857
      %1881 = vmatprep.subr.bf16.mxu0 0
      %1882 = vmatpush1.bf16.msra.mxu0 %v1858
      %1883 = vmatprep.subr.bf16.mxu0 0
      %1884 = vmatpush1.bf16.msra.mxu0 0
      %1885 = vmatprep.subr.bf16.mxu0 0
      %1886 = vmatpush1.bf16.msra.mxu0 0
      %1887 = vmatprep.subr.bf16.mxu0 0
      %1888 = vmatpush1.bf16.msra.mxu0 0
      %1889 = vmatprep.subr.bf16.mxu0 0
      %1890 = vmatpush1.bf16.msra.mxu0 0
      %1891 = vmatprep.subr.bf16.mxu0 0
      %1892 = vmatpush1.bf16.msra.mxu0 0
      %1893 = vmatprep.subr.bf16.mxu0 0
      %1894 = vmatpush1.bf16.msra.mxu0 0
      %1895 = vmatprep.subr.bf16.mxu0 0
      %1896 = vmatpush1.bf16.msra.mxu0 0
      %1897 = vmatprep.subr.bf16.mxu0 0
      %1898 = vmatpush1.bf16.msra.mxu0 0
      %1899 = vmatprep.mubr.bf16.mxu0 0
      %1900 = vmatmul.mubr.bf16.gmra.mrb[0].mxu0 %v1748
      %v1901 = vpop.f32.mrb[0].mxu0
      %v1902 = vadd.f32 0.0, %v1901
      %v1903 = vpop.f32.mrb[0].mxu0
      %v1904 = vpop.f32.mrb[0].mxu0
      %v1905 = vadd.f32 0.0, %v1904
      %v1906 = vpop.f32.mrb[0].mxu0
      %1907 = vmatprep.mubr.bf16.mxu0 0
      %1908 = vmatmul.mubr.bf16.gmra.mrb[0].mxu0 %v1750
      %v1909 = vpop.f32.mrb[0].mxu0
      %v1910 = vadd.f32 0.0, %v1909
      %v1911 = vpop.f32.mrb[0].mxu0
      %v1912 = vpop.f32.mrb[0].mxu0
      %v1913 = vadd.f32 0.0, %v1912
      %v1914 = vpop.f32.mrb[0].mxu0
      %1915 = vmatprep.mubr.bf16.mxu0 0
      %1916 = vmatmul.mubr.bf16.gmra.mrb[0].mxu0 %v1752
      %v1917 = vpop.f32.mrb[0].mxu0
      %v1918 = vadd.f32 0.0, %v1917
      %v1919 = vpop.f32.mrb[0].mxu0
      %v1920 = vpop.f32.mrb[0].mxu0
      %v1921 = vadd.f32 0.0, %v1920
      %v1922 = vpop.f32.mrb[0].mxu0
      %1923 = vmatprep.mubr.bf16.mxu0 0
      %1924 = vmatmul.mubr.bf16.gmra.mrb[0].mxu0 %v1754
      %v1925 = vpop.f32.mrb[0].mxu0
      %v1926 = vadd.f32 0.0, %v1925
      %v1927 = vpop.f32.mrb[0].mxu0
      %v1928 = vpop.f32.mrb[0].mxu0
      %v1929 = vadd.f32 0.0, %v1928
      %v1930 = vpop.f32.mrb[0].mxu0
      %1931 = vmatprep.mubr.bf16.mxu0 0
      %1932 = vmatmul.mubr.bf16.gmra.mrb[0].mxu0 %v1756
      %v1933 = vpop.f32.mrb[0].mxu0
      %v1934 = vadd.f32 0.0, %v1933
      %v1935 = vpop.f32.mrb[0].mxu0
      %v1936 = vpop.f32.mrb[0].mxu0
      %v1937 = vadd.f32 0.0, %v1936
      %v1938 = vpop.f32.mrb[0].mxu0
      %1939 = vmatprep.mubr.bf16.mxu0 0
      %1940 = vmatmul.mubr.bf16.gmra.mrb[0].mxu0 %v1758
      %v1941 = vpop.f32.mrb[0].mxu0
      %v1942 = vadd.f32 0.0, %v1941
      %v1943 = vpop.f32.mrb[0].mxu0
      %v1944 = vpop.f32.mrb[0].mxu0
      %v1945 = vadd.f32 0.0, %v1944
      %v1946 = vpop.f32.mrb[0].mxu0
      %1947 = vmatprep.mubr.bf16.mxu0 0
      %1948 = vmatmul.mubr.bf16.gmra.mrb[0].mxu0 %v1760
      %v1949 = vpop.f32.mrb[0].mxu0
      %v1950 = vadd.f32 0.0, %v1949
      %v1951 = vpop.f32.mrb[0].mxu0
      %v1952 = vpop.f32.mrb[0].mxu0
      %v1953 = vadd.f32 0.0, %v1952
      %v1954 = vpop.f32.mrb[0].mxu0
      %1955 = vmatprep.mubr.bf16.mxu0 0
      %1956 = vmatmul.mubr.bf16.gmra.mrb[0].mxu0 %v1762
      %v1957 = vpop.f32.mrb[0].mxu0
      %v1958 = vadd.f32 0.0, %v1957
      %v1959 = vpop.f32.mrb[0].mxu0
      %v1960 = vpop.f32.mrb[0].mxu0
      %v1961 = vadd.f32 0.0, %v1960
      %v1962 = vpop.f32.mrb[0].mxu0
      %1963 = vmatprep.mubr.bf16.mxu0 0
      %1964 = vmatmul.mubr.bf16.gmra.mrb[0].mxu0 %v1764
      %v1965 = vpop.f32.mrb[0].mxu0
      %v1966 = vadd.f32 0.0, %v1965
      %v1967 = vpop.f32.mrb[0].mxu0
      %v1968 = vpop.f32.mrb[0].mxu0
      %v1969 = vadd.f32 0.0, %v1968
      %v1970 = vpop.f32.mrb[0].mxu0
      %1971 = vmatprep.mubr.bf16.mxu0 0
      %1972 = vmatmul.mubr.bf16.gmra.mrb[0].mxu0 %v1766
      %v1973 = vpop.f32.mrb[0].mxu0
      %v1974 = vadd.f32 0.0, %v1973
      %v1975 = vpop.f32.mrb[0].mxu0
      %v1976 = vpop.f32.mrb[0].mxu0
      %v1977 = vadd.f32 0.0, %v1976
      %v1978 = vpop.f32.mrb[0].mxu0
      %1979 = vmatprep.mubr.bf16.mxu0 0
      %1980 = vmatmul.mubr.bf16.gmra.mrb[0].mxu0 %v1768
      %v1981 = vpop.f32.mrb[0].mxu0
      %v1982 = vadd.f32 0.0, %v1981
      %v1983 = vpop.f32.mrb[0].mxu0
      %v1984 = vpop.f32.mrb[0].mxu0
      %v1985 = vadd.f32 0.0, %v1984
      %v1986 = vpop.f32.mrb[0].mxu0
      %1987 = vmatprep.mubr.bf16.mxu0 0
      %1988 = vmatmul.mubr.bf16.gmra.mrb[0].mxu0 %v1770
      %v1989 = vpop.f32.mrb[0].mxu0
      %v1990 = vadd.f32 0.0, %v1989
      %v1991 = vpop.f32.mrb[0].mxu0
      %v1992 = vpop.f32.mrb[0].mxu0
      %v1993 = vadd.f32 0.0, %v1992
      %v1994 = vpop.f32.mrb[0].mxu0
      %1995 = vmatprep.mubr.bf16.mxu0 0
      %1996 = vmatmul.mubr.bf16.gmra.mrb[0].mxu0 %v1772
      %v1997 = vpop.f32.mrb[0].mxu0
      %v1998 = vadd.f32 0.0, %v1997
      %v1999 = vpop.f32.mrb[0].mxu0
      %v2000 = vpop.f32.mrb[0].mxu0
      %v2001 = vadd.f32 0.0, %v2000
      %v2002 = vpop.f32.mrb[0].mxu0
      %2003 = vmatprep.mubr.bf16.mxu0 0
      %2004 = vmatmul.mubr.bf16.gmra.mrb[0].mxu0 %v1774
      %v2005 = vpop.f32.mrb[0].mxu0
      %v2006 = vadd.f32 0.0, %v2005
      %v2007 = vpop.f32.mrb[0].mxu0
      %v2008 = vpop.f32.mrb[0].mxu0
      %v2009 = vadd.f32 0.0, %v2008
      %v2010 = vpop.f32.mrb[0].mxu0
      %2011 = vmatprep.mubr.bf16.mxu0 0
      %2012 = vmatmul.mubr.bf16.gmra.mrb[0].mxu0 %v1776
      %v2013 = vpop.f32.mrb[0].mxu0
      %v2014 = vadd.f32 0.0, %v2013
      %v2015 = vpop.f32.mrb[0].mxu0
      %v2016 = vpop.f32.mrb[0].mxu0
      %v2017 = vadd.f32 0.0, %v2016
      %v2018 = vpop.f32.mrb[0].mxu0
      %2019 = vmatprep.mubr.bf16.mxu0 0
      %2020 = vmatmul.mubr.bf16.gmra.mrb[0].mxu0 %v1778
      %v2021 = vpop.f32.mrb[0].mxu0
      %v2022 = vadd.f32 0.0, %v2021
      %v2023 = vpop.f32.mrb[0].mxu0
      %v2024 = vpop.f32.mrb[0].mxu0
      %v2025 = vadd.f32 0.0, %v2024
      %v2026 = vpop.f32.mrb[0].mxu0
      %2027 = vmatprep.mubr.bf16.mxu0 0
      %2028 = vmatmul.mubr.bf16.gmra.mrb[0].mxu0 %v1780
      %v2029 = vpop.f32.mrb[0].mxu0
      %v2030 = vadd.f32 0.0, %v2029
      %v2031 = vpop.f32.mrb[0].mxu0
      %v2032 = vpop.f32.mrb[0].mxu0
      %v2033 = vadd.f32 0.0, %v2032
      %v2034 = vpop.f32.mrb[0].mxu0
      %2035 = vmatprep.mubr.bf16.mxu0 0
      %2036 = vmatmul.mubr.bf16.gmra.mrb[0].mxu0 %v1782
      %v2037 = vpop.f32.mrb[0].mxu0
      %v2038 = vadd.f32 0.0, %v2037
      %v2039 = vpop.f32.mrb[0].mxu0
      %v2040 = vpop.f32.mrb[0].mxu0
      %v2041 = vadd.f32 0.0, %v2040
      %v2042 = vpop.f32.mrb[0].mxu0
      %2043 = vmatprep.mubr.bf16.mxu0 0
      %2044 = vmatmul.mubr.bf16.gmra.mrb[0].mxu0 %v1784
      %v2045 = vpop.f32.mrb[0].mxu0
      %v2046 = vadd.f32 0.0, %v2045
      %v2047 = vpop.f32.mrb[0].mxu0
      %v2048 = vpop.f32.mrb[0].mxu0
      %v2049 = vadd.f32 0.0, %v2048
      %v2050 = vpop.f32.mrb[0].mxu0
      %2051 = vmatprep.mubr.bf16.mxu0 0
      %2052 = vmatmul.mubr.bf16.gmra.mrb[0].mxu0 %v1786
      %v2053 = vpop.f32.mrb[0].mxu0
      %v2054 = vadd.f32 0.0, %v2053
      %v2055 = vpop.f32.mrb[0].mxu0
      %v2056 = vpop.f32.mrb[0].mxu0
      %v2057 = vadd.f32 0.0, %v2056
      %v2058 = vpop.f32.mrb[0].mxu0
      %2059 = vmatprep.mubr.bf16.mxu0 0
      %2060 = vmatmul.mubr.bf16.gmra.mrb[0].mxu0 %v1788
      %v2061 = vpop.f32.mrb[0].mxu0
      %v2062 = vadd.f32 0.0, %v2061
      %v2063 = vpop.f32.mrb[0].mxu0
      %v2064 = vpop.f32.mrb[0].mxu0
      %v2065 = vadd.f32 0.0, %v2064
      %v2066 = vpop.f32.mrb[0].mxu0
      %2067 = vmatprep.mubr.bf16.mxu0 0
      %2068 = vmatmul.mubr.bf16.gmra.mrb[0].mxu0 %v1790
      %v2069 = vpop.f32.mrb[0].mxu0
      %v2070 = vadd.f32 0.0, %v2069
      %v2071 = vpop.f32.mrb[0].mxu0
      %v2072 = vpop.f32.mrb[0].mxu0
      %v2073 = vadd.f32 0.0, %v2072
      %v2074 = vpop.f32.mrb[0].mxu0
      %2075 = vmatprep.mubr.bf16.mxu0 0
      %2076 = vmatmul.mubr.bf16.gmra.mrb[0].mxu0 %v1792
      %v2077 = vpop.f32.mrb[0].mxu0
      %v2078 = vadd.f32 0.0, %v2077
      %v2079 = vpop.f32.mrb[0].mxu0
      %v2080 = vpop.f32.mrb[0].mxu0
      %v2081 = vadd.f32 0.0, %v2080
      %v2082 = vpop.f32.mrb[0].mxu0
      %2083 = vmatprep.mubr.bf16.mxu0 0
      %2084 = vmatmul.mubr.bf16.gmra.mrb[0].mxu0 %v1794
      %v2085 = vpop.f32.mrb[0].mxu0
      %v2086 = vadd.f32 0.0, %v2085
      %v2087 = vpop.f32.mrb[0].mxu0
      %v2088 = vpop.f32.mrb[0].mxu0
      %v2089 = vadd.f32 0.0, %v2088
      %v2090 = vpop.f32.mrb[0].mxu0
      %2091 = vdwg.mxu0
      %vm2092 = vsmask.f32 4352
      %v2094 = vshrl.u32 %v1661, 16
      %v2096 = vrot.slane %v2094, 3
      %v2097 = vshll.u32 %v1661, 16
      %v2099 = vrot.slane %v2097, 4
      %v2100 = vor.u32 %v2096, %v2099
      %v2102 = vshrl.u32 %v1662, 16
      %v2104 = vrot.slane %v2102, 3
      %v2105 = vshll.u32 %v1662, 16
      %v2107 = vrot.slane %v2105, 4
      %v2108 = vor.u32 %v2104, %v2107
      %v2109 = vsel %vm2092, %v2100, %v2108
      %v2111 = vshrl.u32 %v1663, 16
      %v2113 = vrot.slane %v2111, 3
      %v2114 = vshll.u32 %v1663, 16
      %v2116 = vrot.slane %v2114, 4
      %v2117 = vor.u32 %v2113, %v2116
      %v2118 = vsel %vm2092, %v2108, %v2117
      %v2120 = vshrl.u32 %v1664, 16
      %v2122 = vrot.slane %v2120, 3
      %v2123 = vshll.u32 %v1664, 16
      %v2125 = vrot.slane %v2123, 4
      %v2126 = vor.u32 %v2122, %v2125
      %v2127 = vsel %vm2092, %v2117, %v2126
      %v2129 = vshrl.u32 %v1665, 16
      %v2131 = vrot.slane %v2129, 3
      %v2132 = vshll.u32 %v1665, 16
      %v2134 = vrot.slane %v2132, 4
      %v2135 = vor.u32 %v2131, %v2134
      %v2136 = vsel %vm2092, %v2126, %v2135
      %v2138 = vshrl.u32 %v1666, 16
      %v2140 = vrot.slane %v2138, 3
      %v2141 = vshll.u32 %v1666, 16
      %v2143 = vrot.slane %v2141, 4
      %v2144 = vor.u32 %v2140, %v2143
      %v2145 = vsel %vm2092, %v2135, %v2144
      %v2147 = vshrl.u32 %v1667, 16
      %v2149 = vrot.slane %v2147, 3
      %v2150 = vshll.u32 %v1667, 16
      %v2152 = vrot.slane %v2150, 4
      %v2153 = vor.u32 %v2149, %v2152
      %v2154 = vsel %vm2092, %v2144, %v2153
      %v2156 = vshrl.u32 %v1668, 16
      %v2158 = vrot.slane %v2156, 3
      %v2159 = vshll.u32 %v1668, 16
      %v2161 = vrot.slane %v2159, 4
      %v2162 = vor.u32 %v2158, %v2161
      %v2163 = vsel %vm2092, %v2153, %v2162
      %v2165 = vshrl.u32 %v1669, 16
      %v2167 = vrot.slane %v2165, 3
      %v2168 = vshll.u32 %v1669, 16
      %v2170 = vrot.slane %v2168, 4
      %v2171 = vor.u32 %v2167, %v2170
      %v2172 = vsel %vm2092, %v2162, %v2171
      %v2174 = vshrl.u32 %v1670, 16
      %v2176 = vrot.slane %v2174, 3
      %v2177 = vshll.u32 %v1670, 16
      %v2179 = vrot.slane %v2177, 4
      %v2180 = vor.u32 %v2176, %v2179
      %v2181 = vsel %vm2092, %v2171, %v2180
      %v2183 = vshrl.u32 %v1671, 16
      %v2185 = vrot.slane %v2183, 3
      %v2186 = vshll.u32 %v1671, 16
      %v2188 = vrot.slane %v2186, 4
      %v2189 = vor.u32 %v2185, %v2188
      %v2190 = vsel %vm2092, %v2180, %v2189
      %v2192 = vshrl.u32 %v1672, 16
      %v2194 = vrot.slane %v2192, 3
      %v2195 = vshll.u32 %v1672, 16
      %v2197 = vrot.slane %v2195, 4
      %v2198 = vor.u32 %v2194, %v2197
      %v2199 = vsel %vm2092, %v2189, %v2198
      %v2201 = vshrl.u32 %v1673, 16
      %v2203 = vrot.slane %v2201, 3
      %v2204 = vshll.u32 %v1673, 16
      %v2206 = vrot.slane %v2204, 4
      %v2207 = vor.u32 %v2203, %v2206
      %v2208 = vsel %vm2092, %v2198, %v2207
      %v2210 = vshrl.u32 %v1674, 16
      %v2212 = vrot.slane %v2210, 3
      %v2213 = vshll.u32 %v1674, 16
      %v2215 = vrot.slane %v2213, 4
      %v2216 = vor.u32 %v2212, %v2215
      %v2217 = vsel %vm2092, %v2207, %v2216
      %v2219 = vshrl.u32 %v1675, 16
      %v2221 = vrot.slane %v2219, 3
      %v2222 = vshll.u32 %v1675, 16
      %v2224 = vrot.slane %v2222, 4
      %v2225 = vor.u32 %v2221, %v2224
      %v2226 = vsel %vm2092, %v2216, %v2225
      %v2228 = vshrl.u32 %v1676, 16
      %v2230 = vrot.slane %v2228, 3
      %v2231 = vshll.u32 %v1676, 16
      %v2233 = vrot.slane %v2231, 4
      %v2234 = vor.u32 %v2230, %v2233
      %v2235 = vsel %vm2092, %v2225, %v2234
      %v2237 = vshrl.u32 %v1677, 16
      %v2239 = vrot.slane %v2237, 3
      %v2240 = vshll.u32 %v1677, 16
      %v2242 = vrot.slane %v2240, 4
      %v2243 = vor.u32 %v2239, %v2242
      %v2244 = vsel %vm2092, %v2234, %v2243
      %v2246 = vshrl.u32 %v1678, 16
      %v2248 = vrot.slane %v2246, 3
      %v2249 = vshll.u32 %v1678, 16
      %v2251 = vrot.slane %v2249, 4
      %v2252 = vor.u32 %v2248, %v2251
      %v2253 = vsel %vm2092, %v2243, %v2252
      %v2255 = vshrl.u32 %v1679, 16
      %v2257 = vrot.slane %v2255, 3
      %v2258 = vshll.u32 %v1679, 16
      %v2260 = vrot.slane %v2258, 4
      %v2261 = vor.u32 %v2257, %v2260
      %v2262 = vsel %vm2092, %v2252, %v2261
      %v2264 = vshrl.u32 %v1680, 16
      %v2266 = vrot.slane %v2264, 3
      %v2267 = vshll.u32 %v1680, 16
      %v2269 = vrot.slane %v2267, 4
      %v2270 = vor.u32 %v2266, %v2269
      %v2271 = vsel %vm2092, %v2261, %v2270
      %v2273 = vshrl.u32 %v1681, 16
      %v2275 = vrot.slane %v2273, 3
      %v2276 = vshll.u32 %v1681, 16
      %v2278 = vrot.slane %v2276, 4
      %v2279 = vor.u32 %v2275, %v2278
      %v2280 = vsel %vm2092, %v2270, %v2279
      %v2282 = vshrl.u32 %v1682, 16
      %v2284 = vrot.slane %v2282, 3
      %v2285 = vshll.u32 %v1682, 16
      %v2287 = vrot.slane %v2285, 4
      %v2288 = vor.u32 %v2284, %v2287
      %v2289 = vsel %vm2092, %v2279, %v2288
      %v2291 = vshrl.u32 %v1683, 16
      %v2293 = vrot.slane %v2291, 3
      %v2294 = vshll.u32 %v1683, 16
      %v2296 = vrot.slane %v2294, 4
      %v2297 = vor.u32 %v2293, %v2296
      %v2298 = vsel %vm2092, %v2288, %v2297
      %v2300 = vshrl.u32 %v1684, 16
      %v2302 = vrot.slane %v2300, 3
      %v2303 = vshll.u32 %v1684, 16
      %v2305 = vrot.slane %v2303, 4
      %v2306 = vor.u32 %v2302, %v2305
      %v2307 = vsel %vm2092, %v2297, %v2306
      %v2309 = vshrl.u32 %v1685, 16
      %v2311 = vrot.slane %v2309, 3
      %v2312 = vshll.u32 %v1685, 16
      %v2314 = vrot.slane %v2312, 4
      %v2315 = vor.u32 %v2311, %v2314
      %v2316 = vsel %vm2092, %v2306, %v2315
      %v2357 = vunpack.c.l.b16 %v1686
      %v2358 = vunpack.c.l.b16 %v1687
      %v2359 = vunpack.c.l.b16 %v1688
      %v2360 = vunpack.c.l.b16 %v1689
      %v2361 = vunpack.c.l.b16 %v1690
      %v2362 = vunpack.c.l.b16 %v1691
      %v2363 = vunpack.c.l.b16 %v1692
      %v2364 = vunpack.c.l.b16 %v1693
      %v2365 = vunpack.c.l.b16 %v1694
      %v2366 = vunpack.c.l.b16 %v1695
      %v2367 = vunpack.c.l.b16 %v1696
      %v2368 = vunpack.c.l.b16 %v1697
      %v2369 = vunpack.c.l.b16 %v1698
      %v2370 = vunpack.c.l.b16 %v1699
      %v2371 = vunpack.c.l.b16 %v1700
      %v2372 = vunpack.c.l.b16 %v1701
      %v2373 = vpack.c.b16 %v2358, %v2357
      %v2374 = vpack.c.b16 %v2360, %v2359
      %v2375 = vpack.c.b16 %v2362, %v2361
      %v2376 = vpack.c.b16 %v2364, %v2363
      %v2377 = vpack.c.b16 %v2366, %v2365
      %v2378 = vpack.c.b16 %v2368, %v2367
      %v2379 = vpack.c.b16 %v2370, %v2369
      %v2380 = vpack.c.b16 %v2372, %v2371
      %2389 = vmatprep.subr.bf16.mxu0 0
      %2390 = vmatpush1.bf16.msra.mxu0 %v2373
      %2391 = vmatprep.subr.bf16.mxu0 0
      %2392 = vmatpush1.bf16.msra.mxu0 %v2374
      %2393 = vmatprep.subr.bf16.mxu0 0
      %2394 = vmatpush1.bf16.msra.mxu0 %v2375
      %2395 = vmatprep.subr.bf16.mxu0 0
      %2396 = vmatpush1.bf16.msra.mxu0 %v2376
      %2397 = vmatprep.subr.bf16.mxu0 0
      %2398 = vmatpush1.bf16.msra.mxu0 %v2377
      %2399 = vmatprep.subr.bf16.mxu0 0
      %2400 = vmatpush1.bf16.msra.mxu0 %v2378
      %2401 = vmatprep.subr.bf16.mxu0 0
      %2402 = vmatpush1.bf16.msra.mxu0 %v2379
      %2403 = vmatprep.subr.bf16.mxu0 0
      %2404 = vmatpush1.bf16.msra.mxu0 %v2380
      %2405 = vmatprep.subr.bf16.mxu0 0
      %2406 = vmatpush1.bf16.msra.mxu0 0
      %2407 = vmatprep.subr.bf16.mxu0 0
      %2408 = vmatpush1.bf16.msra.mxu0 0
      %2409 = vmatprep.subr.bf16.mxu0 0
      %2410 = vmatpush1.bf16.msra.mxu0 0
      %2411 = vmatprep.subr.bf16.mxu0 0
      %2412 = vmatpush1.bf16.msra.mxu0 0
      %2413 = vmatprep.subr.bf16.mxu0 0
      %2414 = vmatpush1.bf16.msra.mxu0 0
      %2415 = vmatprep.subr.bf16.mxu0 0
      %2416 = vmatpush1.bf16.msra.mxu0 0
      %2417 = vmatprep.subr.bf16.mxu0 0
      %2418 = vmatpush1.bf16.msra.mxu0 0
      %2419 = vmatprep.subr.bf16.mxu0 0
      %2420 = vmatpush1.bf16.msra.mxu0 0
      %2421 = vmatprep.mubr.bf16.mxu0 0
      %2422 = vmatmul.mubr.bf16.gmra.mrb[0].mxu0 %v2109
      %v2423 = vpop.f32.mrb[0].mxu0
      %v2424 = vadd.f32 %v1902, %v2423
      %v2425 = vpop.f32.mrb[0].mxu0
      %v2426 = vpop.f32.mrb[0].mxu0
      %v2427 = vadd.f32 %v1905, %v2426
      %v2428 = vpop.f32.mrb[0].mxu0
      %2429 = vmatprep.mubr.bf16.mxu0 0
      %2430 = vmatmul.mubr.bf16.gmra.mrb[0].mxu0 %v2118
      %v2431 = vpop.f32.mrb[0].mxu0
      %v2432 = vadd.f32 %v1910, %v2431
      %v2433 = vpop.f32.mrb[0].mxu0
      %v2434 = vpop.f32.mrb[0].mxu0
      %v2435 = vadd.f32 %v1913, %v2434
      %v2436 = vpop.f32.mrb[0].mxu0
      %2437 = vmatprep.mubr.bf16.mxu0 0
      %2438 = vmatmul.mubr.bf16.gmra.mrb[0].mxu0 %v2127
      %v2439 = vpop.f32.mrb[0].mxu0
      %v2440 = vadd.f32 %v1918, %v2439
      %v2441 = vpop.f32.mrb[0].mxu0
      %v2442 = vpop.f32.mrb[0].mxu0
      %v2443 = vadd.f32 %v1921, %v2442
      %v2444 = vpop.f32.mrb[0].mxu0
      %2445 = vmatprep.mubr.bf16.mxu0 0
      %2446 = vmatmul.mubr.bf16.gmra.mrb[0].mxu0 %v2136
      %v2447 = vpop.f32.mrb[0].mxu0
      %v2448 = vadd.f32 %v1926, %v2447
      %v2449 = vpop.f32.mrb[0].mxu0
      %v2450 = vpop.f32.mrb[0].mxu0
      %v2451 = vadd.f32 %v1929, %v2450
      %v2452 = vpop.f32.mrb[0].mxu0
      %2453 = vmatprep.mubr.bf16.mxu0 0
      %2454 = vmatmul.mubr.bf16.gmra.mrb[0].mxu0 %v2145
      %v2455 = vpop.f32.mrb[0].mxu0
      %v2456 = vadd.f32 %v1934, %v2455
      %v2457 = vpop.f32.mrb[0].mxu0
      %v2458 = vpop.f32.mrb[0].mxu0
      %v2459 = vadd.f32 %v1937, %v2458
      %v2460 = vpop.f32.mrb[0].mxu0
      %2461 = vmatprep.mubr.bf16.mxu0 0
      %2462 = vmatmul.mubr.bf16.gmra.mrb[0].mxu0 %v2154
      %v2463 = vpop.f32.mrb[0].mxu0
      %v2464 = vadd.f32 %v1942, %v2463
      %v2465 = vpop.f32.mrb[0].mxu0
      %v2466 = vpop.f32.mrb[0].mxu0
      %v2467 = vadd.f32 %v1945, %v2466
      %v2468 = vpop.f32.mrb[0].mxu0
      %2469 = vmatprep.mubr.bf16.mxu0 0
      %2470 = vmatmul.mubr.bf16.gmra.mrb[0].mxu0 %v2163
      %v2471 = vpop.f32.mrb[0].mxu0
      %v2472 = vadd.f32 %v1950, %v2471
      %v2473 = vpop.f32.mrb[0].mxu0
      %v2474 = vpop.f32.mrb[0].mxu0
      %v2475 = vadd.f32 %v1953, %v2474
      %v2476 = vpop.f32.mrb[0].mxu0
      %2477 = vmatprep.mubr.bf16.mxu0 0
      %2478 = vmatmul.mubr.bf16.gmra.mrb[0].mxu0 %v2172
      %v2479 = vpop.f32.mrb[0].mxu0
      %v2480 = vadd.f32 %v1958, %v2479
      %v2481 = vpop.f32.mrb[0].mxu0
      %v2482 = vpop.f32.mrb[0].mxu0
      %v2483 = vadd.f32 %v1961, %v2482
      %v2484 = vpop.f32.mrb[0].mxu0
      %2485 = vmatprep.mubr.bf16.mxu0 0
      %2486 = vmatmul.mubr.bf16.gmra.mrb[0].mxu0 %v2181
      %v2487 = vpop.f32.mrb[0].mxu0
      %v2488 = vadd.f32 %v1966, %v2487
      %v2489 = vpop.f32.mrb[0].mxu0
      %v2490 = vpop.f32.mrb[0].mxu0
      %v2491 = vadd.f32 %v1969, %v2490
      %v2492 = vpop.f32.mrb[0].mxu0
      %2493 = vmatprep.mubr.bf16.mxu0 0
      %2494 = vmatmul.mubr.bf16.gmra.mrb[0].mxu0 %v2190
      %v2495 = vpop.f32.mrb[0].mxu0
      %v2496 = vadd.f32 %v1974, %v2495
      %v2497 = vpop.f32.mrb[0].mxu0
      %v2498 = vpop.f32.mrb[0].mxu0
      %v2499 = vadd.f32 %v1977, %v2498
      %v2500 = vpop.f32.mrb[0].mxu0
      %2501 = vmatprep.mubr.bf16.mxu0 0
      %2502 = vmatmul.mubr.bf16.gmra.mrb[0].mxu0 %v2199
      %v2503 = vpop.f32.mrb[0].mxu0
      %v2504 = vadd.f32 %v1982, %v2503
      %v2505 = vpop.f32.mrb[0].mxu0
      %v2506 = vpop.f32.mrb[0].mxu0
      %v2507 = vadd.f32 %v1985, %v2506
      %v2508 = vpop.f32.mrb[0].mxu0
      %2509 = vmatprep.mubr.bf16.mxu0 0
      %2510 = vmatmul.mubr.bf16.gmra.mrb[0].mxu0 %v2208
      %v2511 = vpop.f32.mrb[0].mxu0
      %v2512 = vadd.f32 %v1990, %v2511
      %v2513 = vpop.f32.mrb[0].mxu0
      %v2514 = vpop.f32.mrb[0].mxu0
      %v2515 = vadd.f32 %v1993, %v2514
      %v2516 = vpop.f32.mrb[0].mxu0
      %2517 = vmatprep.mubr.bf16.mxu0 0
      %2518 = vmatmul.mubr.bf16.gmra.mrb[0].mxu0 %v2217
      %v2519 = vpop.f32.mrb[0].mxu0
      %v2520 = vadd.f32 %v1998, %v2519
      %v2521 = vpop.f32.mrb[0].mxu0
      %v2522 = vpop.f32.mrb[0].mxu0
      %v2523 = vadd.f32 %v2001, %v2522
      %v2524 = vpop.f32.mrb[0].mxu0
      %2525 = vmatprep.mubr.bf16.mxu0 0
      %2526 = vmatmul.mubr.bf16.gmra.mrb[0].mxu0 %v2226
      %v2527 = vpop.f32.mrb[0].mxu0
      %v2528 = vadd.f32 %v2006, %v2527
      %v2529 = vpop.f32.mrb[0].mxu0
      %v2530 = vpop.f32.mrb[0].mxu0
      %v2531 = vadd.f32 %v2009, %v2530
      %v2532 = vpop.f32.mrb[0].mxu0
      %2533 = vmatprep.mubr.bf16.mxu0 0
      %2534 = vmatmul.mubr.bf16.gmra.mrb[0].mxu0 %v2235
      %v2535 = vpop.f32.mrb[0].mxu0
      %v2536 = vadd.f32 %v2014, %v2535
      %v2537 = vpop.f32.mrb[0].mxu0
      %v2538 = vpop.f32.mrb[0].mxu0
      %v2539 = vadd.f32 %v2017, %v2538
      %v2540 = vpop.f32.mrb[0].mxu0
      %2541 = vmatprep.mubr.bf16.mxu0 0
      %2542 = vmatmul.mubr.bf16.gmra.mrb[0].mxu0 %v2244
      %v2543 = vpop.f32.mrb[0].mxu0
      %v2544 = vadd.f32 %v2022, %v2543
      %v2545 = vpop.f32.mrb[0].mxu0
      %v2546 = vpop.f32.mrb[0].mxu0
      %v2547 = vadd.f32 %v2025, %v2546
      %v2548 = vpop.f32.mrb[0].mxu0
      %2549 = vmatprep.mubr.bf16.mxu0 0
      %2550 = vmatmul.mubr.bf16.gmra.mrb[0].mxu0 %v2253
      %v2551 = vpop.f32.mrb[0].mxu0
      %v2552 = vadd.f32 %v2030, %v2551
      %v2553 = vpop.f32.mrb[0].mxu0
      %v2554 = vpop.f32.mrb[0].mxu0
      %v2555 = vadd.f32 %v2033, %v2554
      %v2556 = vpop.f32.mrb[0].mxu0
      %2557 = vmatprep.mubr.bf16.mxu0 0
      %2558 = vmatmul.mubr.bf16.gmra.mrb[0].mxu0 %v2262
      %v2559 = vpop.f32.mrb[0].mxu0
      %v2560 = vadd.f32 %v2038, %v2559
      %v2561 = vpop.f32.mrb[0].mxu0
      %v2562 = vpop.f32.mrb[0].mxu0
      %v2563 = vadd.f32 %v2041, %v2562
      %v2564 = vpop.f32.mrb[0].mxu0
      %2565 = vmatprep.mubr.bf16.mxu0 0
      %2566 = vmatmul.mubr.bf16.gmra.mrb[0].mxu0 %v2271
      %v2567 = vpop.f32.mrb[0].mxu0
      %v2568 = vadd.f32 %v2046, %v2567
      %v2569 = vpop.f32.mrb[0].mxu0
      %v2570 = vpop.f32.mrb[0].mxu0
      %v2571 = vadd.f32 %v2049, %v2570
      %v2572 = vpop.f32.mrb[0].mxu0
      %2573 = vmatprep.mubr.bf16.mxu0 0
      %2574 = vmatmul.mubr.bf16.gmra.mrb[0].mxu0 %v2280
      %v2575 = vpop.f32.mrb[0].mxu0
      %v2576 = vadd.f32 %v2054, %v2575
      %v2577 = vpop.f32.mrb[0].mxu0
      %v2578 = vpop.f32.mrb[0].mxu0
      %v2579 = vadd.f32 %v2057, %v2578
      %v2580 = vpop.f32.mrb[0].mxu0
      %2581 = vmatprep.mubr.bf16.mxu0 0
      %2582 = vmatmul.mubr.bf16.gmra.mrb[0].mxu0 %v2289
      %v2583 = vpop.f32.mrb[0].mxu0
      %v2584 = vadd.f32 %v2062, %v2583
      %v2585 = vpop.f32.mrb[0].mxu0
      %v2586 = vpop.f32.mrb[0].mxu0
      %v2587 = vadd.f32 %v2065, %v2586
      %v2588 = vpop.f32.mrb[0].mxu0
      %2589 = vmatprep.mubr.bf16.mxu0 0
      %2590 = vmatmul.mubr.bf16.gmra.mrb[0].mxu0 %v2298
      %v2591 = vpop.f32.mrb[0].mxu0
      %v2592 = vadd.f32 %v2070, %v2591
      %v2593 = vpop.f32.mrb[0].mxu0
      %v2594 = vpop.f32.mrb[0].mxu0
      %v2595 = vadd.f32 %v2073, %v2594
      %v2596 = vpop.f32.mrb[0].mxu0
      %2597 = vmatprep.mubr.bf16.mxu0 0
      %2598 = vmatmul.mubr.bf16.gmra.mrb[0].mxu0 %v2307
      %v2599 = vpop.f32.mrb[0].mxu0
      %v2600 = vadd.f32 %v2078, %v2599
      %v2601 = vpop.f32.mrb[0].mxu0
      %v2602 = vpop.f32.mrb[0].mxu0
      %v2603 = vadd.f32 %v2081, %v2602
      %v2604 = vpop.f32.mrb[0].mxu0
      %2605 = vmatprep.mubr.bf16.mxu0 0
      %2606 = vmatmul.mubr.bf16.gmra.mrb[0].mxu0 %v2316
      %v2607 = vpop.f32.mrb[0].mxu0
      %v2608 = vadd.f32 %v2086, %v2607
      %v2609 = vpop.f32.mrb[0].mxu0
      %v2610 = vpop.f32.mrb[0].mxu0
      %v2611 = vadd.f32 %v2089, %v2610
      %v2612 = vpop.f32.mrb[0].mxu0
      %2613 = vdwg.mxu0
      %v2614 = vld [vmem:[#allocation2 + $0xc0] sm:$0x1f]
      %s2615 = scalar_lea.vmem %s3, 128
      %v2616 = vld [vmem:[%s2615] sm:$0xf]
      %v2617 = vld [vmem:[%s2615 + $0x4] sm:$0xf]
      %v2618 = vld [vmem:[%s2615 + $0x8] sm:$0xf]
      %v2619 = vld [vmem:[%s2615 + $0xc] sm:$0xf]
      %v2620 = vld [vmem:[%s2615 + $0x10] sm:$0xf]
      %v2621 = vld [vmem:[%s2615 + $0x14] sm:$0xf]
      %v2622 = vld [vmem:[%s2615 + $0x18] sm:$0xf]
      %v2623 = vld [vmem:[%s2615 + $0x1c] sm:$0xf]
      %v2624 = vld [vmem:[%s2615 + $0x20] sm:$0xf]
      %v2625 = vld [vmem:[%s2615 + $0x24] sm:$0xf]
      %v2626 = vld [vmem:[%s2615 + $0x28] sm:$0xf]
      %v2627 = vld [vmem:[%s2615 + $0x2c] sm:$0xf]
      %v2628 = vld [vmem:[%s2615 + $0x30] sm:$0xf]
      %v2629 = vld [vmem:[%s2615 + $0x34] sm:$0xf]
      %v2630 = vld [vmem:[%s2615 + $0x38] sm:$0xf]
      %v2631 = vld [vmem:[%s2615 + $0x3c] sm:$0xf]
      %vm2632 = vsmask.f32 3328
      %v2634 = vshrl.u32 %v1702, 16
      %v2636 = vrot.slane %v2634, 4
      %v2637 = vshll.u32 %v1702, 16
      %v2639 = vrot.slane %v2637, 5
      %v2640 = vor.u32 %v2636, %v2639
      %v2641 = vrot.slane %v2102, 4
      %v2642 = vrot.slane %v2105, 5
      %v2643 = vor.u32 %v2641, %v2642
      %v2644 = vsel %vm2632, %v2640, %v2643
      %v2645 = vrot.slane %v2111, 4
      %v2646 = vrot.slane %v2114, 5
      %v2647 = vor.u32 %v2645, %v2646
      %v2648 = vsel %vm2632, %v2643, %v2647
      %v2649 = vrot.slane %v2120, 4
      %v2650 = vrot.slane %v2123, 5
      %v2651 = vor.u32 %v2649, %v2650
      %v2652 = vsel %vm2632, %v2647, %v2651
      %v2653 = vrot.slane %v2129, 4
      %v2654 = vrot.slane %v2132, 5
      %v2655 = vor.u32 %v2653, %v2654
      %v2656 = vsel %vm2632, %v2651, %v2655
      %v2657 = vrot.slane %v2138, 4
      %v2658 = vrot.slane %v2141, 5
      %v2659 = vor.u32 %v2657, %v2658
      %v2660 = vsel %vm2632, %v2655, %v2659
      %v2661 = vrot.slane %v2147, 4
      %v2662 = vrot.slane %v2150, 5
      %v2663 = vor.u32 %v2661, %v2662
      %v2664 = vsel %vm2632, %v2659, %v2663
      %v2665 = vrot.slane %v2156, 4
      %v2666 = vrot.slane %v2159, 5
      %v2667 = vor.u32 %v2665, %v2666
      %v2668 = vsel %vm2632, %v2663, %v2667
      %v2669 = vrot.slane %v2165, 4
      %v2670 = vrot.slane %v2168, 5
      %v2671 = vor.u32 %v2669, %v2670
      %v2672 = vsel %vm2632, %v2667, %v2671
      %v2673 = vrot.slane %v2174, 4
      %v2674 = vrot.slane %v2177, 5
      %v2675 = vor.u32 %v2673, %v2674
      %v2676 = vsel %vm2632, %v2671, %v2675
      %v2677 = vrot.slane %v2183, 4
      %v2678 = vrot.slane %v2186, 5
      %v2679 = vor.u32 %v2677, %v2678
      %v2680 = vsel %vm2632, %v2675, %v2679
      %v2681 = vrot.slane %v2192, 4
      %v2682 = vrot.slane %v2195, 5
      %v2683 = vor.u32 %v2681, %v2682
      %v2684 = vsel %vm2632, %v2679, %v2683
      %v2685 = vrot.slane %v2201, 4
      %v2686 = vrot.slane %v2204, 5
      %v2687 = vor.u32 %v2685, %v2686
      %v2688 = vsel %vm2632, %v2683, %v2687
      %v2689 = vrot.slane %v2210, 4
      %v2690 = vrot.slane %v2213, 5
      %v2691 = vor.u32 %v2689, %v2690
      %v2692 = vsel %vm2632, %v2687, %v2691
      %v2693 = vrot.slane %v2219, 4
      %v2694 = vrot.slane %v2222, 5
      %v2695 = vor.u32 %v2693, %v2694
      %v2696 = vsel %vm2632, %v2691, %v2695
      %v2697 = vrot.slane %v2228, 4
      %v2698 = vrot.slane %v2231, 5
      %v2699 = vor.u32 %v2697, %v2698
      %v2700 = vsel %vm2632, %v2695, %v2699
      %v2701 = vrot.slane %v2237, 4
      %v2702 = vrot.slane %v2240, 5
      %v2703 = vor.u32 %v2701, %v2702
      %v2704 = vsel %vm2632, %v2699, %v2703
      %v2705 = vrot.slane %v2246, 4
      %v2706 = vrot.slane %v2249, 5
      %v2707 = vor.u32 %v2705, %v2706
      %v2708 = vsel %vm2632, %v2703, %v2707
      %v2709 = vrot.slane %v2255, 4
      %v2710 = vrot.slane %v2258, 5
      %v2711 = vor.u32 %v2709, %v2710
      %v2712 = vsel %vm2632, %v2707, %v2711
      %v2713 = vrot.slane %v2264, 4
      %v2714 = vrot.slane %v2267, 5
      %v2715 = vor.u32 %v2713, %v2714
      %v2716 = vsel %vm2632, %v2711, %v2715
      %v2717 = vrot.slane %v2273, 4
      %v2718 = vrot.slane %v2276, 5
      %v2719 = vor.u32 %v2717, %v2718
      %v2720 = vsel %vm2632, %v2715, %v2719
      %v2721 = vrot.slane %v2282, 4
      %v2722 = vrot.slane %v2285, 5
      %v2723 = vor.u32 %v2721, %v2722
      %v2724 = vsel %vm2632, %v2719, %v2723
      %v2725 = vrot.slane %v2291, 4
      %v2726 = vrot.slane %v2294, 5
      %v2727 = vor.u32 %v2725, %v2726
      %v2728 = vsel %vm2632, %v2723, %v2727
      %v2729 = vrot.slane %v2300, 4
      %v2730 = vrot.slane %v2303, 5
      %v2731 = vor.u32 %v2729, %v2730
      %v2732 = vsel %vm2632, %v2727, %v2731
      %v2734 = vshrl.u32 %v2614, 16
      %v2736 = vrot.slane %v2734, 4
      %v2737 = vshll.u32 %v2614, 16
      %v2739 = vrot.slane %v2737, 5
      %v2740 = vor.u32 %v2736, %v2739
      %v2741 = vsel %vm2632, %v2731, %v2740
      %v2782 = vunpack.c.l.b16 %v2616
      %v2783 = vunpack.c.l.b16 %v2617
      %v2784 = vunpack.c.l.b16 %v2618
      %v2785 = vunpack.c.l.b16 %v2619
      %v2786 = vunpack.c.l.b16 %v2620
      %v2787 = vunpack.c.l.b16 %v2621
      %v2788 = vunpack.c.l.b16 %v2622
      %v2789 = vunpack.c.l.b16 %v2623
      %v2790 = vunpack.c.l.b16 %v2624
      %v2791 = vunpack.c.l.b16 %v2625
      %v2792 = vunpack.c.l.b16 %v2626
      %v2793 = vunpack.c.l.b16 %v2627
      %v2794 = vunpack.c.l.b16 %v2628
      %v2795 = vunpack.c.l.b16 %v2629
      %v2796 = vunpack.c.l.b16 %v2630
      %v2797 = vunpack.c.l.b16 %v2631
      %v2798 = vpack.c.b16 %v2783, %v2782
      %v2799 = vpack.c.b16 %v2785, %v2784
      %v2800 = vpack.c.b16 %v2787, %v2786
      %v2801 = vpack.c.b16 %v2789, %v2788
      %v2802 = vpack.c.b16 %v2791, %v2790
      %v2803 = vpack.c.b16 %v2793, %v2792
      %v2804 = vpack.c.b16 %v2795, %v2794
      %v2805 = vpack.c.b16 %v2797, %v2796
      %2814 = vmatprep.subr.bf16.mxu0 0
      %2815 = vmatpush1.bf16.msra.mxu0 %v2798
      %2816 = vmatprep.subr.bf16.mxu0 0
      %2817 = vmatpush1.bf16.msra.mxu0 %v2799
      %2818 = vmatprep.subr.bf16.mxu0 0
      %2819 = vmatpush1.bf16.msra.mxu0 %v2800
      %2820 = vmatprep.subr.bf16.mxu0 0
      %2821 = vmatpush1.bf16.msra.mxu0 %v2801
      %2822 = vmatprep.subr.bf16.mxu0 0
      %2823 = vmatpush1.bf16.msra.mxu0 %v2802
      %2824 = vmatprep.subr.bf16.mxu0 0
      %2825 = vmatpush1.bf16.msra.mxu0 %v2803
      %2826 = vmatprep.subr.bf16.mxu0 0
      %2827 = vmatpush1.bf16.msra.mxu0 %v2804
      %2828 = vmatprep.subr.bf16.mxu0 0
      %2829 = vmatpush1.bf16.msra.mxu0 %v2805
      %2830 = vmatprep.subr.bf16.mxu0 0
      %2831 = vmatpush1.bf16.msra.mxu0 0
      %2832 = vmatprep.subr.bf16.mxu0 0
      %2833 = vmatpush1.bf16.msra.mxu0 0
      %2834 = vmatprep.subr.bf16.mxu0 0
      %2835 = vmatpush1.bf16.msra.mxu0 0
      %2836 = vmatprep.subr.bf16.mxu0 0
      %2837 = vmatpush1.bf16.msra.mxu0 0
      %2838 = vmatprep.subr.bf16.mxu0 0
      %2839 = vmatpush1.bf16.msra.mxu0 0
      %2840 = vmatprep.subr.bf16.mxu0 0
      %2841 = vmatpush1.bf16.msra.mxu0 0
      %2842 = vmatprep.subr.bf16.mxu0 0
      %2843 = vmatpush1.bf16.msra.mxu0 0
      %2844 = vmatprep.subr.bf16.mxu0 0
      %2845 = vmatpush1.bf16.msra.mxu0 0
      %2846 = vmatprep.mubr.bf16.mxu0 0
      %2847 = vmatmul.mubr.bf16.gmra.mrb[0].mxu0 %v2644
      %v2848 = vpop.f32.mrb[0].mxu0
      %v2849 = vadd.f32 0.0, %v2848
      %v2850 = vpop.f32.mrb[0].mxu0
      %v2851 = vpop.f32.mrb[0].mxu0
      %v2852 = vadd.f32 0.0, %v2851
      %v2853 = vpop.f32.mrb[0].mxu0
      %2854 = vmatprep.mubr.bf16.mxu0 0
      %2855 = vmatmul.mubr.bf16.gmra.mrb[0].mxu0 %v2648
      %v2856 = vpop.f32.mrb[0].mxu0
      %v2857 = vadd.f32 0.0, %v2856
      %v2858 = vpop.f32.mrb[0].mxu0
      %v2859 = vpop.f32.mrb[0].mxu0
      %v2860 = vadd.f32 0.0, %v2859
      %v2861 = vpop.f32.mrb[0].mxu0
      %2862 = vmatprep.mubr.bf16.mxu0 0
      %2863 = vmatmul.mubr.bf16.gmra.mrb[0].mxu0 %v2652
      %v2864 = vpop.f32.mrb[0].mxu0
      %v2865 = vadd.f32 0.0, %v2864
      %v2866 = vpop.f32.mrb[0].mxu0
      %v2867 = vpop.f32.mrb[0].mxu0
      %v2868 = vadd.f32 0.0, %v2867
      %v2869 = vpop.f32.mrb[0].mxu0
      %2870 = vmatprep.mubr.bf16.mxu0 0
      %2871 = vmatmul.mubr.bf16.gmra.mrb[0].mxu0 %v2656
      %v2872 = vpop.f32.mrb[0].mxu0
      %v2873 = vadd.f32 0.0, %v2872
      %v2874 = vpop.f32.mrb[0].mxu0
      %v2875 = vpop.f32.mrb[0].mxu0
      %v2876 = vadd.f32 0.0, %v2875
      %v2877 = vpop.f32.mrb[0].mxu0
      %2878 = vmatprep.mubr.bf16.mxu0 0
      %2879 = vmatmul.mubr.bf16.gmra.mrb[0].mxu0 %v2660
      %v2880 = vpop.f32.mrb[0].mxu0
      %v2881 = vadd.f32 0.0, %v2880
      %v2882 = vpop.f32.mrb[0].mxu0
      %v2883 = vpop.f32.mrb[0].mxu0
      %v2884 = vadd.f32 0.0, %v2883
      %v2885 = vpop.f32.mrb[0].mxu0
      %2886 = vmatprep.mubr.bf16.mxu0 0
      %2887 = vmatmul.mubr.bf16.gmra.mrb[0].mxu0 %v2664
      %v2888 = vpop.f32.mrb[0].mxu0
      %v2889 = vadd.f32 0.0, %v2888
      %v2890 = vpop.f32.mrb[0].mxu0
      %v2891 = vpop.f32.mrb[0].mxu0
      %v2892 = vadd.f32 0.0, %v2891
      %v2893 = vpop.f32.mrb[0].mxu0
      %2894 = vmatprep.mubr.bf16.mxu0 0
      %2895 = vmatmul.mubr.bf16.gmra.mrb[0].mxu0 %v2668
      %v2896 = vpop.f32.mrb[0].mxu0
      %v2897 = vadd.f32 0.0, %v2896
      %v2898 = vpop.f32.mrb[0].mxu0
      %v2899 = vpop.f32.mrb[0].mxu0
      %v2900 = vadd.f32 0.0, %v2899
      %v2901 = vpop.f32.mrb[0].mxu0
      %2902 = vmatprep.mubr.bf16.mxu0 0
      %2903 = vmatmul.mubr.bf16.gmra.mrb[0].mxu0 %v2672
      %v2904 = vpop.f32.mrb[0].mxu0
      %v2905 = vadd.f32 0.0, %v2904
      %v2906 = vpop.f32.mrb[0].mxu0
      %v2907 = vpop.f32.mrb[0].mxu0
      %v2908 = vadd.f32 0.0, %v2907
      %v2909 = vpop.f32.mrb[0].mxu0
      %2910 = vmatprep.mubr.bf16.mxu0 0
      %2911 = vmatmul.mubr.bf16.gmra.mrb[0].mxu0 %v2676
      %v2912 = vpop.f32.mrb[0].mxu0
      %v2913 = vadd.f32 0.0, %v2912
      %v2914 = vpop.f32.mrb[0].mxu0
      %v2915 = vpop.f32.mrb[0].mxu0
      %v2916 = vadd.f32 0.0, %v2915
      %v2917 = vpop.f32.mrb[0].mxu0
      %2918 = vmatprep.mubr.bf16.mxu0 0
      %2919 = vmatmul.mubr.bf16.gmra.mrb[0].mxu0 %v2680
      %v2920 = vpop.f32.mrb[0].mxu0
      %v2921 = vadd.f32 0.0, %v2920
      %v2922 = vpop.f32.mrb[0].mxu0
      %v2923 = vpop.f32.mrb[0].mxu0
      %v2924 = vadd.f32 0.0, %v2923
      %v2925 = vpop.f32.mrb[0].mxu0
      %2926 = vmatprep.mubr.bf16.mxu0 0
      %2927 = vmatmul.mubr.bf16.gmra.mrb[0].mxu0 %v2684
      %v2928 = vpop.f32.mrb[0].mxu0
      %v2929 = vadd.f32 0.0, %v2928
      %v2930 = vpop.f32.mrb[0].mxu0
      %v2931 = vpop.f32.mrb[0].mxu0
      %v2932 = vadd.f32 0.0, %v2931
      %v2933 = vpop.f32.mrb[0].mxu0
      %2934 = vmatprep.mubr.bf16.mxu0 0
      %2935 = vmatmul.mubr.bf16.gmra.mrb[0].mxu0 %v2688
      %v2936 = vpop.f32.mrb[0].mxu0
      %v2937 = vadd.f32 0.0, %v2936
      %v2938 = vpop.f32.mrb[0].mxu0
      %v2939 = vpop.f32.mrb[0].mxu0
      %v2940 = vadd.f32 0.0, %v2939
      %v2941 = vpop.f32.mrb[0].mxu0
      %2942 = vmatprep.mubr.bf16.mxu0 0
      %2943 = vmatmul.mubr.bf16.gmra.mrb[0].mxu0 %v2692
      %v2944 = vpop.f32.mrb[0].mxu0
      %v2945 = vadd.f32 0.0, %v2944
      %v2946 = vpop.f32.mrb[0].mxu0
      %v2947 = vpop.f32.mrb[0].mxu0
      %v2948 = vadd.f32 0.0, %v2947
      %v2949 = vpop.f32.mrb[0].mxu0
      %2950 = vmatprep.mubr.bf16.mxu0 0
      %2951 = vmatmul.mubr.bf16.gmra.mrb[0].mxu0 %v2696
      %v2952 = vpop.f32.mrb[0].mxu0
      %v2953 = vadd.f32 0.0, %v2952
      %v2954 = vpop.f32.mrb[0].mxu0
      %v2955 = vpop.f32.mrb[0].mxu0
      %v2956 = vadd.f32 0.0, %v2955
      %v2957 = vpop.f32.mrb[0].mxu0
      %2958 = vmatprep.mubr.bf16.mxu0 0
      %2959 = vmatmul.mubr.bf16.gmra.mrb[0].mxu0 %v2700
      %v2960 = vpop.f32.mrb[0].mxu0
      %v2961 = vadd.f32 0.0, %v2960
      %v2962 = vpop.f32.mrb[0].mxu0
      %v2963 = vpop.f32.mrb[0].mxu0
      %v2964 = vadd.f32 0.0, %v2963
      %v2965 = vpop.f32.mrb[0].mxu0
      %2966 = vmatprep.mubr.bf16.mxu0 0
      %2967 = vmatmul.mubr.bf16.gmra.mrb[0].mxu0 %v2704
      %v2968 = vpop.f32.mrb[0].mxu0
      %v2969 = vadd.f32 0.0, %v2968
      %v2970 = vpop.f32.mrb[0].mxu0
      %v2971 = vpop.f32.mrb[0].mxu0
      %v2972 = vadd.f32 0.0, %v2971
      %v2973 = vpop.f32.mrb[0].mxu0
      %2974 = vmatprep.mubr.bf16.mxu0 0
      %2975 = vmatmul.mubr.bf16.gmra.mrb[0].mxu0 %v2708
      %v2976 = vpop.f32.mrb[0].mxu0
      %v2977 = vadd.f32 0.0, %v2976
      %v2978 = vpop.f32.mrb[0].mxu0
      %v2979 = vpop.f32.mrb[0].mxu0
      %v2980 = vadd.f32 0.0, %v2979
      %v2981 = vpop.f32.mrb[0].mxu0
      %2982 = vmatprep.mubr.bf16.mxu0 0
      %2983 = vmatmul.mubr.bf16.gmra.mrb[0].mxu0 %v2712
      %v2984 = vpop.f32.mrb[0].mxu0
      %v2985 = vadd.f32 0.0, %v2984
      %v2986 = vpop.f32.mrb[0].mxu0
      %v2987 = vpop.f32.mrb[0].mxu0
      %v2988 = vadd.f32 0.0, %v2987
      %v2989 = vpop.f32.mrb[0].mxu0
      %2990 = vmatprep.mubr.bf16.mxu0 0
      %2991 = vmatmul.mubr.bf16.gmra.mrb[0].mxu0 %v2716
      %v2992 = vpop.f32.mrb[0].mxu0
      %v2993 = vadd.f32 0.0, %v2992
      %v2994 = vpop.f32.mrb[0].mxu0
      %v2995 = vpop.f32.mrb[0].mxu0
      %v2996 = vadd.f32 0.0, %v2995
      %v2997 = vpop.f32.mrb[0].mxu0
      %2998 = vmatprep.mubr.bf16.mxu0 0
      %2999 = vmatmul.mubr.bf16.gmra.mrb[0].mxu0 %v2720
      %v3000 = vpop.f32.mrb[0].mxu0
      %v3001 = vadd.f32 0.0, %v3000
      %v3002 = vpop.f32.mrb[0].mxu0
      %v3003 = vpop.f32.mrb[0].mxu0
      %v3004 = vadd.f32 0.0, %v3003
      %v3005 = vpop.f32.mrb[0].mxu0
      %3006 = vmatprep.mubr.bf16.mxu0 0
      %3007 = vmatmul.mubr.bf16.gmra.mrb[0].mxu0 %v2724
      %v3008 = vpop.f32.mrb[0].mxu0
      %v3009 = vadd.f32 0.0, %v3008
      %v3010 = vpop.f32.mrb[0].mxu0
      %v3011 = vpop.f32.mrb[0].mxu0
      %v3012 = vadd.f32 0.0, %v3011
      %v3013 = vpop.f32.mrb[0].mxu0
      %3014 = vmatprep.mubr.bf16.mxu0 0
      %3015 = vmatmul.mubr.bf16.gmra.mrb[0].mxu0 %v2728
      %v3016 = vpop.f32.mrb[0].mxu0
      %v3017 = vadd.f32 0.0, %v3016
      %v3018 = vpop.f32.mrb[0].mxu0
      %v3019 = vpop.f32.mrb[0].mxu0
      %v3020 = vadd.f32 0.0, %v3019
      %v3021 = vpop.f32.mrb[0].mxu0
      %3022 = vmatprep.mubr.bf16.mxu0 0
      %3023 = vmatmul.mubr.bf16.gmra.mrb[0].mxu0 %v2732
      %v3024 = vpop.f32.mrb[0].mxu0
      %v3025 = vadd.f32 0.0, %v3024
      %v3026 = vpop.f32.mrb[0].mxu0
      %v3027 = vpop.f32.mrb[0].mxu0
      %v3028 = vadd.f32 0.0, %v3027
      %v3029 = vpop.f32.mrb[0].mxu0
      %3030 = vmatprep.mubr.bf16.mxu0 0
      %3031 = vmatmul.mubr.bf16.gmra.mrb[0].mxu0 %v2741
      %v3032 = vpop.f32.mrb[0].mxu0
      %v3033 = vadd.f32 0.0, %v3032
      %v3034 = vpop.f32.mrb[0].mxu0
      %v3035 = vpop.f32.mrb[0].mxu0
      %v3036 = vadd.f32 0.0, %v3035
      %v3037 = vpop.f32.mrb[0].mxu0
      %3038 = vdwg.mxu0
      %v3039 = vadd.f32 %v2424, %v2849
      %v3040 = vadd.f32 %v2427, %v2852
      %v3041 = vadd.f32 %v2432, %v2857
      %v3042 = vadd.f32 %v2435, %v2860
      %v3043 = vadd.f32 %v2440, %v2865
      %v3044 = vadd.f32 %v2443, %v2868
      %v3045 = vadd.f32 %v2448, %v2873
      %v3046 = vadd.f32 %v2451, %v2876
      %v3047 = vadd.f32 %v2456, %v2881
      %v3048 = vadd.f32 %v2459, %v2884
      %v3049 = vadd.f32 %v2464, %v2889
      %v3050 = vadd.f32 %v2467, %v2892
      %v3051 = vadd.f32 %v2472, %v2897
      %v3052 = vadd.f32 %v2475, %v2900
      %v3053 = vadd.f32 %v2480, %v2905
      %v3054 = vadd.f32 %v2483, %v2908
      %v3055 = vadd.f32 %v2488, %v2913
      %v3056 = vadd.f32 %v2491, %v2916
      %v3057 = vadd.f32 %v2496, %v2921
      %v3058 = vadd.f32 %v2499, %v2924
      %v3059 = vadd.f32 %v2504, %v2929
      %v3060 = vadd.f32 %v2507, %v2932
      %v3061 = vadd.f32 %v2512, %v2937
      %v3062 = vadd.f32 %v2515, %v2940
      %v3063 = vadd.f32 %v2520, %v2945
      %v3064 = vadd.f32 %v2523, %v2948
      %v3065 = vadd.f32 %v2528, %v2953
      %v3066 = vadd.f32 %v2531, %v2956
      %v3067 = vadd.f32 %v2536, %v2961
      %v3068 = vadd.f32 %v2539, %v2964
      %v3069 = vadd.f32 %v2544, %v2969
      %v3070 = vadd.f32 %v2547, %v2972
      %v3071 = vadd.f32 %v2552, %v2977
      %v3072 = vadd.f32 %v2555, %v2980
      %v3073 = vadd.f32 %v2560, %v2985
      %v3074 = vadd.f32 %v2563, %v2988
      %v3075 = vadd.f32 %v2568, %v2993
      %v3076 = vadd.f32 %v2571, %v2996
      %v3077 = vadd.f32 %v2576, %v3001
      %v3078 = vadd.f32 %v2579, %v3004
      %v3079 = vadd.f32 %v2584, %v3009
      %v3080 = vadd.f32 %v2587, %v3012
      %v3081 = vadd.f32 %v2592, %v3017
      %v3082 = vadd.f32 %v2595, %v3020
      %v3083 = vadd.f32 %v2600, %v3025
      %v3084 = vadd.f32 %v2603, %v3028
      %v3085 = vadd.f32 %v2608, %v3033
      %v3086 = vadd.f32 %v2611, %v3036
      %v3087 = vld [vmem:[#allocation2 + $0x8] sm:$0x80]
      %v3088 = vld [vmem:[#allocation2 + $0x10] sm:$0xff]
      %v3089 = vld [vmem:[#allocation2 + $0x18] sm:$0xff]
      %v3090 = vld [vmem:[#allocation2 + $0x20] sm:$0xff]
      %v3091 = vld [vmem:[#allocation2 + $0x28] sm:$0xff]
      %v3092 = vld [vmem:[#allocation2 + $0x30] sm:$0xff]
      %v3093 = vld [vmem:[#allocation2 + $0x38] sm:$0xff]
      %v3094 = vld [vmem:[#allocation2 + $0x40] sm:$0xff]
      %v3095 = vld [vmem:[#allocation2 + $0x48] sm:$0xff]
      %v3096 = vld [vmem:[#allocation2 + $0x50] sm:$0xff]
      %v3097 = vld [vmem:[#allocation2 + $0x58] sm:$0xff]
      %v3098 = vld [vmem:[#allocation2 + $0x60] sm:$0xff]
      %v3099 = vld [vmem:[#allocation2 + $0x68] sm:$0xff]
      %v3100 = vld [vmem:[#allocation2 + $0x70] sm:$0xff]
      %v3101 = vld [vmem:[#allocation2 + $0x78] sm:$0xff]
      %v3102 = vld [vmem:[#allocation2 + $0x80] sm:$0xff]
      %v3103 = vld [vmem:[#allocation2 + $0x88] sm:$0xff]
      %v3104 = vld [vmem:[#allocation2 + $0x90] sm:$0xff]
      %v3105 = vld [vmem:[#allocation2 + $0x98] sm:$0xff]
      %v3106 = vld [vmem:[#allocation2 + $0xa0] sm:$0xff]
      %v3107 = vld [vmem:[#allocation2 + $0xa8] sm:$0xff]
      %v3108 = vld [vmem:[#allocation2 + $0xb0] sm:$0xff]
      %v3109 = vld [vmem:[#allocation2 + $0xb8] sm:$0xff]
      %v3110 = vld [vmem:[#allocation2 + $0xc0] sm:$0xff]
      %v3111 = vld [vmem:[#allocation2 + $0xc8] sm:$0xff]
      %s3112 = scalar_lea.vmem %s3, 192
      %v3113 = vld [vmem:[%s3112] sm:$0xf]
      %v3114 = vld [vmem:[%s3112 + $0x4] sm:$0xf]
      %v3115 = vld [vmem:[%s3112 + $0x8] sm:$0xf]
      %v3116 = vld [vmem:[%s3112 + $0xc] sm:$0xf]
      %v3117 = vld [vmem:[%s3112 + $0x10] sm:$0xf]
      %v3118 = vld [vmem:[%s3112 + $0x14] sm:$0xf]
      %v3119 = vld [vmem:[%s3112 + $0x18] sm:$0xf]
      %v3120 = vld [vmem:[%s3112 + $0x1c] sm:$0xf]
      %v3121 = vld [vmem:[%s3112 + $0x20] sm:$0xf]
      %v3122 = vld [vmem:[%s3112 + $0x24] sm:$0xf]
      %v3123 = vld [vmem:[%s3112 + $0x28] sm:$0xf]
      %v3124 = vld [vmem:[%s3112 + $0x2c] sm:$0xf]
      %v3125 = vld [vmem:[%s3112 + $0x30] sm:$0xf]
      %v3126 = vld [vmem:[%s3112 + $0x34] sm:$0xf]
      %v3127 = vld [vmem:[%s3112 + $0x38] sm:$0xf]
      %v3128 = vld [vmem:[%s3112 + $0x3c] sm:$0xf]
      %vm3129 = vsmask.f32 256
      %v3131 = vshrl.u32 %v3087, 16
      %v3133 = vrot.slane %v3131, 7
      %v3135 = vshrl.u32 %v3088, 16
      %v3137 = vrot.slane %v3135, 7
      %v3138 = vshll.u32 %v3088, 16
      %v3140 = vor.u32 %v3137, %v3138
      %v3141 = vsel %vm3129, %v3133, %v3140
      %v3143 = vshrl.u32 %v3089, 16
      %v3145 = vrot.slane %v3143, 7
      %v3146 = vshll.u32 %v3089, 16
      %v3148 = vor.u32 %v3145, %v3146
      %v3149 = vsel %vm3129, %v3137, %v3148
      %v3151 = vshrl.u32 %v3090, 16
      %v3153 = vrot.slane %v3151, 7
      %v3154 = vshll.u32 %v3090, 16
      %v3156 = vor.u32 %v3153, %v3154
      %v3157 = vsel %vm3129, %v3145, %v3156
      %v3159 = vshrl.u32 %v3091, 16
      %v3161 = vrot.slane %v3159, 7
      %v3162 = vshll.u32 %v3091, 16
      %v3164 = vor.u32 %v3161, %v3162
      %v3165 = vsel %vm3129, %v3153, %v3164
      %v3167 = vshrl.u32 %v3092, 16
      %v3169 = vrot.slane %v3167, 7
      %v3170 = vshll.u32 %v3092, 16
      %v3172 = vor.u32 %v3169, %v3170
      %v3173 = vsel %vm3129, %v3161, %v3172
      %v3175 = vshrl.u32 %v3093, 16
      %v3177 = vrot.slane %v3175, 7
      %v3178 = vshll.u32 %v3093, 16
      %v3180 = vor.u32 %v3177, %v3178
      %v3181 = vsel %vm3129, %v3169, %v3180
      %v3183 = vshrl.u32 %v3094, 16
      %v3185 = vrot.slane %v3183, 7
      %v3186 = vshll.u32 %v3094, 16
      %v3188 = vor.u32 %v3185, %v3186
      %v3189 = vsel %vm3129, %v3177, %v3188
      %v3191 = vshrl.u32 %v3095, 16
      %v3193 = vrot.slane %v3191, 7
      %v3194 = vshll.u32 %v3095, 16
      %v3196 = vor.u32 %v3193, %v3194
      %v3197 = vsel %vm3129, %v3185, %v3196
      %v3199 = vshrl.u32 %v3096, 16
      %v3201 = vrot.slane %v3199, 7
      %v3202 = vshll.u32 %v3096, 16
      %v3204 = vor.u32 %v3201, %v3202
      %v3205 = vsel %vm3129, %v3193, %v3204
      %v3207 = vshrl.u32 %v3097, 16
      %v3209 = vrot.slane %v3207, 7
      %v3210 = vshll.u32 %v3097, 16
      %v3212 = vor.u32 %v3209, %v3210
      %v3213 = vsel %vm3129, %v3201, %v3212
      %v3215 = vshrl.u32 %v3098, 16
      %v3217 = vrot.slane %v3215, 7
      %v3218 = vshll.u32 %v3098, 16
      %v3220 = vor.u32 %v3217, %v3218
      %v3221 = vsel %vm3129, %v3209, %v3220
      %v3223 = vshrl.u32 %v3099, 16
      %v3225 = vrot.slane %v3223, 7
      %v3226 = vshll.u32 %v3099, 16
      %v3228 = vor.u32 %v3225, %v3226
      %v3229 = vsel %vm3129, %v3217, %v3228
      %v3231 = vshrl.u32 %v3100, 16
      %v3233 = vrot.slane %v3231, 7
      %v3234 = vshll.u32 %v3100, 16
      %v3236 = vor.u32 %v3233, %v3234
      %v3237 = vsel %vm3129, %v3225, %v3236
      %v3239 = vshrl.u32 %v3101, 16
      %v3241 = vrot.slane %v3239, 7
      %v3242 = vshll.u32 %v3101, 16
      %v3244 = vor.u32 %v3241, %v3242
      %v3245 = vsel %vm3129, %v3233, %v3244
      %v3247 = vshrl.u32 %v3102, 16
      %v3249 = vrot.slane %v3247, 7
      %v3250 = vshll.u32 %v3102, 16
      %v3252 = vor.u32 %v3249, %v3250
      %v3253 = vsel %vm3129, %v3241, %v3252
      %v3255 = vshrl.u32 %v3103, 16
      %v3257 = vrot.slane %v3255, 7
      %v3258 = vshll.u32 %v3103, 16
      %v3260 = vor.u32 %v3257, %v3258
      %v3261 = vsel %vm3129, %v3249, %v3260
      %v3263 = vshrl.u32 %v3104, 16
      %v3265 = vrot.slane %v3263, 7
      %v3266 = vshll.u32 %v3104, 16
      %v3268 = vor.u32 %v3265, %v3266
      %v3269 = vsel %vm3129, %v3257, %v3268
      %v3271 = vshrl.u32 %v3105, 16
      %v3273 = vrot.slane %v3271, 7
      %v3274 = vshll.u32 %v3105, 16
      %v3276 = vor.u32 %v3273, %v3274
      %v3277 = vsel %vm3129, %v3265, %v3276
      %v3279 = vshrl.u32 %v3106, 16
      %v3281 = vrot.slane %v3279, 7
      %v3282 = vshll.u32 %v3106, 16
      %v3284 = vor.u32 %v3281, %v3282
      %v3285 = vsel %vm3129, %v3273, %v3284
      %v3287 = vshrl.u32 %v3107, 16
      %v3289 = vrot.slane %v3287, 7
      %v3290 = vshll.u32 %v3107, 16
      %v3292 = vor.u32 %v3289, %v3290
      %v3293 = vsel %vm3129, %v3281, %v3292
      %v3295 = vshrl.u32 %v3108, 16
      %v3297 = vrot.slane %v3295, 7
      %v3298 = vshll.u32 %v3108, 16
      %v3300 = vor.u32 %v3297, %v3298
      %v3301 = vsel %vm3129, %v3289, %v3300
      %v3303 = vshrl.u32 %v3109, 16
      %v3305 = vrot.slane %v3303, 7
      %v3306 = vshll.u32 %v3109, 16
      %v3308 = vor.u32 %v3305, %v3306
      %v3309 = vsel %vm3129, %v3297, %v3308
      %v3311 = vshrl.u32 %v3110, 16
      %v3313 = vrot.slane %v3311, 7
      %v3314 = vshll.u32 %v3110, 16
      %v3316 = vor.u32 %v3313, %v3314
      %v3317 = vsel %vm3129, %v3305, %v3316
      %v3319 = vshrl.u32 %v3111, 16
      %v3321 = vrot.slane %v3319, 7
      %v3322 = vshll.u32 %v3111, 16
      %v3324 = vor.u32 %v3321, %v3322
      %v3325 = vsel %vm3129, %v3313, %v3324
      %v3366 = vunpack.c.l.b16 %v3113
      %v3367 = vunpack.c.l.b16 %v3114
      %v3368 = vunpack.c.l.b16 %v3115
      %v3369 = vunpack.c.l.b16 %v3116
      %v3370 = vunpack.c.l.b16 %v3117
      %v3371 = vunpack.c.l.b16 %v3118
      %v3372 = vunpack.c.l.b16 %v3119
      %v3373 = vunpack.c.l.b16 %v3120
      %v3374 = vunpack.c.l.b16 %v3121
      %v3375 = vunpack.c.l.b16 %v3122
      %v3376 = vunpack.c.l.b16 %v3123
      %v3377 = vunpack.c.l.b16 %v3124
      %v3378 = vunpack.c.l.b16 %v3125
      %v3379 = vunpack.c.l.b16 %v3126
      %v3380 = vunpack.c.l.b16 %v3127
      %v3381 = vunpack.c.l.b16 %v3128
      %v3382 = vpack.c.b16 %v3367, %v3366
      %v3383 = vpack.c.b16 %v3369, %v3368
      %v3384 = vpack.c.b16 %v3371, %v3370
      %v3385 = vpack.c.b16 %v3373, %v3372
      %v3386 = vpack.c.b16 %v3375, %v3374
      %v3387 = vpack.c.b16 %v3377, %v3376
      %v3388 = vpack.c.b16 %v3379, %v3378
      %v3389 = vpack.c.b16 %v3381, %v3380
      %3398 = vmatprep.subr.bf16.mxu0 0
      %3399 = vmatpush1.bf16.msra.mxu0 %v3382
      %3400 = vmatprep.subr.bf16.mxu0 0
      %3401 = vmatpush1.bf16.msra.mxu0 %v3383
      %3402 = vmatprep.subr.bf16.mxu0 0
      %3403 = vmatpush1.bf16.msra.mxu0 %v3384
      %3404 = vmatprep.subr.bf16.mxu0 0
      %3405 = vmatpush1.bf16.msra.mxu0 %v3385
      %3406 = vmatprep.subr.bf16.mxu0 0
      %3407 = vmatpush1.bf16.msra.mxu0 %v3386
      %3408 = vmatprep.subr.bf16.mxu0 0
      %3409 = vmatpush1.bf16.msra.mxu0 %v3387
      %3410 = vmatprep.subr.bf16.mxu0 0
      %3411 = vmatpush1.bf16.msra.mxu0 %v3388
      %3412 = vmatprep.subr.bf16.mxu0 0
      %3413 = vmatpush1.bf16.msra.mxu0 %v3389
      %3414 = vmatprep.subr.bf16.mxu0 0
      %3415 = vmatpush1.bf16.msra.mxu0 0
      %3416 = vmatprep.subr.bf16.mxu0 0
      %3417 = vmatpush1.bf16.msra.mxu0 0
      %3418 = vmatprep.subr.bf16.mxu0 0
      %3419 = vmatpush1.bf16.msra.mxu0 0
      %3420 = vmatprep.subr.bf16.mxu0 0
      %3421 = vmatpush1.bf16.msra.mxu0 0
      %3422 = vmatprep.subr.bf16.mxu0 0
      %3423 = vmatpush1.bf16.msra.mxu0 0
      %3424 = vmatprep.subr.bf16.mxu0 0
      %3425 = vmatpush1.bf16.msra.mxu0 0
      %3426 = vmatprep.subr.bf16.mxu0 0
      %3427 = vmatpush1.bf16.msra.mxu0 0
      %3428 = vmatprep.subr.bf16.mxu0 0
      %3429 = vmatpush1.bf16.msra.mxu0 0
      %3430 = vmatprep.mubr.bf16.mxu0 0
      %3431 = vmatmul.mubr.bf16.gmra.mrb[0].mxu0 %v3141
      %v3432 = vpop.f32.mrb[0].mxu0
      %v3433 = vadd.f32 0.0, %v3432
      %v3434 = vpop.f32.mrb[0].mxu0
      %v3435 = vpop.f32.mrb[0].mxu0
      %v3436 = vadd.f32 0.0, %v3435
      %v3437 = vpop.f32.mrb[0].mxu0
      %3438 = vmatprep.mubr.bf16.mxu0 0
      %3439 = vmatmul.mubr.bf16.gmra.mrb[0].mxu0 %v3149
      %v3440 = vpop.f32.mrb[0].mxu0
      %v3441 = vadd.f32 0.0, %v3440
      %v3442 = vpop.f32.mrb[0].mxu0
      %v3443 = vpop.f32.mrb[0].mxu0
      %v3444 = vadd.f32 0.0, %v3443
      %v3445 = vpop.f32.mrb[0].mxu0
      %3446 = vmatprep.mubr.bf16.mxu0 0
      %3447 = vmatmul.mubr.bf16.gmra.mrb[0].mxu0 %v3157
      %v3448 = vpop.f32.mrb[0].mxu0
      %v3449 = vadd.f32 0.0, %v3448
      %v3450 = vpop.f32.mrb[0].mxu0
      %v3451 = vpop.f32.mrb[0].mxu0
      %v3452 = vadd.f32 0.0, %v3451
      %v3453 = vpop.f32.mrb[0].mxu0
      %3454 = vmatprep.mubr.bf16.mxu0 0
      %3455 = vmatmul.mubr.bf16.gmra.mrb[0].mxu0 %v3165
      %v3456 = vpop.f32.mrb[0].mxu0
      %v3457 = vadd.f32 0.0, %v3456
      %v3458 = vpop.f32.mrb[0].mxu0
      %v3459 = vpop.f32.mrb[0].mxu0
      %v3460 = vadd.f32 0.0, %v3459
      %v3461 = vpop.f32.mrb[0].mxu0
      %3462 = vmatprep.mubr.bf16.mxu0 0
      %3463 = vmatmul.mubr.bf16.gmra.mrb[0].mxu0 %v3173
      %v3464 = vpop.f32.mrb[0].mxu0
      %v3465 = vadd.f32 0.0, %v3464
      %v3466 = vpop.f32.mrb[0].mxu0
      %v3467 = vpop.f32.mrb[0].mxu0
      %v3468 = vadd.f32 0.0, %v3467
      %v3469 = vpop.f32.mrb[0].mxu0
      %3470 = vmatprep.mubr.bf16.mxu0 0
      %3471 = vmatmul.mubr.bf16.gmra.mrb[0].mxu0 %v3181
      %v3472 = vpop.f32.mrb[0].mxu0
      %v3473 = vadd.f32 0.0, %v3472
      %v3474 = vpop.f32.mrb[0].mxu0
      %v3475 = vpop.f32.mrb[0].mxu0
      %v3476 = vadd.f32 0.0, %v3475
      %v3477 = vpop.f32.mrb[0].mxu0
      %3478 = vmatprep.mubr.bf16.mxu0 0
      %3479 = vmatmul.mubr.bf16.gmra.mrb[0].mxu0 %v3189
      %v3480 = vpop.f32.mrb[0].mxu0
      %v3481 = vadd.f32 0.0, %v3480
      %v3482 = vpop.f32.mrb[0].mxu0
      %v3483 = vpop.f32.mrb[0].mxu0
      %v3484 = vadd.f32 0.0, %v3483
      %v3485 = vpop.f32.mrb[0].mxu0
      %3486 = vmatprep.mubr.bf16.mxu0 0
      %3487 = vmatmul.mubr.bf16.gmra.mrb[0].mxu0 %v3197
      %v3488 = vpop.f32.mrb[0].mxu0
      %v3489 = vadd.f32 0.0, %v3488
      %v3490 = vpop.f32.mrb[0].mxu0
      %v3491 = vpop.f32.mrb[0].mxu0
      %v3492 = vadd.f32 0.0, %v3491
      %v3493 = vpop.f32.mrb[0].mxu0
      %3494 = vmatprep.mubr.bf16.mxu0 0
      %3495 = vmatmul.mubr.bf16.gmra.mrb[0].mxu0 %v3205
      %v3496 = vpop.f32.mrb[0].mxu0
      %v3497 = vadd.f32 0.0, %v3496
      %v3498 = vpop.f32.mrb[0].mxu0
      %v3499 = vpop.f32.mrb[0].mxu0
      %v3500 = vadd.f32 0.0, %v3499
      %v3501 = vpop.f32.mrb[0].mxu0
      %3502 = vmatprep.mubr.bf16.mxu0 0
      %3503 = vmatmul.mubr.bf16.gmra.mrb[0].mxu0 %v3213
      %v3504 = vpop.f32.mrb[0].mxu0
      %v3505 = vadd.f32 0.0, %v3504
      %v3506 = vpop.f32.mrb[0].mxu0
      %v3507 = vpop.f32.mrb[0].mxu0
      %v3508 = vadd.f32 0.0, %v3507
      %v3509 = vpop.f32.mrb[0].mxu0
      %3510 = vmatprep.mubr.bf16.mxu0 0
      %3511 = vmatmul.mubr.bf16.gmra.mrb[0].mxu0 %v3221
      %v3512 = vpop.f32.mrb[0].mxu0
      %v3513 = vadd.f32 0.0, %v3512
      %v3514 = vpop.f32.mrb[0].mxu0
      %v3515 = vpop.f32.mrb[0].mxu0
      %v3516 = vadd.f32 0.0, %v3515
      %v3517 = vpop.f32.mrb[0].mxu0
      %3518 = vmatprep.mubr.bf16.mxu0 0
      %3519 = vmatmul.mubr.bf16.gmra.mrb[0].mxu0 %v3229
      %v3520 = vpop.f32.mrb[0].mxu0
      %v3521 = vadd.f32 0.0, %v3520
      %v3522 = vpop.f32.mrb[0].mxu0
      %v3523 = vpop.f32.mrb[0].mxu0
      %v3524 = vadd.f32 0.0, %v3523
      %v3525 = vpop.f32.mrb[0].mxu0
      %3526 = vmatprep.mubr.bf16.mxu0 0
      %3527 = vmatmul.mubr.bf16.gmra.mrb[0].mxu0 %v3237
      %v3528 = vpop.f32.mrb[0].mxu0
      %v3529 = vadd.f32 0.0, %v3528
      %v3530 = vpop.f32.mrb[0].mxu0
      %v3531 = vpop.f32.mrb[0].mxu0
      %v3532 = vadd.f32 0.0, %v3531
      %v3533 = vpop.f32.mrb[0].mxu0
      %3534 = vmatprep.mubr.bf16.mxu0 0
      %3535 = vmatmul.mubr.bf16.gmra.mrb[0].mxu0 %v3245
      %v3536 = vpop.f32.mrb[0].mxu0
      %v3537 = vadd.f32 0.0, %v3536
      %v3538 = vpop.f32.mrb[0].mxu0
      %v3539 = vpop.f32.mrb[0].mxu0
      %v3540 = vadd.f32 0.0, %v3539
      %v3541 = vpop.f32.mrb[0].mxu0
      %3542 = vmatprep.mubr.bf16.mxu0 0
      %3543 = vmatmul.mubr.bf16.gmra.mrb[0].mxu0 %v3253
      %v3544 = vpop.f32.mrb[0].mxu0
      %v3545 = vadd.f32 0.0, %v3544
      %v3546 = vpop.f32.mrb[0].mxu0
      %v3547 = vpop.f32.mrb[0].mxu0
      %v3548 = vadd.f32 0.0, %v3547
      %v3549 = vpop.f32.mrb[0].mxu0
      %3550 = vmatprep.mubr.bf16.mxu0 0
      %3551 = vmatmul.mubr.bf16.gmra.mrb[0].mxu0 %v3261
      %v3552 = vpop.f32.mrb[0].mxu0
      %v3553 = vadd.f32 0.0, %v3552
      %v3554 = vpop.f32.mrb[0].mxu0
      %v3555 = vpop.f32.mrb[0].mxu0
      %v3556 = vadd.f32 0.0, %v3555
      %v3557 = vpop.f32.mrb[0].mxu0
      %3558 = vmatprep.mubr.bf16.mxu0 0
      %3559 = vmatmul.mubr.bf16.gmra.mrb[0].mxu0 %v3269
      %v3560 = vpop.f32.mrb[0].mxu0
      %v3561 = vadd.f32 0.0, %v3560
      %v3562 = vpop.f32.mrb[0].mxu0
      %v3563 = vpop.f32.mrb[0].mxu0
      %v3564 = vadd.f32 0.0, %v3563
      %v3565 = vpop.f32.mrb[0].mxu0
      %3566 = vmatprep.mubr.bf16.mxu0 0
      %3567 = vmatmul.mubr.bf16.gmra.mrb[0].mxu0 %v3277
      %v3568 = vpop.f32.mrb[0].mxu0
      %v3569 = vadd.f32 0.0, %v3568
      %v3570 = vpop.f32.mrb[0].mxu0
      %v3571 = vpop.f32.mrb[0].mxu0
      %v3572 = vadd.f32 0.0, %v3571
      %v3573 = vpop.f32.mrb[0].mxu0
      %3574 = vmatprep.mubr.bf16.mxu0 0
      %3575 = vmatmul.mubr.bf16.gmra.mrb[0].mxu0 %v3285
      %v3576 = vpop.f32.mrb[0].mxu0
      %v3577 = vadd.f32 0.0, %v3576
      %v3578 = vpop.f32.mrb[0].mxu0
      %v3579 = vpop.f32.mrb[0].mxu0
      %v3580 = vadd.f32 0.0, %v3579
      %v3581 = vpop.f32.mrb[0].mxu0
      %3582 = vmatprep.mubr.bf16.mxu0 0
      %3583 = vmatmul.mubr.bf16.gmra.mrb[0].mxu0 %v3293
      %v3584 = vpop.f32.mrb[0].mxu0
      %v3585 = vadd.f32 0.0, %v3584
      %v3586 = vpop.f32.mrb[0].mxu0
      %v3587 = vpop.f32.mrb[0].mxu0
      %v3588 = vadd.f32 0.0, %v3587
      %v3589 = vpop.f32.mrb[0].mxu0
      %3590 = vmatprep.mubr.bf16.mxu0 0
      %3591 = vmatmul.mubr.bf16.gmra.mrb[0].mxu0 %v3301
      %v3592 = vpop.f32.mrb[0].mxu0
      %v3593 = vadd.f32 0.0, %v3592
      %v3594 = vpop.f32.mrb[0].mxu0
      %v3595 = vpop.f32.mrb[0].mxu0
      %v3596 = vadd.f32 0.0, %v3595
      %v3597 = vpop.f32.mrb[0].mxu0
      %3598 = vmatprep.mubr.bf16.mxu0 0
      %3599 = vmatmul.mubr.bf16.gmra.mrb[0].mxu0 %v3309
      %v3600 = vpop.f32.mrb[0].mxu0
      %v3601 = vadd.f32 0.0, %v3600
      %v3602 = vpop.f32.mrb[0].mxu0
      %v3603 = vpop.f32.mrb[0].mxu0
      %v3604 = vadd.f32 0.0, %v3603
      %v3605 = vpop.f32.mrb[0].mxu0
      %3606 = vmatprep.mubr.bf16.mxu0 0
      %3607 = vmatmul.mubr.bf16.gmra.mrb[0].mxu0 %v3317
      %v3608 = vpop.f32.mrb[0].mxu0
      %v3609 = vadd.f32 0.0, %v3608
      %v3610 = vpop.f32.mrb[0].mxu0
      %v3611 = vpop.f32.mrb[0].mxu0
      %v3612 = vadd.f32 0.0, %v3611
      %v3613 = vpop.f32.mrb[0].mxu0
      %3614 = vmatprep.mubr.bf16.mxu0 0
      %3615 = vmatmul.mubr.bf16.gmra.mrb[0].mxu0 %v3325
      %v3616 = vpop.f32.mrb[0].mxu0
      %v3617 = vadd.f32 0.0, %v3616
      %v3618 = vpop.f32.mrb[0].mxu0
      %v3619 = vpop.f32.mrb[0].mxu0
      %v3620 = vadd.f32 0.0, %v3619
      %v3621 = vpop.f32.mrb[0].mxu0
      %3622 = vdwg.mxu0
      %v3623 = vadd.f32 %v3039, %v3433
      %v3624 = vadd.f32 %v3040, %v3436
      %v3625 = vadd.f32 %v3041, %v3441
      %v3626 = vadd.f32 %v3042, %v3444
      %v3627 = vadd.f32 %v3043, %v3449
      %v3628 = vadd.f32 %v3044, %v3452
      %v3629 = vadd.f32 %v3045, %v3457
      %v3630 = vadd.f32 %v3046, %v3460
      %v3631 = vadd.f32 %v3047, %v3465
      %v3632 = vadd.f32 %v3048, %v3468
      %v3633 = vadd.f32 %v3049, %v3473
      %v3634 = vadd.f32 %v3050, %v3476
      %v3635 = vadd.f32 %v3051, %v3481
      %v3636 = vadd.f32 %v3052, %v3484
      %v3637 = vadd.f32 %v3053, %v3489
      %v3638 = vadd.f32 %v3054, %v3492
      %v3639 = vadd.f32 %v3055, %v3497
      %v3640 = vadd.f32 %v3056, %v3500
      %v3641 = vadd.f32 %v3057, %v3505
      %v3642 = vadd.f32 %v3058, %v3508
      %v3643 = vadd.f32 %v3059, %v3513
      %v3644 = vadd.f32 %v3060, %v3516
      %v3645 = vadd.f32 %v3061, %v3521
      %v3646 = vadd.f32 %v3062, %v3524
      %v3647 = vadd.f32 %v3063, %v3529
      %v3648 = vadd.f32 %v3064, %v3532
      %v3649 = vadd.f32 %v3065, %v3537
      %v3650 = vadd.f32 %v3066, %v3540
      %v3651 = vadd.f32 %v3067, %v3545
      %v3652 = vadd.f32 %v3068, %v3548
      %v3653 = vadd.f32 %v3069, %v3553
      %v3654 = vadd.f32 %v3070, %v3556
      %v3655 = vadd.f32 %v3071, %v3561
      %v3656 = vadd.f32 %v3072, %v3564
      %v3657 = vadd.f32 %v3073, %v3569
      %v3658 = vadd.f32 %v3074, %v3572
      %v3659 = vadd.f32 %v3075, %v3577
      %v3660 = vadd.f32 %v3076, %v3580
      %v3661 = vadd.f32 %v3077, %v3585
      %v3662 = vadd.f32 %v3078, %v3588
      %v3663 = vadd.f32 %v3079, %v3593
      %v3664 = vadd.f32 %v3080, %v3596
      %v3665 = vadd.f32 %v3081, %v3601
      %v3666 = vadd.f32 %v3082, %v3604
      %v3667 = vadd.f32 %v3083, %v3609
      %v3668 = vadd.f32 %v3084, %v3612
      %v3669 = vadd.f32 %v3085, %v3617
      %v3670 = vadd.f32 %v3086, %v3620
      %s3671 = scalar_lea.vmem %s3, 256
      %v3672 = vld [vmem:[%s3671] sm:$0xf]
      %v3673 = vld [vmem:[%s3671 + $0x4] sm:$0xf]
      %v3674 = vld [vmem:[%s3671 + $0x8] sm:$0xf]
      %v3675 = vld [vmem:[%s3671 + $0xc] sm:$0xf]
      %v3676 = vld [vmem:[%s3671 + $0x10] sm:$0xf]
      %v3677 = vld [vmem:[%s3671 + $0x14] sm:$0xf]
      %v3678 = vld [vmem:[%s3671 + $0x18] sm:$0xf]
      %v3679 = vld [vmem:[%s3671 + $0x1c] sm:$0xf]
      %v3680 = vld [vmem:[%s3671 + $0x20] sm:$0xf]
      %v3681 = vld [vmem:[%s3671 + $0x24] sm:$0xf]
      %v3682 = vld [vmem:[%s3671 + $0x28] sm:$0xf]
      %v3683 = vld [vmem:[%s3671 + $0x2c] sm:$0xf]
      %v3684 = vld [vmem:[%s3671 + $0x30] sm:$0xf]
      %v3685 = vld [vmem:[%s3671 + $0x34] sm:$0xf]
      %v3686 = vld [vmem:[%s3671 + $0x38] sm:$0xf]
      %v3687 = vld [vmem:[%s3671 + $0x3c] sm:$0xf]
      %v3704 = vunpack.c.l.b16 %v3672
      %v3705 = vunpack.c.l.b16 %v3673
      %v3706 = vunpack.c.l.b16 %v3674
      %v3707 = vunpack.c.l.b16 %v3675
      %v3708 = vunpack.c.l.b16 %v3676
      %v3709 = vunpack.c.l.b16 %v3677
      %v3710 = vunpack.c.l.b16 %v3678
      %v3711 = vunpack.c.l.b16 %v3679
      %v3712 = vunpack.c.l.b16 %v3680
      %v3713 = vunpack.c.l.b16 %v3681
      %v3714 = vunpack.c.l.b16 %v3682
      %v3715 = vunpack.c.l.b16 %v3683
      %v3716 = vunpack.c.l.b16 %v3684
      %v3717 = vunpack.c.l.b16 %v3685
      %v3718 = vunpack.c.l.b16 %v3686
      %v3719 = vunpack.c.l.b16 %v3687
      %v3720 = vpack.c.b16 %v3705, %v3704
      %v3721 = vpack.c.b16 %v3707, %v3706
      %v3722 = vpack.c.b16 %v3709, %v3708
      %v3723 = vpack.c.b16 %v3711, %v3710
      %v3724 = vpack.c.b16 %v3713, %v3712
      %v3725 = vpack.c.b16 %v3715, %v3714
      %v3726 = vpack.c.b16 %v3717, %v3716
      %v3727 = vpack.c.b16 %v3719, %v3718
      %3736 = vmatprep.subr.bf16.mxu0 0
      %3737 = vmatpush1.bf16.msra.mxu0 %v3720
      %3738 = vmatprep.subr.bf16.mxu0 0
      %3739 = vmatpush1.bf16.msra.mxu0 %v3721
      %3740 = vmatprep.subr.bf16.mxu0 0
      %3741 = vmatpush1.bf16.msra.mxu0 %v3722
      %3742 = vmatprep.subr.bf16.mxu0 0
      %3743 = vmatpush1.bf16.msra.mxu0 %v3723
      %3744 = vmatprep.subr.bf16.mxu0 0
      %3745 = vmatpush1.bf16.msra.mxu0 %v3724
      %3746 = vmatprep.subr.bf16.mxu0 0
      %3747 = vmatpush1.bf16.msra.mxu0 %v3725
      %3748 = vmatprep.subr.bf16.mxu0 0
      %3749 = vmatpush1.bf16.msra.mxu0 %v3726
      %3750 = vmatprep.subr.bf16.mxu0 0
      %3751 = vmatpush1.bf16.msra.mxu0 %v3727
      %3752 = vmatprep.subr.bf16.mxu0 0
      %3753 = vmatpush1.bf16.msra.mxu0 0
      %3754 = vmatprep.subr.bf16.mxu0 0
      %3755 = vmatpush1.bf16.msra.mxu0 0
      %3756 = vmatprep.subr.bf16.mxu0 0
      %3757 = vmatpush1.bf16.msra.mxu0 0
      %3758 = vmatprep.subr.bf16.mxu0 0
      %3759 = vmatpush1.bf16.msra.mxu0 0
      %3760 = vmatprep.subr.bf16.mxu0 0
      %3761 = vmatpush1.bf16.msra.mxu0 0
      %3762 = vmatprep.subr.bf16.mxu0 0
      %3763 = vmatpush1.bf16.msra.mxu0 0
      %3764 = vmatprep.subr.bf16.mxu0 0
      %3765 = vmatpush1.bf16.msra.mxu0 0
      %3766 = vmatprep.subr.bf16.mxu0 0
      %3767 = vmatpush1.bf16.msra.mxu0 0
      %3768 = vmatprep.mubr.bf16.mxu0 0
      %3769 = vmatmul.mubr.bf16.gmra.mrb[0].mxu0 %v3088
      %v3770 = vpop.f32.mrb[0].mxu0
      %v3771 = vadd.f32 0.0, %v3770
      %v3772 = vpop.f32.mrb[0].mxu0
      %v3773 = vpop.f32.mrb[0].mxu0
      %v3774 = vadd.f32 0.0, %v3773
      %v3775 = vpop.f32.mrb[0].mxu0
      %3776 = vmatprep.mubr.bf16.mxu0 0
      %3777 = vmatmul.mubr.bf16.gmra.mrb[0].mxu0 %v3089
      %v3778 = vpop.f32.mrb[0].mxu0
      %v3779 = vadd.f32 0.0, %v3778
      %v3780 = vpop.f32.mrb[0].mxu0
      %v3781 = vpop.f32.mrb[0].mxu0
      %v3782 = vadd.f32 0.0, %v3781
      %v3783 = vpop.f32.mrb[0].mxu0
      %3784 = vmatprep.mubr.bf16.mxu0 0
      %3785 = vmatmul.mubr.bf16.gmra.mrb[0].mxu0 %v3090
      %v3786 = vpop.f32.mrb[0].mxu0
      %v3787 = vadd.f32 0.0, %v3786
      %v3788 = vpop.f32.mrb[0].mxu0
      %v3789 = vpop.f32.mrb[0].mxu0
      %v3790 = vadd.f32 0.0, %v3789
      %v3791 = vpop.f32.mrb[0].mxu0
      %3792 = vmatprep.mubr.bf16.mxu0 0
      %3793 = vmatmul.mubr.bf16.gmra.mrb[0].mxu0 %v3091
      %v3794 = vpop.f32.mrb[0].mxu0
      %v3795 = vadd.f32 0.0, %v3794
      %v3796 = vpop.f32.mrb[0].mxu0
      %v3797 = vpop.f32.mrb[0].mxu0
      %v3798 = vadd.f32 0.0, %v3797
      %v3799 = vpop.f32.mrb[0].mxu0
      %3800 = vmatprep.mubr.bf16.mxu0 0
      %3801 = vmatmul.mubr.bf16.gmra.mrb[0].mxu0 %v3092
      %v3802 = vpop.f32.mrb[0].mxu0
      %v3803 = vadd.f32 0.0, %v3802
      %v3804 = vpop.f32.mrb[0].mxu0
      %v3805 = vpop.f32.mrb[0].mxu0
      %v3806 = vadd.f32 0.0, %v3805
      %v3807 = vpop.f32.mrb[0].mxu0
      %3808 = vmatprep.mubr.bf16.mxu0 0
      %3809 = vmatmul.mubr.bf16.gmra.mrb[0].mxu0 %v3093
      %v3810 = vpop.f32.mrb[0].mxu0
      %v3811 = vadd.f32 0.0, %v3810
      %v3812 = vpop.f32.mrb[0].mxu0
      %v3813 = vpop.f32.mrb[0].mxu0
      %v3814 = vadd.f32 0.0, %v3813
      %v3815 = vpop.f32.mrb[0].mxu0
      %3816 = vmatprep.mubr.bf16.mxu0 0
      %3817 = vmatmul.mubr.bf16.gmra.mrb[0].mxu0 %v3094
      %v3818 = vpop.f32.mrb[0].mxu0
      %v3819 = vadd.f32 0.0, %v3818
      %v3820 = vpop.f32.mrb[0].mxu0
      %v3821 = vpop.f32.mrb[0].mxu0
      %v3822 = vadd.f32 0.0, %v3821
      %v3823 = vpop.f32.mrb[0].mxu0
      %3824 = vmatprep.mubr.bf16.mxu0 0
      %3825 = vmatmul.mubr.bf16.gmra.mrb[0].mxu0 %v3095
      %v3826 = vpop.f32.mrb[0].mxu0
      %v3827 = vadd.f32 0.0, %v3826
      %v3828 = vpop.f32.mrb[0].mxu0
      %v3829 = vpop.f32.mrb[0].mxu0
      %v3830 = vadd.f32 0.0, %v3829
      %v3831 = vpop.f32.mrb[0].mxu0
      %3832 = vmatprep.mubr.bf16.mxu0 0
      %3833 = vmatmul.mubr.bf16.gmra.mrb[0].mxu0 %v3096
      %v3834 = vpop.f32.mrb[0].mxu0
      %v3835 = vadd.f32 0.0, %v3834
      %v3836 = vpop.f32.mrb[0].mxu0
      %v3837 = vpop.f32.mrb[0].mxu0
      %v3838 = vadd.f32 0.0, %v3837
      %v3839 = vpop.f32.mrb[0].mxu0
      %3840 = vmatprep.mubr.bf16.mxu0 0
      %3841 = vmatmul.mubr.bf16.gmra.mrb[0].mxu0 %v3097
      %v3842 = vpop.f32.mrb[0].mxu0
      %v3843 = vadd.f32 0.0, %v3842
      %v3844 = vpop.f32.mrb[0].mxu0
      %v3845 = vpop.f32.mrb[0].mxu0
      %v3846 = vadd.f32 0.0, %v3845
      %v3847 = vpop.f32.mrb[0].mxu0
      %3848 = vmatprep.mubr.bf16.mxu0 0
      %3849 = vmatmul.mubr.bf16.gmra.mrb[0].mxu0 %v3098
      %v3850 = vpop.f32.mrb[0].mxu0
      %v3851 = vadd.f32 0.0, %v3850
      %v3852 = vpop.f32.mrb[0].mxu0
      %v3853 = vpop.f32.mrb[0].mxu0
      %v3854 = vadd.f32 0.0, %v3853
      %v3855 = vpop.f32.mrb[0].mxu0
      %3856 = vmatprep.mubr.bf16.mxu0 0
      %3857 = vmatmul.mubr.bf16.gmra.mrb[0].mxu0 %v3099
      %v3858 = vpop.f32.mrb[0].mxu0
      %v3859 = vadd.f32 0.0, %v3858
      %v3860 = vpop.f32.mrb[0].mxu0
      %v3861 = vpop.f32.mrb[0].mxu0
      %v3862 = vadd.f32 0.0, %v3861
      %v3863 = vpop.f32.mrb[0].mxu0
      %3864 = vmatprep.mubr.bf16.mxu0 0
      %3865 = vmatmul.mubr.bf16.gmra.mrb[0].mxu0 %v3100
      %v3866 = vpop.f32.mrb[0].mxu0
      %v3867 = vadd.f32 0.0, %v3866
      %v3868 = vpop.f32.mrb[0].mxu0
      %v3869 = vpop.f32.mrb[0].mxu0
      %v3870 = vadd.f32 0.0, %v3869
      %v3871 = vpop.f32.mrb[0].mxu0
      %3872 = vmatprep.mubr.bf16.mxu0 0
      %3873 = vmatmul.mubr.bf16.gmra.mrb[0].mxu0 %v3101
      %v3874 = vpop.f32.mrb[0].mxu0
      %v3875 = vadd.f32 0.0, %v3874
      %v3876 = vpop.f32.mrb[0].mxu0
      %v3877 = vpop.f32.mrb[0].mxu0
      %v3878 = vadd.f32 0.0, %v3877
      %v3879 = vpop.f32.mrb[0].mxu0
      %3880 = vmatprep.mubr.bf16.mxu0 0
      %3881 = vmatmul.mubr.bf16.gmra.mrb[0].mxu0 %v3102
      %v3882 = vpop.f32.mrb[0].mxu0
      %v3883 = vadd.f32 0.0, %v3882
      %v3884 = vpop.f32.mrb[0].mxu0
      %v3885 = vpop.f32.mrb[0].mxu0
      %v3886 = vadd.f32 0.0, %v3885
      %v3887 = vpop.f32.mrb[0].mxu0
      %3888 = vmatprep.mubr.bf16.mxu0 0
      %3889 = vmatmul.mubr.bf16.gmra.mrb[0].mxu0 %v3103
      %v3890 = vpop.f32.mrb[0].mxu0
      %v3891 = vadd.f32 0.0, %v3890
      %v3892 = vpop.f32.mrb[0].mxu0
      %v3893 = vpop.f32.mrb[0].mxu0
      %v3894 = vadd.f32 0.0, %v3893
      %v3895 = vpop.f32.mrb[0].mxu0
      %3896 = vmatprep.mubr.bf16.mxu0 0
      %3897 = vmatmul.mubr.bf16.gmra.mrb[0].mxu0 %v3104
      %v3898 = vpop.f32.mrb[0].mxu0
      %v3899 = vadd.f32 0.0, %v3898
      %v3900 = vpop.f32.mrb[0].mxu0
      %v3901 = vpop.f32.mrb[0].mxu0
      %v3902 = vadd.f32 0.0, %v3901
      %v3903 = vpop.f32.mrb[0].mxu0
      %3904 = vmatprep.mubr.bf16.mxu0 0
      %3905 = vmatmul.mubr.bf16.gmra.mrb[0].mxu0 %v3105
      %v3906 = vpop.f32.mrb[0].mxu0
      %v3907 = vadd.f32 0.0, %v3906
      %v3908 = vpop.f32.mrb[0].mxu0
      %v3909 = vpop.f32.mrb[0].mxu0
      %v3910 = vadd.f32 0.0, %v3909
      %v3911 = vpop.f32.mrb[0].mxu0
      %3912 = vmatprep.mubr.bf16.mxu0 0
      %3913 = vmatmul.mubr.bf16.gmra.mrb[0].mxu0 %v3106
      %v3914 = vpop.f32.mrb[0].mxu0
      %v3915 = vadd.f32 0.0, %v3914
      %v3916 = vpop.f32.mrb[0].mxu0
      %v3917 = vpop.f32.mrb[0].mxu0
      %v3918 = vadd.f32 0.0, %v3917
      %v3919 = vpop.f32.mrb[0].mxu0
      %3920 = vmatprep.mubr.bf16.mxu0 0
      %3921 = vmatmul.mubr.bf16.gmra.mrb[0].mxu0 %v3107
      %v3922 = vpop.f32.mrb[0].mxu0
      %v3923 = vadd.f32 0.0, %v3922
      %v3924 = vpop.f32.mrb[0].mxu0
      %v3925 = vpop.f32.mrb[0].mxu0
      %v3926 = vadd.f32 0.0, %v3925
      %v3927 = vpop.f32.mrb[0].mxu0
      %3928 = vmatprep.mubr.bf16.mxu0 0
      %3929 = vmatmul.mubr.bf16.gmra.mrb[0].mxu0 %v3108
      %v3930 = vpop.f32.mrb[0].mxu0
      %v3931 = vadd.f32 0.0, %v3930
      %v3932 = vpop.f32.mrb[0].mxu0
      %v3933 = vpop.f32.mrb[0].mxu0
      %v3934 = vadd.f32 0.0, %v3933
      %v3935 = vpop.f32.mrb[0].mxu0
      %3936 = vmatprep.mubr.bf16.mxu0 0
      %3937 = vmatmul.mubr.bf16.gmra.mrb[0].mxu0 %v3109
      %v3938 = vpop.f32.mrb[0].mxu0
      %v3939 = vadd.f32 0.0, %v3938
      %v3940 = vpop.f32.mrb[0].mxu0
      %v3941 = vpop.f32.mrb[0].mxu0
      %v3942 = vadd.f32 0.0, %v3941
      %v3943 = vpop.f32.mrb[0].mxu0
      %3944 = vmatprep.mubr.bf16.mxu0 0
      %3945 = vmatmul.mubr.bf16.gmra.mrb[0].mxu0 %v3110
      %v3946 = vpop.f32.mrb[0].mxu0
      %v3947 = vadd.f32 0.0, %v3946
      %v3948 = vpop.f32.mrb[0].mxu0
      %v3949 = vpop.f32.mrb[0].mxu0
      %v3950 = vadd.f32 0.0, %v3949
      %v3951 = vpop.f32.mrb[0].mxu0
      %3952 = vmatprep.mubr.bf16.mxu0 0
      %3953 = vmatmul.mubr.bf16.gmra.mrb[0].mxu0 %v3111
      %v3954 = vpop.f32.mrb[0].mxu0
      %v3955 = vadd.f32 0.0, %v3954
      %v3956 = vpop.f32.mrb[0].mxu0
      %v3957 = vpop.f32.mrb[0].mxu0
      %v3958 = vadd.f32 0.0, %v3957
      %v3959 = vpop.f32.mrb[0].mxu0
      %3960 = vdwg.mxu0
      %v3961 = vadd.f32 %v3623, %v3771
      %v3962 = vadd.f32 %v3624, %v3774
      %v3963 = vadd.f32 %v3625, %v3779
      %v3964 = vadd.f32 %v3626, %v3782
      %v3965 = vadd.f32 %v3627, %v3787
      %v3966 = vadd.f32 %v3628, %v3790
      %v3967 = vadd.f32 %v3629, %v3795
      %v3968 = vadd.f32 %v3630, %v3798
      %v3969 = vadd.f32 %v3631, %v3803
      %v3970 = vadd.f32 %v3632, %v3806
      %v3971 = vadd.f32 %v3633, %v3811
      %v3972 = vadd.f32 %v3634, %v3814
      %v3973 = vadd.f32 %v3635, %v3819
      %v3974 = vadd.f32 %v3636, %v3822
      %v3975 = vadd.f32 %v3637, %v3827
      %v3976 = vadd.f32 %v3638, %v3830
      %v3977 = vadd.f32 %v3639, %v3835
      %v3978 = vadd.f32 %v3640, %v3838
      %v3979 = vadd.f32 %v3641, %v3843
      %v3980 = vadd.f32 %v3642, %v3846
      %v3981 = vadd.f32 %v3643, %v3851
      %v3982 = vadd.f32 %v3644, %v3854
      %v3983 = vadd.f32 %v3645, %v3859
      %v3984 = vadd.f32 %v3646, %v3862
      %v3985 = vadd.f32 %v3647, %v3867
      %v3986 = vadd.f32 %v3648, %v3870
      %v3987 = vadd.f32 %v3649, %v3875
      %v3988 = vadd.f32 %v3650, %v3878
      %v3989 = vadd.f32 %v3651, %v3883
      %v3990 = vadd.f32 %v3652, %v3886
      %v3991 = vadd.f32 %v3653, %v3891
      %v3992 = vadd.f32 %v3654, %v3894
      %v3993 = vadd.f32 %v3655, %v3899
      %v3994 = vadd.f32 %v3656, %v3902
      %v3995 = vadd.f32 %v3657, %v3907
      %v3996 = vadd.f32 %v3658, %v3910
      %v3997 = vadd.f32 %v3659, %v3915
      %v3998 = vadd.f32 %v3660, %v3918
      %v3999 = vadd.f32 %v3661, %v3923
      %v4000 = vadd.f32 %v3662, %v3926
      %v4001 = vadd.f32 %v3663, %v3931
      %v4002 = vadd.f32 %v3664, %v3934
      %v4003 = vadd.f32 %v3665, %v3939
      %v4004 = vadd.f32 %v3666, %v3942
      %v4005 = vadd.f32 %v3667, %v3947
      %v4006 = vadd.f32 %v3668, %v3950
      %v4007 = vadd.f32 %v3669, %v3955
      %v4008 = vadd.f32 %v3670, %v3958
      %v4009 = vld [vmem:[#allocation2 + $0x10] sm:$0xff]
      %v4010 = vld [vmem:[#allocation2 + $0x18] sm:$0xff]
      %v4011 = vld [vmem:[#allocation2 + $0x20] sm:$0xff]
      %v4012 = vld [vmem:[#allocation2 + $0x28] sm:$0xff]
      %v4013 = vld [vmem:[#allocation2 + $0x30] sm:$0xff]
      %v4014 = vld [vmem:[#allocation2 + $0x38] sm:$0xff]
      %v4015 = vld [vmem:[#allocation2 + $0x40] sm:$0xff]
      %v4016 = vld [vmem:[#allocation2 + $0x48] sm:$0xff]
      %v4017 = vld [vmem:[#allocation2 + $0x50] sm:$0xff]
      %v4018 = vld [vmem:[#allocation2 + $0x58] sm:$0xff]
      %v4019 = vld [vmem:[#allocation2 + $0x60] sm:$0xff]
      %v4020 = vld [vmem:[#allocation2 + $0x68] sm:$0xff]
      %v4021 = vld [vmem:[#allocation2 + $0x70] sm:$0xff]
      %v4022 = vld [vmem:[#allocation2 + $0x78] sm:$0xff]
      %v4023 = vld [vmem:[#allocation2 + $0x80] sm:$0xff]
      %v4024 = vld [vmem:[#allocation2 + $0x88] sm:$0xff]
      %v4025 = vld [vmem:[#allocation2 + $0x90] sm:$0xff]
      %v4026 = vld [vmem:[#allocation2 + $0x98] sm:$0xff]
      %v4027 = vld [vmem:[#allocation2 + $0xa0] sm:$0xff]
      %v4028 = vld [vmem:[#allocation2 + $0xa8] sm:$0xff]
      %v4029 = vld [vmem:[#allocation2 + $0xb0] sm:$0xff]
      %v4030 = vld [vmem:[#allocation2 + $0xb8] sm:$0xff]
      %v4031 = vld [vmem:[#allocation2 + $0xc0] sm:$0xff]
      %v4032 = vld [vmem:[#allocation2 + $0xc8] sm:$0xff]
      %v4033 = vld [vmem:[#allocation2 + $0xd0] sm:$0x1]
      %s4034 = scalar_lea.vmem %s3, 320
      %v4035 = vld [vmem:[%s4034] sm:$0xf]
      %v4036 = vld [vmem:[%s4034 + $0x4] sm:$0xf]
      %v4037 = vld [vmem:[%s4034 + $0x8] sm:$0xf]
      %v4038 = vld [vmem:[%s4034 + $0xc] sm:$0xf]
      %v4039 = vld [vmem:[%s4034 + $0x10] sm:$0xf]
      %v4040 = vld [vmem:[%s4034 + $0x14] sm:$0xf]
      %v4041 = vld [vmem:[%s4034 + $0x18] sm:$0xf]
      %v4042 = vld [vmem:[%s4034 + $0x1c] sm:$0xf]
      %v4043 = vld [vmem:[%s4034 + $0x20] sm:$0xf]
      %v4044 = vld [vmem:[%s4034 + $0x24] sm:$0xf]
      %v4045 = vld [vmem:[%s4034 + $0x28] sm:$0xf]
      %v4046 = vld [vmem:[%s4034 + $0x2c] sm:$0xf]
      %v4047 = vld [vmem:[%s4034 + $0x30] sm:$0xf]
      %v4048 = vld [vmem:[%s4034 + $0x34] sm:$0xf]
      %v4049 = vld [vmem:[%s4034 + $0x38] sm:$0xf]
      %v4050 = vld [vmem:[%s4034 + $0x3c] sm:$0xf]
      %vm4051 = vsmask.f32 7424
      %v4053 = vshrl.u32 %v4009, 16
      %v4055 = vshll.u32 %v4009, 16
      %v4057 = vrot.slane %v4055, 1
      %v4058 = vor.u32 %v4053, %v4057
      %v4060 = vshll.u32 %v4010, 16
      %v4062 = vrot.slane %v4060, 1
      %v4063 = vsel %vm4051, %v4058, %v4062
      %v4064 = vshrl.u32 %v4010, 16
      %v4066 = vor.u32 %v4064, %v4062
      %v4068 = vshll.u32 %v4011, 16
      %v4070 = vrot.slane %v4068, 1
      %v4071 = vsel %vm4051, %v4066, %v4070
      %v4072 = vshrl.u32 %v4011, 16
      %v4074 = vor.u32 %v4072, %v4070
      %v4076 = vshll.u32 %v4012, 16
      %v4078 = vrot.slane %v4076, 1
      %v4079 = vsel %vm4051, %v4074, %v4078
      %v4080 = vshrl.u32 %v4012, 16
      %v4082 = vor.u32 %v4080, %v4078
      %v4084 = vshll.u32 %v4013, 16
      %v4086 = vrot.slane %v4084, 1
      %v4087 = vsel %vm4051, %v4082, %v4086
      %v4088 = vshrl.u32 %v4013, 16
      %v4090 = vor.u32 %v4088, %v4086
      %v4092 = vshll.u32 %v4014, 16
      %v4094 = vrot.slane %v4092, 1
      %v4095 = vsel %vm4051, %v4090, %v4094
      %v4096 = vshrl.u32 %v4014, 16
      %v4098 = vor.u32 %v4096, %v4094
      %v4100 = vshll.u32 %v4015, 16
      %v4102 = vrot.slane %v4100, 1
      %v4103 = vsel %vm4051, %v4098, %v4102
      %v4104 = vshrl.u32 %v4015, 16
      %v4106 = vor.u32 %v4104, %v4102
      %v4108 = vshll.u32 %v4016, 16
      %v4110 = vrot.slane %v4108, 1
      %v4111 = vsel %vm4051, %v4106, %v4110
      %v4112 = vshrl.u32 %v4016, 16
      %v4114 = vor.u32 %v4112, %v4110
      %v4116 = vshll.u32 %v4017, 16
      %v4118 = vrot.slane %v4116, 1
      %v4119 = vsel %vm4051, %v4114, %v4118
      %v4120 = vshrl.u32 %v4017, 16
      %v4122 = vor.u32 %v4120, %v4118
      %v4124 = vshll.u32 %v4018, 16
      %v4126 = vrot.slane %v4124, 1
      %v4127 = vsel %vm4051, %v4122, %v4126
      %v4128 = vshrl.u32 %v4018, 16
      %v4130 = vor.u32 %v4128, %v4126
      %v4132 = vshll.u32 %v4019, 16
      %v4134 = vrot.slane %v4132, 1
      %v4135 = vsel %vm4051, %v4130, %v4134
      %v4136 = vshrl.u32 %v4019, 16
      %v4138 = vor.u32 %v4136, %v4134
      %v4140 = vshll.u32 %v4020, 16
      %v4142 = vrot.slane %v4140, 1
      %v4143 = vsel %vm4051, %v4138, %v4142
      %v4144 = vshrl.u32 %v4020, 16
      %v4146 = vor.u32 %v4144, %v4142
      %v4148 = vshll.u32 %v4021, 16
      %v4150 = vrot.slane %v4148, 1
      %v4151 = vsel %vm4051, %v4146, %v4150
      %v4152 = vshrl.u32 %v4021, 16
      %v4154 = vor.u32 %v4152, %v4150
      %v4156 = vshll.u32 %v4022, 16
      %v4158 = vrot.slane %v4156, 1
      %v4159 = vsel %vm4051, %v4154, %v4158
      %v4160 = vshrl.u32 %v4022, 16
      %v4162 = vor.u32 %v4160, %v4158
      %v4164 = vshll.u32 %v4023, 16
      %v4166 = vrot.slane %v4164, 1
      %v4167 = vsel %vm4051, %v4162, %v4166
      %v4168 = vshrl.u32 %v4023, 16
      %v4170 = vor.u32 %v4168, %v4166
      %v4172 = vshll.u32 %v4024, 16
      %v4174 = vrot.slane %v4172, 1
      %v4175 = vsel %vm4051, %v4170, %v4174
      %v4176 = vshrl.u32 %v4024, 16
      %v4178 = vor.u32 %v4176, %v4174
      %v4180 = vshll.u32 %v4025, 16
      %v4182 = vrot.slane %v4180, 1
      %v4183 = vsel %vm4051, %v4178, %v4182
      %v4184 = vshrl.u32 %v4025, 16
      %v4186 = vor.u32 %v4184, %v4182
      %v4188 = vshll.u32 %v4026, 16
      %v4190 = vrot.slane %v4188, 1
      %v4191 = vsel %vm4051, %v4186, %v4190
      %v4192 = vshrl.u32 %v4026, 16
      %v4194 = vor.u32 %v4192, %v4190
      %v4196 = vshll.u32 %v4027, 16
      %v4198 = vrot.slane %v4196, 1
      %v4199 = vsel %vm4051, %v4194, %v4198
      %v4200 = vshrl.u32 %v4027, 16
      %v4202 = vor.u32 %v4200, %v4198
      %v4204 = vshll.u32 %v4028, 16
      %v4206 = vrot.slane %v4204, 1
      %v4207 = vsel %vm4051, %v4202, %v4206
      %v4208 = vshrl.u32 %v4028, 16
      %v4210 = vor.u32 %v4208, %v4206
      %v4212 = vshll.u32 %v4029, 16
      %v4214 = vrot.slane %v4212, 1
      %v4215 = vsel %vm4051, %v4210, %v4214
      %v4216 = vshrl.u32 %v4029, 16
      %v4218 = vor.u32 %v4216, %v4214
      %v4220 = vshll.u32 %v4030, 16
      %v4222 = vrot.slane %v4220, 1
      %v4223 = vsel %vm4051, %v4218, %v4222
      %v4224 = vshrl.u32 %v4030, 16
      %v4226 = vor.u32 %v4224, %v4222
      %v4228 = vshll.u32 %v4031, 16
      %v4230 = vrot.slane %v4228, 1
      %v4231 = vsel %vm4051, %v4226, %v4230
      %v4232 = vshrl.u32 %v4031, 16
      %v4234 = vor.u32 %v4232, %v4230
      %v4236 = vshll.u32 %v4032, 16
      %v4238 = vrot.slane %v4236, 1
      %v4239 = vsel %vm4051, %v4234, %v4238
      %v4240 = vshrl.u32 %v4032, 16
      %v4242 = vor.u32 %v4240, %v4238
      %v4244 = vshll.u32 %v4033, 16
      %v4246 = vrot.slane %v4244, 1
      %v4247 = vsel %vm4051, %v4242, %v4246
      %v4288 = vunpack.c.l.b16 %v4035
      %v4289 = vunpack.c.l.b16 %v4036
      %v4290 = vunpack.c.l.b16 %v4037
      %v4291 = vunpack.c.l.b16 %v4038
      %v4292 = vunpack.c.l.b16 %v4039
      %v4293 = vunpack.c.l.b16 %v4040
      %v4294 = vunpack.c.l.b16 %v4041
      %v4295 = vunpack.c.l.b16 %v4042
      %v4296 = vunpack.c.l.b16 %v4043
      %v4297 = vunpack.c.l.b16 %v4044
      %v4298 = vunpack.c.l.b16 %v4045
      %v4299 = vunpack.c.l.b16 %v4046
      %v4300 = vunpack.c.l.b16 %v4047
      %v4301 = vunpack.c.l.b16 %v4048
      %v4302 = vunpack.c.l.b16 %v4049
      %v4303 = vunpack.c.l.b16 %v4050
      %v4304 = vpack.c.b16 %v4289, %v4288
      %v4305 = vpack.c.b16 %v4291, %v4290
      %v4306 = vpack.c.b16 %v4293, %v4292
      %v4307 = vpack.c.b16 %v4295, %v4294
      %v4308 = vpack.c.b16 %v4297, %v4296
      %v4309 = vpack.c.b16 %v4299, %v4298
      %v4310 = vpack.c.b16 %v4301, %v4300
      %v4311 = vpack.c.b16 %v4303, %v4302
      %4320 = vmatprep.subr.bf16.mxu0 0
      %4321 = vmatpush1.bf16.msra.mxu0 %v4304
      %4322 = vmatprep.subr.bf16.mxu0 0
      %4323 = vmatpush1.bf16.msra.mxu0 %v4305
      %4324 = vmatprep.subr.bf16.mxu0 0
      %4325 = vmatpush1.bf16.msra.mxu0 %v4306
      %4326 = vmatprep.subr.bf16.mxu0 0
      %4327 = vmatpush1.bf16.msra.mxu0 %v4307
      %4328 = vmatprep.subr.bf16.mxu0 0
      %4329 = vmatpush1.bf16.msra.mxu0 %v4308
      %4330 = vmatprep.subr.bf16.mxu0 0
      %4331 = vmatpush1.bf16.msra.mxu0 %v4309
      %4332 = vmatprep.subr.bf16.mxu0 0
      %4333 = vmatpush1.bf16.msra.mxu0 %v4310
      %4334 = vmatprep.subr.bf16.mxu0 0
      %4335 = vmatpush1.bf16.msra.mxu0 %v4311
      %4336 = vmatprep.subr.bf16.mxu0 0
      %4337 = vmatpush1.bf16.msra.mxu0 0
      %4338 = vmatprep.subr.bf16.mxu0 0
      %4339 = vmatpush1.bf16.msra.mxu0 0
      %4340 = vmatprep.subr.bf16.mxu0 0
      %4341 = vmatpush1.bf16.msra.mxu0 0
      %4342 = vmatprep.subr.bf16.mxu0 0
      %4343 = vmatpush1.bf16.msra.mxu0 0
      %4344 = vmatprep.subr.bf16.mxu0 0
      %4345 = vmatpush1.bf16.msra.mxu0 0
      %4346 = vmatprep.subr.bf16.mxu0 0
      %4347 = vmatpush1.bf16.msra.mxu0 0
      %4348 = vmatprep.subr.bf16.mxu0 0
      %4349 = vmatpush1.bf16.msra.mxu0 0
      %4350 = vmatprep.subr.bf16.mxu0 0
      %4351 = vmatpush1.bf16.msra.mxu0 0
      %4352 = vmatprep.mubr.bf16.mxu0 0
      %4353 = vmatmul.mubr.bf16.gmra.mrb[0].mxu0 %v4063
      %v4354 = vpop.f32.mrb[0].mxu0
      %v4355 = vadd.f32 0.0, %v4354
      %v4356 = vpop.f32.mrb[0].mxu0
      %v4357 = vpop.f32.mrb[0].mxu0
      %v4358 = vadd.f32 0.0, %v4357
      %v4359 = vpop.f32.mrb[0].mxu0
      %4360 = vmatprep.mubr.bf16.mxu0 0
      %4361 = vmatmul.mubr.bf16.gmra.mrb[0].mxu0 %v4071
      %v4362 = vpop.f32.mrb[0].mxu0
      %v4363 = vadd.f32 0.0, %v4362
      %v4364 = vpop.f32.mrb[0].mxu0
      %v4365 = vpop.f32.mrb[0].mxu0
      %v4366 = vadd.f32 0.0, %v4365
      %v4367 = vpop.f32.mrb[0].mxu0
      %4368 = vmatprep.mubr.bf16.mxu0 0
      %4369 = vmatmul.mubr.bf16.gmra.mrb[0].mxu0 %v4079
      %v4370 = vpop.f32.mrb[0].mxu0
      %v4371 = vadd.f32 0.0, %v4370
      %v4372 = vpop.f32.mrb[0].mxu0
      %v4373 = vpop.f32.mrb[0].mxu0
      %v4374 = vadd.f32 0.0, %v4373
      %v4375 = vpop.f32.mrb[0].mxu0
      %4376 = vmatprep.mubr.bf16.mxu0 0
      %4377 = vmatmul.mubr.bf16.gmra.mrb[0].mxu0 %v4087
      %v4378 = vpop.f32.mrb[0].mxu0
      %v4379 = vadd.f32 0.0, %v4378
      %v4380 = vpop.f32.mrb[0].mxu0
      %v4381 = vpop.f32.mrb[0].mxu0
      %v4382 = vadd.f32 0.0, %v4381
      %v4383 = vpop.f32.mrb[0].mxu0
      %4384 = vmatprep.mubr.bf16.mxu0 0
      %4385 = vmatmul.mubr.bf16.gmra.mrb[0].mxu0 %v4095
      %v4386 = vpop.f32.mrb[0].mxu0
      %v4387 = vadd.f32 0.0, %v4386
      %v4388 = vpop.f32.mrb[0].mxu0
      %v4389 = vpop.f32.mrb[0].mxu0
      %v4390 = vadd.f32 0.0, %v4389
      %v4391 = vpop.f32.mrb[0].mxu0
      %4392 = vmatprep.mubr.bf16.mxu0 0
      %4393 = vmatmul.mubr.bf16.gmra.mrb[0].mxu0 %v4103
      %v4394 = vpop.f32.mrb[0].mxu0
      %v4395 = vadd.f32 0.0, %v4394
      %v4396 = vpop.f32.mrb[0].mxu0
      %v4397 = vpop.f32.mrb[0].mxu0
      %v4398 = vadd.f32 0.0, %v4397
      %v4399 = vpop.f32.mrb[0].mxu0
      %4400 = vmatprep.mubr.bf16.mxu0 0
      %4401 = vmatmul.mubr.bf16.gmra.mrb[0].mxu0 %v4111
      %v4402 = vpop.f32.mrb[0].mxu0
      %v4403 = vadd.f32 0.0, %v4402
      %v4404 = vpop.f32.mrb[0].mxu0
      %v4405 = vpop.f32.mrb[0].mxu0
      %v4406 = vadd.f32 0.0, %v4405
      %v4407 = vpop.f32.mrb[0].mxu0
      %4408 = vmatprep.mubr.bf16.mxu0 0
      %4409 = vmatmul.mubr.bf16.gmra.mrb[0].mxu0 %v4119
      %v4410 = vpop.f32.mrb[0].mxu0
      %v4411 = vadd.f32 0.0, %v4410
      %v4412 = vpop.f32.mrb[0].mxu0
      %v4413 = vpop.f32.mrb[0].mxu0
      %v4414 = vadd.f32 0.0, %v4413
      %v4415 = vpop.f32.mrb[0].mxu0
      %4416 = vmatprep.mubr.bf16.mxu0 0
      %4417 = vmatmul.mubr.bf16.gmra.mrb[0].mxu0 %v4127
      %v4418 = vpop.f32.mrb[0].mxu0
      %v4419 = vadd.f32 0.0, %v4418
      %v4420 = vpop.f32.mrb[0].mxu0
      %v4421 = vpop.f32.mrb[0].mxu0
      %v4422 = vadd.f32 0.0, %v4421
      %v4423 = vpop.f32.mrb[0].mxu0
      %4424 = vmatprep.mubr.bf16.mxu0 0
      %4425 = vmatmul.mubr.bf16.gmra.mrb[0].mxu0 %v4135
      %v4426 = vpop.f32.mrb[0].mxu0
      %v4427 = vadd.f32 0.0, %v4426
      %v4428 = vpop.f32.mrb[0].mxu0
      %v4429 = vpop.f32.mrb[0].mxu0
      %v4430 = vadd.f32 0.0, %v4429
      %v4431 = vpop.f32.mrb[0].mxu0
      %4432 = vmatprep.mubr.bf16.mxu0 0
      %4433 = vmatmul.mubr.bf16.gmra.mrb[0].mxu0 %v4143
      %v4434 = vpop.f32.mrb[0].mxu0
      %v4435 = vadd.f32 0.0, %v4434
      %v4436 = vpop.f32.mrb[0].mxu0
      %v4437 = vpop.f32.mrb[0].mxu0
      %v4438 = vadd.f32 0.0, %v4437
      %v4439 = vpop.f32.mrb[0].mxu0
      %4440 = vmatprep.mubr.bf16.mxu0 0
      %4441 = vmatmul.mubr.bf16.gmra.mrb[0].mxu0 %v4151
      %v4442 = vpop.f32.mrb[0].mxu0
      %v4443 = vadd.f32 0.0, %v4442
      %v4444 = vpop.f32.mrb[0].mxu0
      %v4445 = vpop.f32.mrb[0].mxu0
      %v4446 = vadd.f32 0.0, %v4445
      %v4447 = vpop.f32.mrb[0].mxu0
      %4448 = vmatprep.mubr.bf16.mxu0 0
      %4449 = vmatmul.mubr.bf16.gmra.mrb[0].mxu0 %v4159
      %v4450 = vpop.f32.mrb[0].mxu0
      %v4451 = vadd.f32 0.0, %v4450
      %v4452 = vpop.f32.mrb[0].mxu0
      %v4453 = vpop.f32.mrb[0].mxu0
      %v4454 = vadd.f32 0.0, %v4453
      %v4455 = vpop.f32.mrb[0].mxu0
      %4456 = vmatprep.mubr.bf16.mxu0 0
      %4457 = vmatmul.mubr.bf16.gmra.mrb[0].mxu0 %v4167
      %v4458 = vpop.f32.mrb[0].mxu0
      %v4459 = vadd.f32 0.0, %v4458
      %v4460 = vpop.f32.mrb[0].mxu0
      %v4461 = vpop.f32.mrb[0].mxu0
      %v4462 = vadd.f32 0.0, %v4461
      %v4463 = vpop.f32.mrb[0].mxu0
      %4464 = vmatprep.mubr.bf16.mxu0 0
      %4465 = vmatmul.mubr.bf16.gmra.mrb[0].mxu0 %v4175
      %v4466 = vpop.f32.mrb[0].mxu0
      %v4467 = vadd.f32 0.0, %v4466
      %v4468 = vpop.f32.mrb[0].mxu0
      %v4469 = vpop.f32.mrb[0].mxu0
      %v4470 = vadd.f32 0.0, %v4469
      %v4471 = vpop.f32.mrb[0].mxu0
      %4472 = vmatprep.mubr.bf16.mxu0 0
      %4473 = vmatmul.mubr.bf16.gmra.mrb[0].mxu0 %v4183
      %v4474 = vpop.f32.mrb[0].mxu0
      %v4475 = vadd.f32 0.0, %v4474
      %v4476 = vpop.f32.mrb[0].mxu0
      %v4477 = vpop.f32.mrb[0].mxu0
      %v4478 = vadd.f32 0.0, %v4477
      %v4479 = vpop.f32.mrb[0].mxu0
      %4480 = vmatprep.mubr.bf16.mxu0 0
      %4481 = vmatmul.mubr.bf16.gmra.mrb[0].mxu0 %v4191
      %v4482 = vpop.f32.mrb[0].mxu0
      %v4483 = vadd.f32 0.0, %v4482
      %v4484 = vpop.f32.mrb[0].mxu0
      %v4485 = vpop.f32.mrb[0].mxu0
      %v4486 = vadd.f32 0.0, %v4485
      %v4487 = vpop.f32.mrb[0].mxu0
      %4488 = vmatprep.mubr.bf16.mxu0 0
      %4489 = vmatmul.mubr.bf16.gmra.mrb[0].mxu0 %v4199
      %v4490 = vpop.f32.mrb[0].mxu0
      %v4491 = vadd.f32 0.0, %v4490
      %v4492 = vpop.f32.mrb[0].mxu0
      %v4493 = vpop.f32.mrb[0].mxu0
      %v4494 = vadd.f32 0.0, %v4493
      %v4495 = vpop.f32.mrb[0].mxu0
      %4496 = vmatprep.mubr.bf16.mxu0 0
      %4497 = vmatmul.mubr.bf16.gmra.mrb[0].mxu0 %v4207
      %v4498 = vpop.f32.mrb[0].mxu0
      %v4499 = vadd.f32 0.0, %v4498
      %v4500 = vpop.f32.mrb[0].mxu0
      %v4501 = vpop.f32.mrb[0].mxu0
      %v4502 = vadd.f32 0.0, %v4501
      %v4503 = vpop.f32.mrb[0].mxu0
      %4504 = vmatprep.mubr.bf16.mxu0 0
      %4505 = vmatmul.mubr.bf16.gmra.mrb[0].mxu0 %v4215
      %v4506 = vpop.f32.mrb[0].mxu0
      %v4507 = vadd.f32 0.0, %v4506
      %v4508 = vpop.f32.mrb[0].mxu0
      %v4509 = vpop.f32.mrb[0].mxu0
      %v4510 = vadd.f32 0.0, %v4509
      %v4511 = vpop.f32.mrb[0].mxu0
      %4512 = vmatprep.mubr.bf16.mxu0 0
      %4513 = vmatmul.mubr.bf16.gmra.mrb[0].mxu0 %v4223
      %v4514 = vpop.f32.mrb[0].mxu0
      %v4515 = vadd.f32 0.0, %v4514
      %v4516 = vpop.f32.mrb[0].mxu0
      %v4517 = vpop.f32.mrb[0].mxu0
      %v4518 = vadd.f32 0.0, %v4517
      %v4519 = vpop.f32.mrb[0].mxu0
      %4520 = vmatprep.mubr.bf16.mxu0 0
      %4521 = vmatmul.mubr.bf16.gmra.mrb[0].mxu0 %v4231
      %v4522 = vpop.f32.mrb[0].mxu0
      %v4523 = vadd.f32 0.0, %v4522
      %v4524 = vpop.f32.mrb[0].mxu0
      %v4525 = vpop.f32.mrb[0].mxu0
      %v4526 = vadd.f32 0.0, %v4525
      %v4527 = vpop.f32.mrb[0].mxu0
      %4528 = vmatprep.mubr.bf16.mxu0 0
      %4529 = vmatmul.mubr.bf16.gmra.mrb[0].mxu0 %v4239
      %v4530 = vpop.f32.mrb[0].mxu0
      %v4531 = vadd.f32 0.0, %v4530
      %v4532 = vpop.f32.mrb[0].mxu0
      %v4533 = vpop.f32.mrb[0].mxu0
      %v4534 = vadd.f32 0.0, %v4533
      %v4535 = vpop.f32.mrb[0].mxu0
      %4536 = vmatprep.mubr.bf16.mxu0 0
      %4537 = vmatmul.mubr.bf16.gmra.mrb[0].mxu0 %v4247
      %v4538 = vpop.f32.mrb[0].mxu0
      %v4539 = vadd.f32 0.0, %v4538
      %v4540 = vpop.f32.mrb[0].mxu0
      %v4541 = vpop.f32.mrb[0].mxu0
      %v4542 = vadd.f32 0.0, %v4541
      %v4543 = vpop.f32.mrb[0].mxu0
      %4544 = vdwg.mxu0
      %v4545 = vadd.f32 %v3961, %v4355
      %v4546 = vadd.f32 %v3962, %v4358
      %v4547 = vadd.f32 %v3963, %v4363
      %v4548 = vadd.f32 %v3964, %v4366
      %v4549 = vadd.f32 %v3965, %v4371
      %v4550 = vadd.f32 %v3966, %v4374
      %v4551 = vadd.f32 %v3967, %v4379
      %v4552 = vadd.f32 %v3968, %v4382
      %v4553 = vadd.f32 %v3969, %v4387
      %v4554 = vadd.f32 %v3970, %v4390
      %v4555 = vadd.f32 %v3971, %v4395
      %v4556 = vadd.f32 %v3972, %v4398
      %v4557 = vadd.f32 %v3973, %v4403
      %v4558 = vadd.f32 %v3974, %v4406
      %v4559 = vadd.f32 %v3975, %v4411
      %v4560 = vadd.f32 %v3976, %v4414
      %v4561 = vadd.f32 %v3977, %v4419
      %v4562 = vadd.f32 %v3978, %v4422
      %v4563 = vadd.f32 %v3979, %v4427
      %v4564 = vadd.f32 %v3980, %v4430
      %v4565 = vadd.f32 %v3981, %v4435
      %v4566 = vadd.f32 %v3982, %v4438
      %v4567 = vadd.f32 %v3983, %v4443
      %v4568 = vadd.f32 %v3984, %v4446
      %v4569 = vadd.f32 %v3985, %v4451
      %v4570 = vadd.f32 %v3986, %v4454
      %v4571 = vadd.f32 %v3987, %v4459
      %v4572 = vadd.f32 %v3988, %v4462
      %v4573 = vadd.f32 %v3989, %v4467
      %v4574 = vadd.f32 %v3990, %v4470
      %v4575 = vadd.f32 %v3991, %v4475
      %v4576 = vadd.f32 %v3992, %v4478
      %v4577 = vadd.f32 %v3993, %v4483
      %v4578 = vadd.f32 %v3994, %v4486
      %v4579 = vadd.f32 %v3995, %v4491
      %v4580 = vadd.f32 %v3996, %v4494
      %v4581 = vadd.f32 %v3997, %v4499
      %v4582 = vadd.f32 %v3998, %v4502
      %v4583 = vadd.f32 %v3999, %v4507
      %v4584 = vadd.f32 %v4000, %v4510
      %v4585 = vadd.f32 %v4001, %v4515
      %v4586 = vadd.f32 %v4002, %v4518
      %v4587 = vadd.f32 %v4003, %v4523
      %v4588 = vadd.f32 %v4004, %v4526
      %v4589 = vadd.f32 %v4005, %v4531
      %v4590 = vadd.f32 %v4006, %v4534
      %v4591 = vadd.f32 %v4007, %v4539
      %v4592 = vadd.f32 %v4008, %v4542
      %v4593 = vld [vmem:[#allocation2 + $0x18] sm:$0xf8]
      %v4594 = vld [vmem:[#allocation2 + $0x20] sm:$0xff]
      %v4595 = vld [vmem:[#allocation2 + $0x28] sm:$0xff]
      %v4596 = vld [vmem:[#allocation2 + $0x30] sm:$0xff]
      %v4597 = vld [vmem:[#allocation2 + $0x38] sm:$0xff]
      %v4598 = vld [vmem:[#allocation2 + $0x40] sm:$0xff]
      %v4599 = vld [vmem:[#allocation2 + $0x48] sm:$0xff]
      %v4600 = vld [vmem:[#allocation2 + $0x50] sm:$0xff]
      %v4601 = vld [vmem:[#allocation2 + $0x58] sm:$0xff]
      %v4602 = vld [vmem:[#allocation2 + $0x60] sm:$0xff]
      %v4603 = vld [vmem:[#allocation2 + $0x68] sm:$0xff]
      %v4604 = vld [vmem:[#allocation2 + $0x70] sm:$0xff]
      %v4605 = vld [vmem:[#allocation2 + $0x78] sm:$0xff]
      %v4606 = vld [vmem:[#allocation2 + $0x80] sm:$0xff]
      %v4607 = vld [vmem:[#allocation2 + $0x88] sm:$0xff]
      %v4608 = vld [vmem:[#allocation2 + $0x90] sm:$0xff]
      %v4609 = vld [vmem:[#allocation2 + $0x98] sm:$0xff]
      %v4610 = vld [vmem:[#allocation2 + $0xa0] sm:$0xff]
      %v4611 = vld [vmem:[#allocation2 + $0xa8] sm:$0xff]
      %v4612 = vld [vmem:[#allocation2 + $0xb0] sm:$0xff]
      %v4613 = vld [vmem:[#allocation2 + $0xb8] sm:$0xff]
      %v4614 = vld [vmem:[#allocation2 + $0xc0] sm:$0xff]
      %v4615 = vld [vmem:[#allocation2 + $0xc8] sm:$0xff]
      %v4616 = vld [vmem:[#allocation2 + $0xd0] sm:$0xff]
      %v4617 = vld [vmem:[#allocation2 + $0xd8] sm:$0xf]
      %s4618 = scalar_lea.vmem %s3, 384
      %v4619 = vld [vmem:[%s4618] sm:$0xf]
      %v4620 = vld [vmem:[%s4618 + $0x4] sm:$0xf]
      %v4621 = vld [vmem:[%s4618 + $0x8] sm:$0xf]
      %v4622 = vld [vmem:[%s4618 + $0xc] sm:$0xf]
      %v4623 = vld [vmem:[%s4618 + $0x10] sm:$0xf]
      %v4624 = vld [vmem:[%s4618 + $0x14] sm:$0xf]
      %v4625 = vld [vmem:[%s4618 + $0x18] sm:$0xf]
      %v4626 = vld [vmem:[%s4618 + $0x1c] sm:$0xf]
      %v4627 = vld [vmem:[%s4618 + $0x20] sm:$0xf]
      %v4628 = vld [vmem:[%s4618 + $0x24] sm:$0xf]
      %v4629 = vld [vmem:[%s4618 + $0x28] sm:$0xf]
      %v4630 = vld [vmem:[%s4618 + $0x2c] sm:$0xf]
      %v4631 = vld [vmem:[%s4618 + $0x30] sm:$0xf]
      %v4632 = vld [vmem:[%s4618 + $0x34] sm:$0xf]
      %v4633 = vld [vmem:[%s4618 + $0x38] sm:$0xf]
      %v4634 = vld [vmem:[%s4618 + $0x3c] sm:$0xf]
      %v4636 = vshrl.u32 %v4593, 16
      %v4638 = vrot.slane %v4636, 3
      %v4639 = vshll.u32 %v4593, 16
      %v4641 = vrot.slane %v4639, 4
      %v4642 = vor.u32 %v4638, %v4641
      %v4644 = vshrl.u32 %v4594, 16
      %v4646 = vrot.slane %v4644, 3
      %v4647 = vshll.u32 %v4594, 16
      %v4649 = vrot.slane %v4647, 4
      %v4650 = vor.u32 %v4646, %v4649
      %v4651 = vsel %vm2092, %v4642, %v4650
      %v4653 = vshrl.u32 %v4595, 16
      %v4655 = vrot.slane %v4653, 3
      %v4656 = vshll.u32 %v4595, 16
      %v4658 = vrot.slane %v4656, 4
      %v4659 = vor.u32 %v4655, %v4658
      %v4660 = vsel %vm2092, %v4650, %v4659
      %v4662 = vshrl.u32 %v4596, 16
      %v4664 = vrot.slane %v4662, 3
      %v4665 = vshll.u32 %v4596, 16
      %v4667 = vrot.slane %v4665, 4
      %v4668 = vor.u32 %v4664, %v4667
      %v4669 = vsel %vm2092, %v4659, %v4668
      %v4671 = vshrl.u32 %v4597, 16
      %v4673 = vrot.slane %v4671, 3
      %v4674 = vshll.u32 %v4597, 16
      %v4676 = vrot.slane %v4674, 4
      %v4677 = vor.u32 %v4673, %v4676
      %v4678 = vsel %vm2092, %v4668, %v4677
      %v4680 = vshrl.u32 %v4598, 16
      %v4682 = vrot.slane %v4680, 3
      %v4683 = vshll.u32 %v4598, 16
      %v4685 = vrot.slane %v4683, 4
      %v4686 = vor.u32 %v4682, %v4685
      %v4687 = vsel %vm2092, %v4677, %v4686
      %v4689 = vshrl.u32 %v4599, 16
      %v4691 = vrot.slane %v4689, 3
      %v4692 = vshll.u32 %v4599, 16
      %v4694 = vrot.slane %v4692, 4
      %v4695 = vor.u32 %v4691, %v4694
      %v4696 = vsel %vm2092, %v4686, %v4695
      %v4698 = vshrl.u32 %v4600, 16
      %v4700 = vrot.slane %v4698, 3
      %v4701 = vshll.u32 %v4600, 16
      %v4703 = vrot.slane %v4701, 4
      %v4704 = vor.u32 %v4700, %v4703
      %v4705 = vsel %vm2092, %v4695, %v4704
      %v4707 = vshrl.u32 %v4601, 16
      %v4709 = vrot.slane %v4707, 3
      %v4710 = vshll.u32 %v4601, 16
      %v4712 = vrot.slane %v4710, 4
      %v4713 = vor.u32 %v4709, %v4712
      %v4714 = vsel %vm2092, %v4704, %v4713
      %v4716 = vshrl.u32 %v4602, 16
      %v4718 = vrot.slane %v4716, 3
      %v4719 = vshll.u32 %v4602, 16
      %v4721 = vrot.slane %v4719, 4
      %v4722 = vor.u32 %v4718, %v4721
      %v4723 = vsel %vm2092, %v4713, %v4722
      %v4725 = vshrl.u32 %v4603, 16
      %v4727 = vrot.slane %v4725, 3
      %v4728 = vshll.u32 %v4603, 16
      %v4730 = vrot.slane %v4728, 4
      %v4731 = vor.u32 %v4727, %v4730
      %v4732 = vsel %vm2092, %v4722, %v4731
      %v4734 = vshrl.u32 %v4604, 16
      %v4736 = vrot.slane %v4734, 3
      %v4737 = vshll.u32 %v4604, 16
      %v4739 = vrot.slane %v4737, 4
      %v4740 = vor.u32 %v4736, %v4739
      %v4741 = vsel %vm2092, %v4731, %v4740
      %v4743 = vshrl.u32 %v4605, 16
      %v4745 = vrot.slane %v4743, 3
      %v4746 = vshll.u32 %v4605, 16
      %v4748 = vrot.slane %v4746, 4
      %v4749 = vor.u32 %v4745, %v4748
      %v4750 = vsel %vm2092, %v4740, %v4749
      %v4752 = vshrl.u32 %v4606, 16
      %v4754 = vrot.slane %v4752, 3
      %v4755 = vshll.u32 %v4606, 16
      %v4757 = vrot.slane %v4755, 4
      %v4758 = vor.u32 %v4754, %v4757
      %v4759 = vsel %vm2092, %v4749, %v4758
      %v4761 = vshrl.u32 %v4607, 16
      %v4763 = vrot.slane %v4761, 3
      %v4764 = vshll.u32 %v4607, 16
      %v4766 = vrot.slane %v4764, 4
      %v4767 = vor.u32 %v4763, %v4766
      %v4768 = vsel %vm2092, %v4758, %v4767
      %v4770 = vshrl.u32 %v4608, 16
      %v4772 = vrot.slane %v4770, 3
      %v4773 = vshll.u32 %v4608, 16
      %v4775 = vrot.slane %v4773, 4
      %v4776 = vor.u32 %v4772, %v4775
      %v4777 = vsel %vm2092, %v4767, %v4776
      %v4779 = vshrl.u32 %v4609, 16
      %v4781 = vrot.slane %v4779, 3
      %v4782 = vshll.u32 %v4609, 16
      %v4784 = vrot.slane %v4782, 4
      %v4785 = vor.u32 %v4781, %v4784
      %v4786 = vsel %vm2092, %v4776, %v4785
      %v4788 = vshrl.u32 %v4610, 16
      %v4790 = vrot.slane %v4788, 3
      %v4791 = vshll.u32 %v4610, 16
      %v4793 = vrot.slane %v4791, 4
      %v4794 = vor.u32 %v4790, %v4793
      %v4795 = vsel %vm2092, %v4785, %v4794
      %v4797 = vshrl.u32 %v4611, 16
      %v4799 = vrot.slane %v4797, 3
      %v4800 = vshll.u32 %v4611, 16
      %v4802 = vrot.slane %v4800, 4
      %v4803 = vor.u32 %v4799, %v4802
      %v4804 = vsel %vm2092, %v4794, %v4803
      %v4806 = vshrl.u32 %v4612, 16
      %v4808 = vrot.slane %v4806, 3
      %v4809 = vshll.u32 %v4612, 16
      %v4811 = vrot.slane %v4809, 4
      %v4812 = vor.u32 %v4808, %v4811
      %v4813 = vsel %vm2092, %v4803, %v4812
      %v4815 = vshrl.u32 %v4613, 16
      %v4817 = vrot.slane %v4815, 3
      %v4818 = vshll.u32 %v4613, 16
      %v4820 = vrot.slane %v4818, 4
      %v4821 = vor.u32 %v4817, %v4820
      %v4822 = vsel %vm2092, %v4812, %v4821
      %v4824 = vshrl.u32 %v4614, 16
      %v4826 = vrot.slane %v4824, 3
      %v4827 = vshll.u32 %v4614, 16
      %v4829 = vrot.slane %v4827, 4
      %v4830 = vor.u32 %v4826, %v4829
      %v4831 = vsel %vm2092, %v4821, %v4830
      %v4833 = vshrl.u32 %v4615, 16
      %v4835 = vrot.slane %v4833, 3
      %v4836 = vshll.u32 %v4615, 16
      %v4838 = vrot.slane %v4836, 4
      %v4839 = vor.u32 %v4835, %v4838
      %v4840 = vsel %vm2092, %v4830, %v4839
      %v4842 = vshrl.u32 %v4616, 16
      %v4844 = vrot.slane %v4842, 3
      %v4845 = vshll.u32 %v4616, 16
      %v4847 = vrot.slane %v4845, 4
      %v4848 = vor.u32 %v4844, %v4847
      %v4849 = vsel %vm2092, %v4839, %v4848
      %v4851 = vshrl.u32 %v4617, 16
      %v4853 = vrot.slane %v4851, 3
      %v4854 = vshll.u32 %v4617, 16
      %v4856 = vrot.slane %v4854, 4
      %v4857 = vor.u32 %v4853, %v4856
      %v4858 = vsel %vm2092, %v4848, %v4857
      %v4899 = vunpack.c.l.b16 %v4619
      %v4900 = vunpack.c.l.b16 %v4620
      %v4901 = vunpack.c.l.b16 %v4621
      %v4902 = vunpack.c.l.b16 %v4622
      %v4903 = vunpack.c.l.b16 %v4623
      %v4904 = vunpack.c.l.b16 %v4624
      %v4905 = vunpack.c.l.b16 %v4625
      %v4906 = vunpack.c.l.b16 %v4626
      %v4907 = vunpack.c.l.b16 %v4627
      %v4908 = vunpack.c.l.b16 %v4628
      %v4909 = vunpack.c.l.b16 %v4629
      %v4910 = vunpack.c.l.b16 %v4630
      %v4911 = vunpack.c.l.b16 %v4631
      %v4912 = vunpack.c.l.b16 %v4632
      %v4913 = vunpack.c.l.b16 %v4633
      %v4914 = vunpack.c.l.b16 %v4634
      %v4915 = vpack.c.b16 %v4900, %v4899
      %v4916 = vpack.c.b16 %v4902, %v4901
      %v4917 = vpack.c.b16 %v4904, %v4903
      %v4918 = vpack.c.b16 %v4906, %v4905
      %v4919 = vpack.c.b16 %v4908, %v4907
      %v4920 = vpack.c.b16 %v4910, %v4909
      %v4921 = vpack.c.b16 %v4912, %v4911
      %v4922 = vpack.c.b16 %v4914, %v4913
      %4931 = vmatprep.subr.bf16.mxu0 0
      %4932 = vmatpush1.bf16.msra.mxu0 %v4915
      %4933 = vmatprep.subr.bf16.mxu0 0
      %4934 = vmatpush1.bf16.msra.mxu0 %v4916
      %4935 = vmatprep.subr.bf16.mxu0 0
      %4936 = vmatpush1.bf16.msra.mxu0 %v4917
      %4937 = vmatprep.subr.bf16.mxu0 0
      %4938 = vmatpush1.bf16.msra.mxu0 %v4918
      %4939 = vmatprep.subr.bf16.mxu0 0
      %4940 = vmatpush1.bf16.msra.mxu0 %v4919
      %4941 = vmatprep.subr.bf16.mxu0 0
      %4942 = vmatpush1.bf16.msra.mxu0 %v4920
      %4943 = vmatprep.subr.bf16.mxu0 0
      %4944 = vmatpush1.bf16.msra.mxu0 %v4921
      %4945 = vmatprep.subr.bf16.mxu0 0
      %4946 = vmatpush1.bf16.msra.mxu0 %v4922
      %4947 = vmatprep.subr.bf16.mxu0 0
      %4948 = vmatpush1.bf16.msra.mxu0 0
      %4949 = vmatprep.subr.bf16.mxu0 0
      %4950 = vmatpush1.bf16.msra.mxu0 0
      %4951 = vmatprep.subr.bf16.mxu0 0
      %4952 = vmatpush1.bf16.msra.mxu0 0
      %4953 = vmatprep.subr.bf16.mxu0 0
      %4954 = vmatpush1.bf16.msra.mxu0 0
      %4955 = vmatprep.subr.bf16.mxu0 0
      %4956 = vmatpush1.bf16.msra.mxu0 0
      %4957 = vmatprep.subr.bf16.mxu0 0
      %4958 = vmatpush1.bf16.msra.mxu0 0
      %4959 = vmatprep.subr.bf16.mxu0 0
      %4960 = vmatpush1.bf16.msra.mxu0 0
      %4961 = vmatprep.subr.bf16.mxu0 0
      %4962 = vmatpush1.bf16.msra.mxu0 0
      %4963 = vmatprep.mubr.bf16.mxu0 0
      %4964 = vmatmul.mubr.bf16.gmra.mrb[0].mxu0 %v4651
      %v4965 = vpop.f32.mrb[0].mxu0
      %v4966 = vadd.f32 0.0, %v4965
      %v4967 = vpop.f32.mrb[0].mxu0
      %v4968 = vpop.f32.mrb[0].mxu0
      %v4969 = vadd.f32 0.0, %v4968
      %v4970 = vpop.f32.mrb[0].mxu0
      %4971 = vmatprep.mubr.bf16.mxu0 0
      %4972 = vmatmul.mubr.bf16.gmra.mrb[0].mxu0 %v4660
      %v4973 = vpop.f32.mrb[0].mxu0
      %v4974 = vadd.f32 0.0, %v4973
      %v4975 = vpop.f32.mrb[0].mxu0
      %v4976 = vpop.f32.mrb[0].mxu0
      %v4977 = vadd.f32 0.0, %v4976
      %v4978 = vpop.f32.mrb[0].mxu0
      %4979 = vmatprep.mubr.bf16.mxu0 0
      %4980 = vmatmul.mubr.bf16.gmra.mrb[0].mxu0 %v4669
      %v4981 = vpop.f32.mrb[0].mxu0
      %v4982 = vadd.f32 0.0, %v4981
      %v4983 = vpop.f32.mrb[0].mxu0
      %v4984 = vpop.f32.mrb[0].mxu0
      %v4985 = vadd.f32 0.0, %v4984
      %v4986 = vpop.f32.mrb[0].mxu0
      %4987 = vmatprep.mubr.bf16.mxu0 0
      %4988 = vmatmul.mubr.bf16.gmra.mrb[0].mxu0 %v4678
      %v4989 = vpop.f32.mrb[0].mxu0
      %v4990 = vadd.f32 0.0, %v4989
      %v4991 = vpop.f32.mrb[0].mxu0
      %v4992 = vpop.f32.mrb[0].mxu0
      %v4993 = vadd.f32 0.0, %v4992
      %v4994 = vpop.f32.mrb[0].mxu0
      %4995 = vmatprep.mubr.bf16.mxu0 0
      %4996 = vmatmul.mubr.bf16.gmra.mrb[0].mxu0 %v4687
      %v4997 = vpop.f32.mrb[0].mxu0
      %v4998 = vadd.f32 0.0, %v4997
      %v4999 = vpop.f32.mrb[0].mxu0
      %v5000 = vpop.f32.mrb[0].mxu0
      %v5001 = vadd.f32 0.0, %v5000
      %v5002 = vpop.f32.mrb[0].mxu0
      %5003 = vmatprep.mubr.bf16.mxu0 0
      %5004 = vmatmul.mubr.bf16.gmra.mrb[0].mxu0 %v4696
      %v5005 = vpop.f32.mrb[0].mxu0
      %v5006 = vadd.f32 0.0, %v5005
      %v5007 = vpop.f32.mrb[0].mxu0
      %v5008 = vpop.f32.mrb[0].mxu0
      %v5009 = vadd.f32 0.0, %v5008
      %v5010 = vpop.f32.mrb[0].mxu0
      %5011 = vmatprep.mubr.bf16.mxu0 0
      %5012 = vmatmul.mubr.bf16.gmra.mrb[0].mxu0 %v4705
      %v5013 = vpop.f32.mrb[0].mxu0
      %v5014 = vadd.f32 0.0, %v5013
      %v5015 = vpop.f32.mrb[0].mxu0
      %v5016 = vpop.f32.mrb[0].mxu0
      %v5017 = vadd.f32 0.0, %v5016
      %v5018 = vpop.f32.mrb[0].mxu0
      %5019 = vmatprep.mubr.bf16.mxu0 0
      %5020 = vmatmul.mubr.bf16.gmra.mrb[0].mxu0 %v4714
      %v5021 = vpop.f32.mrb[0].mxu0
      %v5022 = vadd.f32 0.0, %v5021
      %v5023 = vpop.f32.mrb[0].mxu0
      %v5024 = vpop.f32.mrb[0].mxu0
      %v5025 = vadd.f32 0.0, %v5024
      %v5026 = vpop.f32.mrb[0].mxu0
      %5027 = vmatprep.mubr.bf16.mxu0 0
      %5028 = vmatmul.mubr.bf16.gmra.mrb[0].mxu0 %v4723
      %v5029 = vpop.f32.mrb[0].mxu0
      %v5030 = vadd.f32 0.0, %v5029
      %v5031 = vpop.f32.mrb[0].mxu0
      %v5032 = vpop.f32.mrb[0].mxu0
      %v5033 = vadd.f32 0.0, %v5032
      %v5034 = vpop.f32.mrb[0].mxu0
      %5035 = vmatprep.mubr.bf16.mxu0 0
      %5036 = vmatmul.mubr.bf16.gmra.mrb[0].mxu0 %v4732
      %v5037 = vpop.f32.mrb[0].mxu0
      %v5038 = vadd.f32 0.0, %v5037
      %v5039 = vpop.f32.mrb[0].mxu0
      %v5040 = vpop.f32.mrb[0].mxu0
      %v5041 = vadd.f32 0.0, %v5040
      %v5042 = vpop.f32.mrb[0].mxu0
      %5043 = vmatprep.mubr.bf16.mxu0 0
      %5044 = vmatmul.mubr.bf16.gmra.mrb[0].mxu0 %v4741
      %v5045 = vpop.f32.mrb[0].mxu0
      %v5046 = vadd.f32 0.0, %v5045
      %v5047 = vpop.f32.mrb[0].mxu0
      %v5048 = vpop.f32.mrb[0].mxu0
      %v5049 = vadd.f32 0.0, %v5048
      %v5050 = vpop.f32.mrb[0].mxu0
      %5051 = vmatprep.mubr.bf16.mxu0 0
      %5052 = vmatmul.mubr.bf16.gmra.mrb[0].mxu0 %v4750
      %v5053 = vpop.f32.mrb[0].mxu0
      %v5054 = vadd.f32 0.0, %v5053
      %v5055 = vpop.f32.mrb[0].mxu0
      %v5056 = vpop.f32.mrb[0].mxu0
      %v5057 = vadd.f32 0.0, %v5056
      %v5058 = vpop.f32.mrb[0].mxu0
      %5059 = vmatprep.mubr.bf16.mxu0 0
      %5060 = vmatmul.mubr.bf16.gmra.mrb[0].mxu0 %v4759
      %v5061 = vpop.f32.mrb[0].mxu0
      %v5062 = vadd.f32 0.0, %v5061
      %v5063 = vpop.f32.mrb[0].mxu0
      %v5064 = vpop.f32.mrb[0].mxu0
      %v5065 = vadd.f32 0.0, %v5064
      %v5066 = vpop.f32.mrb[0].mxu0
      %5067 = vmatprep.mubr.bf16.mxu0 0
      %5068 = vmatmul.mubr.bf16.gmra.mrb[0].mxu0 %v4768
      %v5069 = vpop.f32.mrb[0].mxu0
      %v5070 = vadd.f32 0.0, %v5069
      %v5071 = vpop.f32.mrb[0].mxu0
      %v5072 = vpop.f32.mrb[0].mxu0
      %v5073 = vadd.f32 0.0, %v5072
      %v5074 = vpop.f32.mrb[0].mxu0
      %5075 = vmatprep.mubr.bf16.mxu0 0
      %5076 = vmatmul.mubr.bf16.gmra.mrb[0].mxu0 %v4777
      %v5077 = vpop.f32.mrb[0].mxu0
      %v5078 = vadd.f32 0.0, %v5077
      %v5079 = vpop.f32.mrb[0].mxu0
      %v5080 = vpop.f32.mrb[0].mxu0
      %v5081 = vadd.f32 0.0, %v5080
      %v5082 = vpop.f32.mrb[0].mxu0
      %5083 = vmatprep.mubr.bf16.mxu0 0
      %5084 = vmatmul.mubr.bf16.gmra.mrb[0].mxu0 %v4786
      %v5085 = vpop.f32.mrb[0].mxu0
      %v5086 = vadd.f32 0.0, %v5085
      %v5087 = vpop.f32.mrb[0].mxu0
      %v5088 = vpop.f32.mrb[0].mxu0
      %v5089 = vadd.f32 0.0, %v5088
      %v5090 = vpop.f32.mrb[0].mxu0
      %5091 = vmatprep.mubr.bf16.mxu0 0
      %5092 = vmatmul.mubr.bf16.gmra.mrb[0].mxu0 %v4795
      %v5093 = vpop.f32.mrb[0].mxu0
      %v5094 = vadd.f32 0.0, %v5093
      %v5095 = vpop.f32.mrb[0].mxu0
      %v5096 = vpop.f32.mrb[0].mxu0
      %v5097 = vadd.f32 0.0, %v5096
      %v5098 = vpop.f32.mrb[0].mxu0
      %5099 = vmatprep.mubr.bf16.mxu0 0
      %5100 = vmatmul.mubr.bf16.gmra.mrb[0].mxu0 %v4804
      %v5101 = vpop.f32.mrb[0].mxu0
      %v5102 = vadd.f32 0.0, %v5101
      %v5103 = vpop.f32.mrb[0].mxu0
      %v5104 = vpop.f32.mrb[0].mxu0
      %v5105 = vadd.f32 0.0, %v5104
      %v5106 = vpop.f32.mrb[0].mxu0
      %5107 = vmatprep.mubr.bf16.mxu0 0
      %5108 = vmatmul.mubr.bf16.gmra.mrb[0].mxu0 %v4813
      %v5109 = vpop.f32.mrb[0].mxu0
      %v5110 = vadd.f32 0.0, %v5109
      %v5111 = vpop.f32.mrb[0].mxu0
      %v5112 = vpop.f32.mrb[0].mxu0
      %v5113 = vadd.f32 0.0, %v5112
      %v5114 = vpop.f32.mrb[0].mxu0
      %5115 = vmatprep.mubr.bf16.mxu0 0
      %5116 = vmatmul.mubr.bf16.gmra.mrb[0].mxu0 %v4822
      %v5117 = vpop.f32.mrb[0].mxu0
      %v5118 = vadd.f32 0.0, %v5117
      %v5119 = vpop.f32.mrb[0].mxu0
      %v5120 = vpop.f32.mrb[0].mxu0
      %v5121 = vadd.f32 0.0, %v5120
      %v5122 = vpop.f32.mrb[0].mxu0
      %5123 = vmatprep.mubr.bf16.mxu0 0
      %5124 = vmatmul.mubr.bf16.gmra.mrb[0].mxu0 %v4831
      %v5125 = vpop.f32.mrb[0].mxu0
      %v5126 = vadd.f32 0.0, %v5125
      %v5127 = vpop.f32.mrb[0].mxu0
      %v5128 = vpop.f32.mrb[0].mxu0
      %v5129 = vadd.f32 0.0, %v5128
      %v5130 = vpop.f32.mrb[0].mxu0
      %5131 = vmatprep.mubr.bf16.mxu0 0
      %5132 = vmatmul.mubr.bf16.gmra.mrb[0].mxu0 %v4840
      %v5133 = vpop.f32.mrb[0].mxu0
      %v5134 = vadd.f32 0.0, %v5133
      %v5135 = vpop.f32.mrb[0].mxu0
      %v5136 = vpop.f32.mrb[0].mxu0
      %v5137 = vadd.f32 0.0, %v5136
      %v5138 = vpop.f32.mrb[0].mxu0
      %5139 = vmatprep.mubr.bf16.mxu0 0
      %5140 = vmatmul.mubr.bf16.gmra.mrb[0].mxu0 %v4849
      %v5141 = vpop.f32.mrb[0].mxu0
      %v5142 = vadd.f32 0.0, %v5141
      %v5143 = vpop.f32.mrb[0].mxu0
      %v5144 = vpop.f32.mrb[0].mxu0
      %v5145 = vadd.f32 0.0, %v5144
      %v5146 = vpop.f32.mrb[0].mxu0
      %5147 = vmatprep.mubr.bf16.mxu0 0
      %5148 = vmatmul.mubr.bf16.gmra.mrb[0].mxu0 %v4858
      %v5149 = vpop.f32.mrb[0].mxu0
      %v5150 = vadd.f32 0.0, %v5149
      %v5151 = vpop.f32.mrb[0].mxu0
      %v5152 = vpop.f32.mrb[0].mxu0
      %v5153 = vadd.f32 0.0, %v5152
      %v5154 = vpop.f32.mrb[0].mxu0
      %5155 = vdwg.mxu0
      %v5156 = vadd.f32 %v4545, %v4966
      %v5157 = vadd.f32 %v4546, %v4969
      %v5158 = vadd.f32 %v4547, %v4974
      %v5159 = vadd.f32 %v4548, %v4977
      %v5160 = vadd.f32 %v4549, %v4982
      %v5161 = vadd.f32 %v4550, %v4985
      %v5162 = vadd.f32 %v4551, %v4990
      %v5163 = vadd.f32 %v4552, %v4993
      %v5164 = vadd.f32 %v4553, %v4998
      %v5165 = vadd.f32 %v4554, %v5001
      %v5166 = vadd.f32 %v4555, %v5006
      %v5167 = vadd.f32 %v4556, %v5009
      %v5168 = vadd.f32 %v4557, %v5014
      %v5169 = vadd.f32 %v4558, %v5017
      %v5170 = vadd.f32 %v4559, %v5022
      %v5171 = vadd.f32 %v4560, %v5025
      %v5172 = vadd.f32 %v4561, %v5030
      %v5173 = vadd.f32 %v4562, %v5033
      %v5174 = vadd.f32 %v4563, %v5038
      %v5175 = vadd.f32 %v4564, %v5041
      %v5176 = vadd.f32 %v4565, %v5046
      %v5177 = vadd.f32 %v4566, %v5049
      %v5178 = vadd.f32 %v4567, %v5054
      %v5179 = vadd.f32 %v4568, %v5057
      %v5180 = vadd.f32 %v4569, %v5062
      %v5181 = vadd.f32 %v4570, %v5065
      %v5182 = vadd.f32 %v4571, %v5070
      %v5183 = vadd.f32 %v4572, %v5073
      %v5184 = vadd.f32 %v4573, %v5078
      %v5185 = vadd.f32 %v4574, %v5081
      %v5186 = vadd.f32 %v4575, %v5086
      %v5187 = vadd.f32 %v4576, %v5089
      %v5188 = vadd.f32 %v4577, %v5094
      %v5189 = vadd.f32 %v4578, %v5097
      %v5190 = vadd.f32 %v4579, %v5102
      %v5191 = vadd.f32 %v4580, %v5105
      %v5192 = vadd.f32 %v4581, %v5110
      %v5193 = vadd.f32 %v4582, %v5113
      %v5194 = vadd.f32 %v4583, %v5118
      %v5195 = vadd.f32 %v4584, %v5121
      %v5196 = vadd.f32 %v4585, %v5126
      %v5197 = vadd.f32 %v4586, %v5129
      %v5198 = vadd.f32 %v4587, %v5134
      %v5199 = vadd.f32 %v4588, %v5137
      %v5200 = vadd.f32 %v4589, %v5142
      %v5201 = vadd.f32 %v4590, %v5145
      %v5202 = vadd.f32 %v4591, %v5150
      %v5203 = vadd.f32 %v4592, %v5153
      %v5204 = vld [vmem:[#allocation2 + $0x18] sm:$0xf0]
      %s5205 = scalar_lea.vmem %s3, 448
      %v5206 = vld [vmem:[%s5205] sm:$0xf]
      %v5207 = vld [vmem:[%s5205 + $0x4] sm:$0xf]
      %v5208 = vld [vmem:[%s5205 + $0x8] sm:$0xf]
      %v5209 = vld [vmem:[%s5205 + $0xc] sm:$0xf]
      %v5210 = vld [vmem:[%s5205 + $0x10] sm:$0xf]
      %v5211 = vld [vmem:[%s5205 + $0x14] sm:$0xf]
      %v5212 = vld [vmem:[%s5205 + $0x18] sm:$0xf]
      %v5213 = vld [vmem:[%s5205 + $0x1c] sm:$0xf]
      %v5214 = vld [vmem:[%s5205 + $0x20] sm:$0xf]
      %v5215 = vld [vmem:[%s5205 + $0x24] sm:$0xf]
      %v5216 = vld [vmem:[%s5205 + $0x28] sm:$0xf]
      %v5217 = vld [vmem:[%s5205 + $0x2c] sm:$0xf]
      %v5218 = vld [vmem:[%s5205 + $0x30] sm:$0xf]
      %v5219 = vld [vmem:[%s5205 + $0x34] sm:$0xf]
      %v5220 = vld [vmem:[%s5205 + $0x38] sm:$0xf]
      %v5221 = vld [vmem:[%s5205 + $0x3c] sm:$0xf]
      %v5247 = vrot.slane %v5204, 4
      %v5248 = vrot.slane %v4594, 4
      %v5249 = vsel %vm1745, %v5247, %v5248
      %v5250 = vrot.slane %v4595, 4
      %v5251 = vsel %vm1745, %v5248, %v5250
      %v5252 = vrot.slane %v4596, 4
      %v5253 = vsel %vm1745, %v5250, %v5252
      %v5254 = vrot.slane %v4597, 4
      %v5255 = vsel %vm1745, %v5252, %v5254
      %v5256 = vrot.slane %v4598, 4
      %v5257 = vsel %vm1745, %v5254, %v5256
      %v5258 = vrot.slane %v4599, 4
      %v5259 = vsel %vm1745, %v5256, %v5258
      %v5260 = vrot.slane %v4600, 4
      %v5261 = vsel %vm1745, %v5258, %v5260
      %v5262 = vrot.slane %v4601, 4
      %v5263 = vsel %vm1745, %v5260, %v5262
      %v5264 = vrot.slane %v4602, 4
      %v5265 = vsel %vm1745, %v5262, %v5264
      %v5266 = vrot.slane %v4603, 4
      %v5267 = vsel %vm1745, %v5264, %v5266
      %v5268 = vrot.slane %v4604, 4
      %v5269 = vsel %vm1745, %v5266, %v5268
      %v5270 = vrot.slane %v4605, 4
      %v5271 = vsel %vm1745, %v5268, %v5270
      %v5272 = vrot.slane %v4606, 4
      %v5273 = vsel %vm1745, %v5270, %v5272
      %v5274 = vrot.slane %v4607, 4
      %v5275 = vsel %vm1745, %v5272, %v5274
      %v5276 = vrot.slane %v4608, 4
      %v5277 = vsel %vm1745, %v5274, %v5276
      %v5278 = vrot.slane %v4609, 4
      %v5279 = vsel %vm1745, %v5276, %v5278
      %v5280 = vrot.slane %v4610, 4
      %v5281 = vsel %vm1745, %v5278, %v5280
      %v5282 = vrot.slane %v4611, 4
      %v5283 = vsel %vm1745, %v5280, %v5282
      %v5284 = vrot.slane %v4612, 4
      %v5285 = vsel %vm1745, %v5282, %v5284
      %v5286 = vrot.slane %v4613, 4
      %v5287 = vsel %vm1745, %v5284, %v5286
      %v5288 = vrot.slane %v4614, 4
      %v5289 = vsel %vm1745, %v5286, %v5288
      %v5290 = vrot.slane %v4615, 4
      %v5291 = vsel %vm1745, %v5288, %v5290
      %v5292 = vrot.slane %v4616, 4
      %v5293 = vsel %vm1745, %v5290, %v5292
      %v5294 = vrot.slane %v4617, 4
      %v5295 = vsel %vm1745, %v5292, %v5294
      %v5336 = vunpack.c.l.b16 %v5206
      %v5337 = vunpack.c.l.b16 %v5207
      %v5338 = vunpack.c.l.b16 %v5208
      %v5339 = vunpack.c.l.b16 %v5209
      %v5340 = vunpack.c.l.b16 %v5210
      %v5341 = vunpack.c.l.b16 %v5211
      %v5342 = vunpack.c.l.b16 %v5212
      %v5343 = vunpack.c.l.b16 %v5213
      %v5344 = vunpack.c.l.b16 %v5214
      %v5345 = vunpack.c.l.b16 %v5215
      %v5346 = vunpack.c.l.b16 %v5216
      %v5347 = vunpack.c.l.b16 %v5217
      %v5348 = vunpack.c.l.b16 %v5218
      %v5349 = vunpack.c.l.b16 %v5219
      %v5350 = vunpack.c.l.b16 %v5220
      %v5351 = vunpack.c.l.b16 %v5221
      %v5352 = vpack.c.b16 %v5337, %v5336
      %v5353 = vpack.c.b16 %v5339, %v5338
      %v5354 = vpack.c.b16 %v5341, %v5340
      %v5355 = vpack.c.b16 %v5343, %v5342
      %v5356 = vpack.c.b16 %v5345, %v5344
      %v5357 = vpack.c.b16 %v5347, %v5346
      %v5358 = vpack.c.b16 %v5349, %v5348
      %v5359 = vpack.c.b16 %v5351, %v5350
      %5368 = vmatprep.subr.bf16.mxu0 0
      %5369 = vmatpush1.bf16.msra.mxu0 %v5352
      %5370 = vmatprep.subr.bf16.mxu0 0
      %5371 = vmatpush1.bf16.msra.mxu0 %v5353
      %5372 = vmatprep.subr.bf16.mxu0 0
      %5373 = vmatpush1.bf16.msra.mxu0 %v5354
      %5374 = vmatprep.subr.bf16.mxu0 0
      %5375 = vmatpush1.bf16.msra.mxu0 %v5355
      %5376 = vmatprep.subr.bf16.mxu0 0
      %5377 = vmatpush1.bf16.msra.mxu0 %v5356
      %5378 = vmatprep.subr.bf16.mxu0 0
      %5379 = vmatpush1.bf16.msra.mxu0 %v5357
      %5380 = vmatprep.subr.bf16.mxu0 0
      %5381 = vmatpush1.bf16.msra.mxu0 %v5358
      %5382 = vmatprep.subr.bf16.mxu0 0
      %5383 = vmatpush1.bf16.msra.mxu0 %v5359
      %5384 = vmatprep.subr.bf16.mxu0 0
      %5385 = vmatpush1.bf16.msra.mxu0 0
      %5386 = vmatprep.subr.bf16.mxu0 0
      %5387 = vmatpush1.bf16.msra.mxu0 0
      %5388 = vmatprep.subr.bf16.mxu0 0
      %5389 = vmatpush1.bf16.msra.mxu0 0
      %5390 = vmatprep.subr.bf16.mxu0 0
      %5391 = vmatpush1.bf16.msra.mxu0 0
      %5392 = vmatprep.subr.bf16.mxu0 0
      %5393 = vmatpush1.bf16.msra.mxu0 0
      %5394 = vmatprep.subr.bf16.mxu0 0
      %5395 = vmatpush1.bf16.msra.mxu0 0
      %5396 = vmatprep.subr.bf16.mxu0 0
      %5397 = vmatpush1.bf16.msra.mxu0 0
      %5398 = vmatprep.subr.bf16.mxu0 0
      %5399 = vmatpush1.bf16.msra.mxu0 0
      %5400 = vmatprep.mubr.bf16.mxu0 0
      %5401 = vmatmul.mubr.bf16.gmra.mrb[0].mxu0 %v5249
      %v5402 = vpop.f32.mrb[0].mxu0
      %v5403 = vadd.f32 0.0, %v5402
      %v5404 = vpop.f32.mrb[0].mxu0
      %v5405 = vpop.f32.mrb[0].mxu0
      %v5406 = vadd.f32 0.0, %v5405
      %v5407 = vpop.f32.mrb[0].mxu0
      %5408 = vmatprep.mubr.bf16.mxu0 0
      %5409 = vmatmul.mubr.bf16.gmra.mrb[0].mxu0 %v5251
      %v5410 = vpop.f32.mrb[0].mxu0
      %v5411 = vadd.f32 0.0, %v5410
      %v5412 = vpop.f32.mrb[0].mxu0
      %v5413 = vpop.f32.mrb[0].mxu0
      %v5414 = vadd.f32 0.0, %v5413
      %v5415 = vpop.f32.mrb[0].mxu0
      %5416 = vmatprep.mubr.bf16.mxu0 0
      %5417 = vmatmul.mubr.bf16.gmra.mrb[0].mxu0 %v5253
      %v5418 = vpop.f32.mrb[0].mxu0
      %v5419 = vadd.f32 0.0, %v5418
      %v5420 = vpop.f32.mrb[0].mxu0
      %v5421 = vpop.f32.mrb[0].mxu0
      %v5422 = vadd.f32 0.0, %v5421
      %v5423 = vpop.f32.mrb[0].mxu0
      %5424 = vmatprep.mubr.bf16.mxu0 0
      %5425 = vmatmul.mubr.bf16.gmra.mrb[0].mxu0 %v5255
      %v5426 = vpop.f32.mrb[0].mxu0
      %v5427 = vadd.f32 0.0, %v5426
      %v5428 = vpop.f32.mrb[0].mxu0
      %v5429 = vpop.f32.mrb[0].mxu0
      %v5430 = vadd.f32 0.0, %v5429
      %v5431 = vpop.f32.mrb[0].mxu0
      %5432 = vmatprep.mubr.bf16.mxu0 0
      %5433 = vmatmul.mubr.bf16.gmra.mrb[0].mxu0 %v5257
      %v5434 = vpop.f32.mrb[0].mxu0
      %v5435 = vadd.f32 0.0, %v5434
      %v5436 = vpop.f32.mrb[0].mxu0
      %v5437 = vpop.f32.mrb[0].mxu0
      %v5438 = vadd.f32 0.0, %v5437
      %v5439 = vpop.f32.mrb[0].mxu0
      %5440 = vmatprep.mubr.bf16.mxu0 0
      %5441 = vmatmul.mubr.bf16.gmra.mrb[0].mxu0 %v5259
      %v5442 = vpop.f32.mrb[0].mxu0
      %v5443 = vadd.f32 0.0, %v5442
      %v5444 = vpop.f32.mrb[0].mxu0
      %v5445 = vpop.f32.mrb[0].mxu0
      %v5446 = vadd.f32 0.0, %v5445
      %v5447 = vpop.f32.mrb[0].mxu0
      %5448 = vmatprep.mubr.bf16.mxu0 0
      %5449 = vmatmul.mubr.bf16.gmra.mrb[0].mxu0 %v5261
      %v5450 = vpop.f32.mrb[0].mxu0
      %v5451 = vadd.f32 0.0, %v5450
      %v5452 = vpop.f32.mrb[0].mxu0
      %v5453 = vpop.f32.mrb[0].mxu0
      %v5454 = vadd.f32 0.0, %v5453
      %v5455 = vpop.f32.mrb[0].mxu0
      %5456 = vmatprep.mubr.bf16.mxu0 0
      %5457 = vmatmul.mubr.bf16.gmra.mrb[0].mxu0 %v5263
      %v5458 = vpop.f32.mrb[0].mxu0
      %v5459 = vadd.f32 0.0, %v5458
      %v5460 = vpop.f32.mrb[0].mxu0
      %v5461 = vpop.f32.mrb[0].mxu0
      %v5462 = vadd.f32 0.0, %v5461
      %v5463 = vpop.f32.mrb[0].mxu0
      %5464 = vmatprep.mubr.bf16.mxu0 0
      %5465 = vmatmul.mubr.bf16.gmra.mrb[0].mxu0 %v5265
      %v5466 = vpop.f32.mrb[0].mxu0
      %v5467 = vadd.f32 0.0, %v5466
      %v5468 = vpop.f32.mrb[0].mxu0
      %v5469 = vpop.f32.mrb[0].mxu0
      %v5470 = vadd.f32 0.0, %v5469
      %v5471 = vpop.f32.mrb[0].mxu0
      %5472 = vmatprep.mubr.bf16.mxu0 0
      %5473 = vmatmul.mubr.bf16.gmra.mrb[0].mxu0 %v5267
      %v5474 = vpop.f32.mrb[0].mxu0
      %v5475 = vadd.f32 0.0, %v5474
      %v5476 = vpop.f32.mrb[0].mxu0
      %v5477 = vpop.f32.mrb[0].mxu0
      %v5478 = vadd.f32 0.0, %v5477
      %v5479 = vpop.f32.mrb[0].mxu0
      %5480 = vmatprep.mubr.bf16.mxu0 0
      %5481 = vmatmul.mubr.bf16.gmra.mrb[0].mxu0 %v5269
      %v5482 = vpop.f32.mrb[0].mxu0
      %v5483 = vadd.f32 0.0, %v5482
      %v5484 = vpop.f32.mrb[0].mxu0
      %v5485 = vpop.f32.mrb[0].mxu0
      %v5486 = vadd.f32 0.0, %v5485
      %v5487 = vpop.f32.mrb[0].mxu0
      %5488 = vmatprep.mubr.bf16.mxu0 0
      %5489 = vmatmul.mubr.bf16.gmra.mrb[0].mxu0 %v5271
      %v5490 = vpop.f32.mrb[0].mxu0
      %v5491 = vadd.f32 0.0, %v5490
      %v5492 = vpop.f32.mrb[0].mxu0
      %v5493 = vpop.f32.mrb[0].mxu0
      %v5494 = vadd.f32 0.0, %v5493
      %v5495 = vpop.f32.mrb[0].mxu0
      %5496 = vmatprep.mubr.bf16.mxu0 0
      %5497 = vmatmul.mubr.bf16.gmra.mrb[0].mxu0 %v5273
      %v5498 = vpop.f32.mrb[0].mxu0
      %v5499 = vadd.f32 0.0, %v5498
      %v5500 = vpop.f32.mrb[0].mxu0
      %v5501 = vpop.f32.mrb[0].mxu0
      %v5502 = vadd.f32 0.0, %v5501
      %v5503 = vpop.f32.mrb[0].mxu0
      %5504 = vmatprep.mubr.bf16.mxu0 0
      %5505 = vmatmul.mubr.bf16.gmra.mrb[0].mxu0 %v5275
      %v5506 = vpop.f32.mrb[0].mxu0
      %v5507 = vadd.f32 0.0, %v5506
      %v5508 = vpop.f32.mrb[0].mxu0
      %v5509 = vpop.f32.mrb[0].mxu0
      %v5510 = vadd.f32 0.0, %v5509
      %v5511 = vpop.f32.mrb[0].mxu0
      %5512 = vmatprep.mubr.bf16.mxu0 0
      %5513 = vmatmul.mubr.bf16.gmra.mrb[0].mxu0 %v5277
      %v5514 = vpop.f32.mrb[0].mxu0
      %v5515 = vadd.f32 0.0, %v5514
      %v5516 = vpop.f32.mrb[0].mxu0
      %v5517 = vpop.f32.mrb[0].mxu0
      %v5518 = vadd.f32 0.0, %v5517
      %v5519 = vpop.f32.mrb[0].mxu0
      %5520 = vmatprep.mubr.bf16.mxu0 0
      %5521 = vmatmul.mubr.bf16.gmra.mrb[0].mxu0 %v5279
      %v5522 = vpop.f32.mrb[0].mxu0
      %v5523 = vadd.f32 0.0, %v5522
      %v5524 = vpop.f32.mrb[0].mxu0
      %v5525 = vpop.f32.mrb[0].mxu0
      %v5526 = vadd.f32 0.0, %v5525
      %v5527 = vpop.f32.mrb[0].mxu0
      %5528 = vmatprep.mubr.bf16.mxu0 0
      %5529 = vmatmul.mubr.bf16.gmra.mrb[0].mxu0 %v5281
      %v5530 = vpop.f32.mrb[0].mxu0
      %v5531 = vadd.f32 0.0, %v5530
      %v5532 = vpop.f32.mrb[0].mxu0
      %v5533 = vpop.f32.mrb[0].mxu0
      %v5534 = vadd.f32 0.0, %v5533
      %v5535 = vpop.f32.mrb[0].mxu0
      %5536 = vmatprep.mubr.bf16.mxu0 0
      %5537 = vmatmul.mubr.bf16.gmra.mrb[0].mxu0 %v5283
      %v5538 = vpop.f32.mrb[0].mxu0
      %v5539 = vadd.f32 0.0, %v5538
      %v5540 = vpop.f32.mrb[0].mxu0
      %v5541 = vpop.f32.mrb[0].mxu0
      %v5542 = vadd.f32 0.0, %v5541
      %v5543 = vpop.f32.mrb[0].mxu0
      %5544 = vmatprep.mubr.bf16.mxu0 0
      %5545 = vmatmul.mubr.bf16.gmra.mrb[0].mxu0 %v5285
      %v5546 = vpop.f32.mrb[0].mxu0
      %v5547 = vadd.f32 0.0, %v5546
      %v5548 = vpop.f32.mrb[0].mxu0
      %v5549 = vpop.f32.mrb[0].mxu0
      %v5550 = vadd.f32 0.0, %v5549
      %v5551 = vpop.f32.mrb[0].mxu0
      %5552 = vmatprep.mubr.bf16.mxu0 0
      %5553 = vmatmul.mubr.bf16.gmra.mrb[0].mxu0 %v5287
      %v5554 = vpop.f32.mrb[0].mxu0
      %v5555 = vadd.f32 0.0, %v5554
      %v5556 = vpop.f32.mrb[0].mxu0
      %v5557 = vpop.f32.mrb[0].mxu0
      %v5558 = vadd.f32 0.0, %v5557
      %v5559 = vpop.f32.mrb[0].mxu0
      %5560 = vmatprep.mubr.bf16.mxu0 0
      %5561 = vmatmul.mubr.bf16.gmra.mrb[0].mxu0 %v5289
      %v5562 = vpop.f32.mrb[0].mxu0
      %v5563 = vadd.f32 0.0, %v5562
      %v5564 = vpop.f32.mrb[0].mxu0
      %v5565 = vpop.f32.mrb[0].mxu0
      %v5566 = vadd.f32 0.0, %v5565
      %v5567 = vpop.f32.mrb[0].mxu0
      %5568 = vmatprep.mubr.bf16.mxu0 0
      %5569 = vmatmul.mubr.bf16.gmra.mrb[0].mxu0 %v5291
      %v5570 = vpop.f32.mrb[0].mxu0
      %v5571 = vadd.f32 0.0, %v5570
      %v5572 = vpop.f32.mrb[0].mxu0
      %v5573 = vpop.f32.mrb[0].mxu0
      %v5574 = vadd.f32 0.0, %v5573
      %v5575 = vpop.f32.mrb[0].mxu0
      %5576 = vmatprep.mubr.bf16.mxu0 0
      %5577 = vmatmul.mubr.bf16.gmra.mrb[0].mxu0 %v5293
      %v5578 = vpop.f32.mrb[0].mxu0
      %v5579 = vadd.f32 0.0, %v5578
      %v5580 = vpop.f32.mrb[0].mxu0
      %v5581 = vpop.f32.mrb[0].mxu0
      %v5582 = vadd.f32 0.0, %v5581
      %v5583 = vpop.f32.mrb[0].mxu0
      %5584 = vmatprep.mubr.bf16.mxu0 0
      %5585 = vmatmul.mubr.bf16.gmra.mrb[0].mxu0 %v5295
      %v5586 = vpop.f32.mrb[0].mxu0
      %v5587 = vadd.f32 0.0, %v5586
      %v5588 = vpop.f32.mrb[0].mxu0
      %v5589 = vpop.f32.mrb[0].mxu0
      %v5590 = vadd.f32 0.0, %v5589
      %v5591 = vpop.f32.mrb[0].mxu0
      %5592 = vdwg.mxu0
      %v5593 = vadd.f32 %v5156, %v5403
      %v5594 = vadd.f32 %v5157, %v5406
      %v5595 = vadd.f32 %v5158, %v5411
      %v5596 = vadd.f32 %v5159, %v5414
      %v5597 = vadd.f32 %v5160, %v5419
      %v5598 = vadd.f32 %v5161, %v5422
      %v5599 = vadd.f32 %v5162, %v5427
      %v5600 = vadd.f32 %v5163, %v5430
      %v5601 = vadd.f32 %v5164, %v5435
      %v5602 = vadd.f32 %v5165, %v5438
      %v5603 = vadd.f32 %v5166, %v5443
      %v5604 = vadd.f32 %v5167, %v5446
      %v5605 = vadd.f32 %v5168, %v5451
      %v5606 = vadd.f32 %v5169, %v5454
      %v5607 = vadd.f32 %v5170, %v5459
      %v5608 = vadd.f32 %v5171, %v5462
      %v5609 = vadd.f32 %v5172, %v5467
      %v5610 = vadd.f32 %v5173, %v5470
      %v5611 = vadd.f32 %v5174, %v5475
      %v5612 = vadd.f32 %v5175, %v5478
      %v5613 = vadd.f32 %v5176, %v5483
      %v5614 = vadd.f32 %v5177, %v5486
      %v5615 = vadd.f32 %v5178, %v5491
      %v5616 = vadd.f32 %v5179, %v5494
      %v5617 = vadd.f32 %v5180, %v5499
      %v5618 = vadd.f32 %v5181, %v5502
      %v5619 = vadd.f32 %v5182, %v5507
      %v5620 = vadd.f32 %v5183, %v5510
      %v5621 = vadd.f32 %v5184, %v5515
      %v5622 = vadd.f32 %v5185, %v5518
      %v5623 = vadd.f32 %v5186, %v5523
      %v5624 = vadd.f32 %v5187, %v5526
      %v5625 = vadd.f32 %v5188, %v5531
      %v5626 = vadd.f32 %v5189, %v5534
      %v5627 = vadd.f32 %v5190, %v5539
      %v5628 = vadd.f32 %v5191, %v5542
      %v5629 = vadd.f32 %v5192, %v5547
      %v5630 = vadd.f32 %v5193, %v5550
      %v5631 = vadd.f32 %v5194, %v5555
      %v5632 = vadd.f32 %v5195, %v5558
      %v5633 = vadd.f32 %v5196, %v5563
      %v5634 = vadd.f32 %v5197, %v5566
      %v5635 = vadd.f32 %v5198, %v5571
      %v5636 = vadd.f32 %v5199, %v5574
      %v5637 = vadd.f32 %v5200, %v5579
      %v5638 = vadd.f32 %v5201, %v5582
      %v5639 = vadd.f32 %v5202, %v5587
      %v5640 = vadd.f32 %v5203, %v5590
      %v5641 = vld [vmem:[#allocation2 + $0xd8] sm:$0x1f]
      %s5642 = scalar_lea.vmem %s3, 512
      %v5643 = vld [vmem:[%s5642] sm:$0xf]
      %v5644 = vld [vmem:[%s5642 + $0x4] sm:$0xf]
      %v5645 = vld [vmem:[%s5642 + $0x8] sm:$0xf]
      %v5646 = vld [vmem:[%s5642 + $0xc] sm:$0xf]
      %v5647 = vld [vmem:[%s5642 + $0x10] sm:$0xf]
      %v5648 = vld [vmem:[%s5642 + $0x14] sm:$0xf]
      %v5649 = vld [vmem:[%s5642 + $0x18] sm:$0xf]
      %v5650 = vld [vmem:[%s5642 + $0x1c] sm:$0xf]
      %v5651 = vld [vmem:[%s5642 + $0x20] sm:$0xf]
      %v5652 = vld [vmem:[%s5642 + $0x24] sm:$0xf]
      %v5653 = vld [vmem:[%s5642 + $0x28] sm:$0xf]
      %v5654 = vld [vmem:[%s5642 + $0x2c] sm:$0xf]
      %v5655 = vld [vmem:[%s5642 + $0x30] sm:$0xf]
      %v5656 = vld [vmem:[%s5642 + $0x34] sm:$0xf]
      %v5657 = vld [vmem:[%s5642 + $0x38] sm:$0xf]
      %v5658 = vld [vmem:[%s5642 + $0x3c] sm:$0xf]
      %v5660 = vshrl.u32 %v5204, 16
      %v5662 = vrot.slane %v5660, 4
      %v5663 = vshll.u32 %v5204, 16
      %v5665 = vrot.slane %v5663, 5
      %v5666 = vor.u32 %v5662, %v5665
      %v5667 = vrot.slane %v4644, 4
      %v5668 = vrot.slane %v4647, 5
      %v5669 = vor.u32 %v5667, %v5668
      %v5670 = vsel %vm2632, %v5666, %v5669
      %v5671 = vrot.slane %v4653, 4
      %v5672 = vrot.slane %v4656, 5
      %v5673 = vor.u32 %v5671, %v5672
      %v5674 = vsel %vm2632, %v5669, %v5673
      %v5675 = vrot.slane %v4662, 4
      %v5676 = vrot.slane %v4665, 5
      %v5677 = vor.u32 %v5675, %v5676
      %v5678 = vsel %vm2632, %v5673, %v5677
      %v5679 = vrot.slane %v4671, 4
      %v5680 = vrot.slane %v4674, 5
      %v5681 = vor.u32 %v5679, %v5680
      %v5682 = vsel %vm2632, %v5677, %v5681
      %v5683 = vrot.slane %v4680, 4
      %v5684 = vrot.slane %v4683, 5
      %v5685 = vor.u32 %v5683, %v5684
      %v5686 = vsel %vm2632, %v5681, %v5685
      %v5687 = vrot.slane %v4689, 4
      %v5688 = vrot.slane %v4692, 5
      %v5689 = vor.u32 %v5687, %v5688
      %v5690 = vsel %vm2632, %v5685, %v5689
      %v5691 = vrot.slane %v4698, 4
      %v5692 = vrot.slane %v4701, 5
      %v5693 = vor.u32 %v5691, %v5692
      %v5694 = vsel %vm2632, %v5689, %v5693
      %v5695 = vrot.slane %v4707, 4
      %v5696 = vrot.slane %v4710, 5
      %v5697 = vor.u32 %v5695, %v5696
      %v5698 = vsel %vm2632, %v5693, %v5697
      %v5699 = vrot.slane %v4716, 4
      %v5700 = vrot.slane %v4719, 5
      %v5701 = vor.u32 %v5699, %v5700
      %v5702 = vsel %vm2632, %v5697, %v5701
      %v5703 = vrot.slane %v4725, 4
      %v5704 = vrot.slane %v4728, 5
      %v5705 = vor.u32 %v5703, %v5704
      %v5706 = vsel %vm2632, %v5701, %v5705
      %v5707 = vrot.slane %v4734, 4
      %v5708 = vrot.slane %v4737, 5
      %v5709 = vor.u32 %v5707, %v5708
      %v5710 = vsel %vm2632, %v5705, %v5709
      %v5711 = vrot.slane %v4743, 4
      %v5712 = vrot.slane %v4746, 5
      %v5713 = vor.u32 %v5711, %v5712
      %v5714 = vsel %vm2632, %v5709, %v5713
      %v5715 = vrot.slane %v4752, 4
      %v5716 = vrot.slane %v4755, 5
      %v5717 = vor.u32 %v5715, %v5716
      %v5718 = vsel %vm2632, %v5713, %v5717
      %v5719 = vrot.slane %v4761, 4
      %v5720 = vrot.slane %v4764, 5
      %v5721 = vor.u32 %v5719, %v5720
      %v5722 = vsel %vm2632, %v5717, %v5721
      %v5723 = vrot.slane %v4770, 4
      %v5724 = vrot.slane %v4773, 5
      %v5725 = vor.u32 %v5723, %v5724
      %v5726 = vsel %vm2632, %v5721, %v5725
      %v5727 = vrot.slane %v4779, 4
      %v5728 = vrot.slane %v4782, 5
      %v5729 = vor.u32 %v5727, %v5728
      %v5730 = vsel %vm2632, %v5725, %v5729
      %v5731 = vrot.slane %v4788, 4
      %v5732 = vrot.slane %v4791, 5
      %v5733 = vor.u32 %v5731, %v5732
      %v5734 = vsel %vm2632, %v5729, %v5733
      %v5735 = vrot.slane %v4797, 4
      %v5736 = vrot.slane %v4800, 5
      %v5737 = vor.u32 %v5735, %v5736
      %v5738 = vsel %vm2632, %v5733, %v5737
      %v5739 = vrot.slane %v4806, 4
      %v5740 = vrot.slane %v4809, 5
      %v5741 = vor.u32 %v5739, %v5740
      %v5742 = vsel %vm2632, %v5737, %v5741
      %v5743 = vrot.slane %v4815, 4
      %v5744 = vrot.slane %v4818, 5
      %v5745 = vor.u32 %v5743, %v5744
      %v5746 = vsel %vm2632, %v5741, %v5745
      %v5747 = vrot.slane %v4824, 4
      %v5748 = vrot.slane %v4827, 5
      %v5749 = vor.u32 %v5747, %v5748
      %v5750 = vsel %vm2632, %v5745, %v5749
      %v5751 = vrot.slane %v4833, 4
      %v5752 = vrot.slane %v4836, 5
      %v5753 = vor.u32 %v5751, %v5752
      %v5754 = vsel %vm2632, %v5749, %v5753
      %v5755 = vrot.slane %v4842, 4
      %v5756 = vrot.slane %v4845, 5
      %v5757 = vor.u32 %v5755, %v5756
      %v5758 = vsel %vm2632, %v5753, %v5757
      %v5760 = vshrl.u32 %v5641, 16
      %v5762 = vrot.slane %v5760, 4
      %v5763 = vshll.u32 %v5641, 16
      %v5765 = vrot.slane %v5763, 5
      %v5766 = vor.u32 %v5762, %v5765
      %v5767 = vsel %vm2632, %v5757, %v5766
      %v5808 = vunpack.c.l.b16 %v5643
      %v5809 = vunpack.c.l.b16 %v5644
      %v5810 = vunpack.c.l.b16 %v5645
      %v5811 = vunpack.c.l.b16 %v5646
      %v5812 = vunpack.c.l.b16 %v5647
      %v5813 = vunpack.c.l.b16 %v5648
      %v5814 = vunpack.c.l.b16 %v5649
      %v5815 = vunpack.c.l.b16 %v5650
      %v5816 = vunpack.c.l.b16 %v5651
      %v5817 = vunpack.c.l.b16 %v5652
      %v5818 = vunpack.c.l.b16 %v5653
      %v5819 = vunpack.c.l.b16 %v5654
      %v5820 = vunpack.c.l.b16 %v5655
      %v5821 = vunpack.c.l.b16 %v5656
      %v5822 = vunpack.c.l.b16 %v5657
      %v5823 = vunpack.c.l.b16 %v5658
      %v5824 = vpack.c.b16 %v5809, %v5808
      %v5825 = vpack.c.b16 %v5811, %v5810
      %v5826 = vpack.c.b16 %v5813, %v5812
      %v5827 = vpack.c.b16 %v5815, %v5814
      %v5828 = vpack.c.b16 %v5817, %v5816
      %v5829 = vpack.c.b16 %v5819, %v5818
      %v5830 = vpack.c.b16 %v5821, %v5820
      %v5831 = vpack.c.b16 %v5823, %v5822
      %5840 = vmatprep.subr.bf16.mxu0 0
      %5841 = vmatpush1.bf16.msra.mxu0 %v5824
      %5842 = vmatprep.subr.bf16.mxu0 0
      %5843 = vmatpush1.bf16.msra.mxu0 %v5825
      %5844 = vmatprep.subr.bf16.mxu0 0
      %5845 = vmatpush1.bf16.msra.mxu0 %v5826
      %5846 = vmatprep.subr.bf16.mxu0 0
      %5847 = vmatpush1.bf16.msra.mxu0 %v5827
      %5848 = vmatprep.subr.bf16.mxu0 0
      %5849 = vmatpush1.bf16.msra.mxu0 %v5828
      %5850 = vmatprep.subr.bf16.mxu0 0
      %5851 = vmatpush1.bf16.msra.mxu0 %v5829
      %5852 = vmatprep.subr.bf16.mxu0 0
      %5853 = vmatpush1.bf16.msra.mxu0 %v5830
      %5854 = vmatprep.subr.bf16.mxu0 0
      %5855 = vmatpush1.bf16.msra.mxu0 %v5831
      %5856 = vmatprep.subr.bf16.mxu0 0
      %5857 = vmatpush1.bf16.msra.mxu0 0
      %5858 = vmatprep.subr.bf16.mxu0 0
      %5859 = vmatpush1.bf16.msra.mxu0 0
      %5860 = vmatprep.subr.bf16.mxu0 0
      %5861 = vmatpush1.bf16.msra.mxu0 0
      %5862 = vmatprep.subr.bf16.mxu0 0
      %5863 = vmatpush1.bf16.msra.mxu0 0
      %5864 = vmatprep.subr.bf16.mxu0 0
      %5865 = vmatpush1.bf16.msra.mxu0 0
      %5866 = vmatprep.subr.bf16.mxu0 0
      %5867 = vmatpush1.bf16.msra.mxu0 0
      %5868 = vmatprep.subr.bf16.mxu0 0
      %5869 = vmatpush1.bf16.msra.mxu0 0
      %5870 = vmatprep.subr.bf16.mxu0 0
      %5871 = vmatpush1.bf16.msra.mxu0 0
      %5872 = vmatprep.mubr.bf16.mxu0 0
      %5873 = vmatmul.mubr.bf16.gmra.mrb[0].mxu0 %v5670
      %v5874 = vpop.f32.mrb[0].mxu0
      %v5875 = vadd.f32 0.0, %v5874
      %v5876 = vpop.f32.mrb[0].mxu0
      %v5877 = vpop.f32.mrb[0].mxu0
      %v5878 = vadd.f32 0.0, %v5877
      %v5879 = vpop.f32.mrb[0].mxu0
      %5880 = vmatprep.mubr.bf16.mxu0 0
      %5881 = vmatmul.mubr.bf16.gmra.mrb[0].mxu0 %v5674
      %v5882 = vpop.f32.mrb[0].mxu0
      %v5883 = vadd.f32 0.0, %v5882
      %v5884 = vpop.f32.mrb[0].mxu0
      %v5885 = vpop.f32.mrb[0].mxu0
      %v5886 = vadd.f32 0.0, %v5885
      %v5887 = vpop.f32.mrb[0].mxu0
      %5888 = vmatprep.mubr.bf16.mxu0 0
      %5889 = vmatmul.mubr.bf16.gmra.mrb[0].mxu0 %v5678
      %v5890 = vpop.f32.mrb[0].mxu0
      %v5891 = vadd.f32 0.0, %v5890
      %v5892 = vpop.f32.mrb[0].mxu0
      %v5893 = vpop.f32.mrb[0].mxu0
      %v5894 = vadd.f32 0.0, %v5893
      %v5895 = vpop.f32.mrb[0].mxu0
      %5896 = vmatprep.mubr.bf16.mxu0 0
      %5897 = vmatmul.mubr.bf16.gmra.mrb[0].mxu0 %v5682
      %v5898 = vpop.f32.mrb[0].mxu0
      %v5899 = vadd.f32 0.0, %v5898
      %v5900 = vpop.f32.mrb[0].mxu0
      %v5901 = vpop.f32.mrb[0].mxu0
      %v5902 = vadd.f32 0.0, %v5901
      %v5903 = vpop.f32.mrb[0].mxu0
      %5904 = vmatprep.mubr.bf16.mxu0 0
      %5905 = vmatmul.mubr.bf16.gmra.mrb[0].mxu0 %v5686
      %v5906 = vpop.f32.mrb[0].mxu0
      %v5907 = vadd.f32 0.0, %v5906
      %v5908 = vpop.f32.mrb[0].mxu0
      %v5909 = vpop.f32.mrb[0].mxu0
      %v5910 = vadd.f32 0.0, %v5909
      %v5911 = vpop.f32.mrb[0].mxu0
      %5912 = vmatprep.mubr.bf16.mxu0 0
      %5913 = vmatmul.mubr.bf16.gmra.mrb[0].mxu0 %v5690
      %v5914 = vpop.f32.mrb[0].mxu0
      %v5915 = vadd.f32 0.0, %v5914
      %v5916 = vpop.f32.mrb[0].mxu0
      %v5917 = vpop.f32.mrb[0].mxu0
      %v5918 = vadd.f32 0.0, %v5917
      %v5919 = vpop.f32.mrb[0].mxu0
      %5920 = vmatprep.mubr.bf16.mxu0 0
      %5921 = vmatmul.mubr.bf16.gmra.mrb[0].mxu0 %v5694
      %v5922 = vpop.f32.mrb[0].mxu0
      %v5923 = vadd.f32 0.0, %v5922
      %v5924 = vpop.f32.mrb[0].mxu0
      %v5925 = vpop.f32.mrb[0].mxu0
      %v5926 = vadd.f32 0.0, %v5925
      %v5927 = vpop.f32.mrb[0].mxu0
      %5928 = vmatprep.mubr.bf16.mxu0 0
      %5929 = vmatmul.mubr.bf16.gmra.mrb[0].mxu0 %v5698
      %v5930 = vpop.f32.mrb[0].mxu0
      %v5931 = vadd.f32 0.0, %v5930
      %v5932 = vpop.f32.mrb[0].mxu0
      %v5933 = vpop.f32.mrb[0].mxu0
      %v5934 = vadd.f32 0.0, %v5933
      %v5935 = vpop.f32.mrb[0].mxu0
      %5936 = vmatprep.mubr.bf16.mxu0 0
      %5937 = vmatmul.mubr.bf16.gmra.mrb[0].mxu0 %v5702
      %v5938 = vpop.f32.mrb[0].mxu0
      %v5939 = vadd.f32 0.0, %v5938
      %v5940 = vpop.f32.mrb[0].mxu0
      %v5941 = vpop.f32.mrb[0].mxu0
      %v5942 = vadd.f32 0.0, %v5941
      %v5943 = vpop.f32.mrb[0].mxu0
      %5944 = vmatprep.mubr.bf16.mxu0 0
      %5945 = vmatmul.mubr.bf16.gmra.mrb[0].mxu0 %v5706
      %v5946 = vpop.f32.mrb[0].mxu0
      %v5947 = vadd.f32 0.0, %v5946
      %v5948 = vpop.f32.mrb[0].mxu0
      %v5949 = vpop.f32.mrb[0].mxu0
      %v5950 = vadd.f32 0.0, %v5949
      %v5951 = vpop.f32.mrb[0].mxu0
      %5952 = vmatprep.mubr.bf16.mxu0 0
      %5953 = vmatmul.mubr.bf16.gmra.mrb[0].mxu0 %v5710
      %v5954 = vpop.f32.mrb[0].mxu0
      %v5955 = vadd.f32 0.0, %v5954
      %v5956 = vpop.f32.mrb[0].mxu0
      %v5957 = vpop.f32.mrb[0].mxu0
      %v5958 = vadd.f32 0.0, %v5957
      %v5959 = vpop.f32.mrb[0].mxu0
      %5960 = vmatprep.mubr.bf16.mxu0 0
      %5961 = vmatmul.mubr.bf16.gmra.mrb[0].mxu0 %v5714
      %v5962 = vpop.f32.mrb[0].mxu0
      %v5963 = vadd.f32 0.0, %v5962
      %v5964 = vpop.f32.mrb[0].mxu0
      %v5965 = vpop.f32.mrb[0].mxu0
      %v5966 = vadd.f32 0.0, %v5965
      %v5967 = vpop.f32.mrb[0].mxu0
      %5968 = vmatprep.mubr.bf16.mxu0 0
      %5969 = vmatmul.mubr.bf16.gmra.mrb[0].mxu0 %v5718
      %v5970 = vpop.f32.mrb[0].mxu0
      %v5971 = vadd.f32 0.0, %v5970
      %v5972 = vpop.f32.mrb[0].mxu0
      %v5973 = vpop.f32.mrb[0].mxu0
      %v5974 = vadd.f32 0.0, %v5973
      %v5975 = vpop.f32.mrb[0].mxu0
      %5976 = vmatprep.mubr.bf16.mxu0 0
      %5977 = vmatmul.mubr.bf16.gmra.mrb[0].mxu0 %v5722
      %v5978 = vpop.f32.mrb[0].mxu0
      %v5979 = vadd.f32 0.0, %v5978
      %v5980 = vpop.f32.mrb[0].mxu0
      %v5981 = vpop.f32.mrb[0].mxu0
      %v5982 = vadd.f32 0.0, %v5981
      %v5983 = vpop.f32.mrb[0].mxu0
      %5984 = vmatprep.mubr.bf16.mxu0 0
      %5985 = vmatmul.mubr.bf16.gmra.mrb[0].mxu0 %v5726
      %v5986 = vpop.f32.mrb[0].mxu0
      %v5987 = vadd.f32 0.0, %v5986
      %v5988 = vpop.f32.mrb[0].mxu0
      %v5989 = vpop.f32.mrb[0].mxu0
      %v5990 = vadd.f32 0.0, %v5989
      %v5991 = vpop.f32.mrb[0].mxu0
      %5992 = vmatprep.mubr.bf16.mxu0 0
      %5993 = vmatmul.mubr.bf16.gmra.mrb[0].mxu0 %v5730
      %v5994 = vpop.f32.mrb[0].mxu0
      %v5995 = vadd.f32 0.0, %v5994
      %v5996 = vpop.f32.mrb[0].mxu0
      %v5997 = vpop.f32.mrb[0].mxu0
      %v5998 = vadd.f32 0.0, %v5997
      %v5999 = vpop.f32.mrb[0].mxu0
      %6000 = vmatprep.mubr.bf16.mxu0 0
      %6001 = vmatmul.mubr.bf16.gmra.mrb[0].mxu0 %v5734
      %v6002 = vpop.f32.mrb[0].mxu0
      %v6003 = vadd.f32 0.0, %v6002
      %v6004 = vpop.f32.mrb[0].mxu0
      %v6005 = vpop.f32.mrb[0].mxu0
      %v6006 = vadd.f32 0.0, %v6005
      %v6007 = vpop.f32.mrb[0].mxu0
      %6008 = vmatprep.mubr.bf16.mxu0 0
      %6009 = vmatmul.mubr.bf16.gmra.mrb[0].mxu0 %v5738
      %v6010 = vpop.f32.mrb[0].mxu0
      %v6011 = vadd.f32 0.0, %v6010
      %v6012 = vpop.f32.mrb[0].mxu0
      %v6013 = vpop.f32.mrb[0].mxu0
      %v6014 = vadd.f32 0.0, %v6013
      %v6015 = vpop.f32.mrb[0].mxu0
      %6016 = vmatprep.mubr.bf16.mxu0 0
      %6017 = vmatmul.mubr.bf16.gmra.mrb[0].mxu0 %v5742
      %v6018 = vpop.f32.mrb[0].mxu0
      %v6019 = vadd.f32 0.0, %v6018
      %v6020 = vpop.f32.mrb[0].mxu0
      %v6021 = vpop.f32.mrb[0].mxu0
      %v6022 = vadd.f32 0.0, %v6021
      %v6023 = vpop.f32.mrb[0].mxu0
      %6024 = vmatprep.mubr.bf16.mxu0 0
      %6025 = vmatmul.mubr.bf16.gmra.mrb[0].mxu0 %v5746
      %v6026 = vpop.f32.mrb[0].mxu0
      %v6027 = vadd.f32 0.0, %v6026
      %v6028 = vpop.f32.mrb[0].mxu0
      %v6029 = vpop.f32.mrb[0].mxu0
      %v6030 = vadd.f32 0.0, %v6029
      %v6031 = vpop.f32.mrb[0].mxu0
      %6032 = vmatprep.mubr.bf16.mxu0 0
      %6033 = vmatmul.mubr.bf16.gmra.mrb[0].mxu0 %v5750
      %v6034 = vpop.f32.mrb[0].mxu0
      %v6035 = vadd.f32 0.0, %v6034
      %v6036 = vpop.f32.mrb[0].mxu0
      %v6037 = vpop.f32.mrb[0].mxu0
      %v6038 = vadd.f32 0.0, %v6037
      %v6039 = vpop.f32.mrb[0].mxu0
      %6040 = vmatprep.mubr.bf16.mxu0 0
      %6041 = vmatmul.mubr.bf16.gmra.mrb[0].mxu0 %v5754
      %v6042 = vpop.f32.mrb[0].mxu0
      %v6043 = vadd.f32 0.0, %v6042
      %v6044 = vpop.f32.mrb[0].mxu0
      %v6045 = vpop.f32.mrb[0].mxu0
      %v6046 = vadd.f32 0.0, %v6045
      %v6047 = vpop.f32.mrb[0].mxu0
      %6048 = vmatprep.mubr.bf16.mxu0 0
      %6049 = vmatmul.mubr.bf16.gmra.mrb[0].mxu0 %v5758
      %v6050 = vpop.f32.mrb[0].mxu0
      %v6051 = vadd.f32 0.0, %v6050
      %v6052 = vpop.f32.mrb[0].mxu0
      %v6053 = vpop.f32.mrb[0].mxu0
      %v6054 = vadd.f32 0.0, %v6053
      %v6055 = vpop.f32.mrb[0].mxu0
      %6056 = vmatprep.mubr.bf16.mxu0 0
      %6057 = vmatmul.mubr.bf16.gmra.mrb[0].mxu0 %v5767
      %v6058 = vpop.f32.mrb[0].mxu0
      %v6059 = vadd.f32 0.0, %v6058
      %v6060 = vpop.f32.mrb[0].mxu0
      %v6061 = vpop.f32.mrb[0].mxu0
      %v6062 = vadd.f32 0.0, %v6061
      %v6063 = vpop.f32.mrb[0].mxu0
      %6064 = vdwg.mxu0
      %v6065 = vadd.f32 %v5593, %v5875
      %v6066 = vadd.f32 %v5594, %v5878
      %v6067 = vadd.f32 %v5595, %v5883
      %v6068 = vadd.f32 %v5596, %v5886
      %v6069 = vadd.f32 %v5597, %v5891
      %v6070 = vadd.f32 %v5598, %v5894
      %v6071 = vadd.f32 %v5599, %v5899
      %v6072 = vadd.f32 %v5600, %v5902
      %v6073 = vadd.f32 %v5601, %v5907
      %v6074 = vadd.f32 %v5602, %v5910
      %v6075 = vadd.f32 %v5603, %v5915
      %v6076 = vadd.f32 %v5604, %v5918
      %v6077 = vadd.f32 %v5605, %v5923
      %v6078 = vadd.f32 %v5606, %v5926
      %v6079 = vadd.f32 %v5607, %v5931
      %v6080 = vadd.f32 %v5608, %v5934
      %v6081 = vadd.f32 %v5609, %v5939
      %v6082 = vadd.f32 %v5610, %v5942
      %v6083 = vadd.f32 %v5611, %v5947
      %v6084 = vadd.f32 %v5612, %v5950
      %v6085 = vadd.f32 %v5613, %v5955
      %v6086 = vadd.f32 %v5614, %v5958
      %v6087 = vadd.f32 %v5615, %v5963
      %v6088 = vadd.f32 %v5616, %v5966
      %v6089 = vadd.f32 %v5617, %v5971
      %v6090 = vadd.f32 %v5618, %v5974
      %v6091 = vadd.f32 %v5619, %v5979
      %v6092 = vadd.f32 %v5620, %v5982
      %v6093 = vadd.f32 %v5621, %v5987
      %v6094 = vadd.f32 %v5622, %v5990
      %v6095 = vadd.f32 %v5623, %v5995
      %v6096 = vadd.f32 %v5624, %v5998
      %v6097 = vadd.f32 %v5625, %v6003
      %v6098 = vadd.f32 %v5626, %v6006
      %v6099 = vadd.f32 %v5627, %v6011
      %v6100 = vadd.f32 %v5628, %v6014
      %v6101 = vadd.f32 %v5629, %v6019
      %v6102 = vadd.f32 %v5630, %v6022
      %v6103 = vadd.f32 %v5631, %v6027
      %v6104 = vadd.f32 %v5632, %v6030
      %v6105 = vadd.f32 %v5633, %v6035
      %v6106 = vadd.f32 %v5634, %v6038
      %v6107 = vadd.f32 %v5635, %v6043
      %v6108 = vadd.f32 %v5636, %v6046
      %v6109 = vadd.f32 %v5637, %v6051
      %v6110 = vadd.f32 %v5638, %v6054
      %v6111 = vadd.f32 %v5639, %v6059
      %v6112 = vadd.f32 %v5640, %v6062
      %v6113 = vld [vmem:[%s4] sm:$0x1]
      %v6115 = vlaneseq
      %v6116 = vshrl.u32 %v6115, 7
      %v6117 = vsub.s32 0, %v6116
      %v6118 = vrot.slane %v6113, %v6117
      %v6120 = vadd.f32 %v6065, %v6118
      %v6121 = vadd.f32 %v6066, %v6118
      %v6122 = vadd.f32 %v6067, %v6118
      %v6123 = vadd.f32 %v6068, %v6118
      %v6124 = vadd.f32 %v6069, %v6118
      %v6125 = vadd.f32 %v6070, %v6118
      %v6126 = vadd.f32 %v6071, %v6118
      %v6127 = vadd.f32 %v6072, %v6118
      %v6128 = vadd.f32 %v6073, %v6118
      %v6129 = vadd.f32 %v6074, %v6118
      %v6130 = vadd.f32 %v6075, %v6118
      %v6131 = vadd.f32 %v6076, %v6118
      %v6132 = vadd.f32 %v6077, %v6118
      %v6133 = vadd.f32 %v6078, %v6118
      %v6134 = vadd.f32 %v6079, %v6118
      %v6135 = vadd.f32 %v6080, %v6118
      %v6136 = vadd.f32 %v6081, %v6118
      %v6137 = vadd.f32 %v6082, %v6118
      %v6138 = vadd.f32 %v6083, %v6118
      %v6139 = vadd.f32 %v6084, %v6118
      %v6140 = vadd.f32 %v6085, %v6118
      %v6141 = vadd.f32 %v6086, %v6118
      %v6142 = vadd.f32 %v6087, %v6118
      %v6143 = vadd.f32 %v6088, %v6118
      %v6144 = vadd.f32 %v6089, %v6118
      %v6145 = vadd.f32 %v6090, %v6118
      %v6146 = vadd.f32 %v6091, %v6118
      %v6147 = vadd.f32 %v6092, %v6118
      %v6148 = vadd.f32 %v6093, %v6118
      %v6149 = vadd.f32 %v6094, %v6118
      %v6150 = vadd.f32 %v6095, %v6118
      %v6151 = vadd.f32 %v6096, %v6118
      %v6152 = vadd.f32 %v6097, %v6118
      %v6153 = vadd.f32 %v6098, %v6118
      %v6154 = vadd.f32 %v6099, %v6118
      %v6155 = vadd.f32 %v6100, %v6118
      %v6156 = vadd.f32 %v6101, %v6118
      %v6157 = vadd.f32 %v6102, %v6118
      %v6158 = vadd.f32 %v6103, %v6118
      %v6159 = vadd.f32 %v6104, %v6118
      %v6160 = vadd.f32 %v6105, %v6118
      %v6161 = vadd.f32 %v6106, %v6118
      %v6162 = vadd.f32 %v6107, %v6118
      %v6163 = vadd.f32 %v6108, %v6118
      %v6164 = vadd.f32 %v6109, %v6118
      %v6165 = vadd.f32 %v6110, %v6118
      %v6166 = vadd.f32 %v6111, %v6118
      %v6167 = vadd.f32 %v6112, %v6118
      %v6168 = vmax.f32 %v6120, 0.0
      %v6169 = vmax.f32 %v6121, 0.0
      %v6170 = vmax.f32 %v6122, 0.0
      %v6171 = vmax.f32 %v6123, 0.0
      %v6172 = vmax.f32 %v6124, 0.0
      %v6173 = vmax.f32 %v6125, 0.0
      %v6174 = vmax.f32 %v6126, 0.0
      %v6175 = vmax.f32 %v6127, 0.0
      %v6176 = vmax.f32 %v6128, 0.0
      %v6177 = vmax.f32 %v6129, 0.0
      %v6178 = vmax.f32 %v6130, 0.0
      %v6179 = vmax.f32 %v6131, 0.0
      %v6180 = vmax.f32 %v6132, 0.0
      %v6181 = vmax.f32 %v6133, 0.0
      %v6182 = vmax.f32 %v6134, 0.0
      %v6183 = vmax.f32 %v6135, 0.0
      %v6184 = vmax.f32 %v6136, 0.0
      %v6185 = vmax.f32 %v6137, 0.0
      %v6186 = vmax.f32 %v6138, 0.0
      %v6187 = vmax.f32 %v6139, 0.0
      %v6188 = vmax.f32 %v6140, 0.0
      %v6189 = vmax.f32 %v6141, 0.0
      %v6190 = vmax.f32 %v6142, 0.0
      %v6191 = vmax.f32 %v6143, 0.0
      %v6192 = vmax.f32 %v6144, 0.0
      %v6193 = vmax.f32 %v6145, 0.0
      %v6194 = vmax.f32 %v6146, 0.0
      %v6195 = vmax.f32 %v6147, 0.0
      %v6196 = vmax.f32 %v6148, 0.0
      %v6197 = vmax.f32 %v6149, 0.0
      %v6198 = vmax.f32 %v6150, 0.0
      %v6199 = vmax.f32 %v6151, 0.0
      %v6200 = vmax.f32 %v6152, 0.0
      %v6201 = vmax.f32 %v6153, 0.0
      %v6202 = vmax.f32 %v6154, 0.0
      %v6203 = vmax.f32 %v6155, 0.0
      %v6204 = vmax.f32 %v6156, 0.0
      %v6205 = vmax.f32 %v6157, 0.0
      %v6206 = vmax.f32 %v6158, 0.0
      %v6207 = vmax.f32 %v6159, 0.0
      %v6208 = vmax.f32 %v6160, 0.0
      %v6209 = vmax.f32 %v6161, 0.0
      %v6210 = vmax.f32 %v6162, 0.0
      %v6211 = vmax.f32 %v6163, 0.0
      %v6212 = vmax.f32 %v6164, 0.0
      %v6213 = vmax.f32 %v6165, 0.0
      %v6214 = vmax.f32 %v6166, 0.0
      %v6215 = vmax.f32 %v6167, 0.0
      %v6216 = vpack.c.bf16 %v6169, %v6168
      %v6217 = vpack.c.bf16 %v6171, %v6170
      %v6218 = vpack.c.bf16 %v6173, %v6172
      %v6219 = vpack.c.bf16 %v6175, %v6174
      %v6220 = vpack.c.bf16 %v6177, %v6176
      %v6221 = vpack.c.bf16 %v6179, %v6178
      %v6222 = vpack.c.bf16 %v6181, %v6180
      %v6223 = vpack.c.bf16 %v6183, %v6182
      %v6224 = vpack.c.bf16 %v6185, %v6184
      %v6225 = vpack.c.bf16 %v6187, %v6186
      %v6226 = vpack.c.bf16 %v6189, %v6188
      %v6227 = vpack.c.bf16 %v6191, %v6190
      %v6228 = vpack.c.bf16 %v6193, %v6192
      %v6229 = vpack.c.bf16 %v6195, %v6194
      %v6230 = vpack.c.bf16 %v6197, %v6196
      %v6231 = vpack.c.bf16 %v6199, %v6198
      %v6232 = vpack.c.bf16 %v6201, %v6200
      %v6233 = vpack.c.bf16 %v6203, %v6202
      %v6234 = vpack.c.bf16 %v6205, %v6204
      %v6235 = vpack.c.bf16 %v6207, %v6206
      %v6236 = vpack.c.bf16 %v6209, %v6208
      %v6237 = vpack.c.bf16 %v6211, %v6210
      %v6238 = vpack.c.bf16 %v6213, %v6212
      %v6239 = vpack.c.bf16 %v6215, %v6214
      %v6240 = vld [vmem:[%s5] sm:$0xf]
      %v6241 = vld [vmem:[%s5 + $0x4] sm:$0xf]
      %v6242 = vld [vmem:[%s5 + $0x8] sm:$0xf]
      %v6243 = vld [vmem:[%s5 + $0xc] sm:$0xf]
      %v6244 = vld [vmem:[%s5 + $0x10] sm:$0xf]
      %v6245 = vld [vmem:[%s5 + $0x14] sm:$0xf]
      %v6246 = vld [vmem:[%s5 + $0x18] sm:$0xf]
      %v6247 = vld [vmem:[%s5 + $0x1c] sm:$0xf]
      %v6248 = vld [vmem:[%s5 + $0x20] sm:$0xf]
      %v6249 = vld [vmem:[%s5 + $0x24] sm:$0xf]
      %v6250 = vld [vmem:[%s5 + $0x28] sm:$0xf]
      %v6251 = vld [vmem:[%s5 + $0x2c] sm:$0xf]
      %v6252 = vld [vmem:[%s5 + $0x30] sm:$0xf]
      %v6253 = vld [vmem:[%s5 + $0x34] sm:$0xf]
      %v6254 = vld [vmem:[%s5 + $0x38] sm:$0xf]
      %v6255 = vld [vmem:[%s5 + $0x3c] sm:$0xf]
      %v6256 = vld [vmem:[%s6] sm:$0x1]
      %v6258 = vlaneseq
      %v6259 = vshrl.u32 %v6258, 7
      %v6260 = vsub.s32 0, %v6259
      %v6261 = vrot.slane %v6256, %v6260
      %v6279 = vunpack.c.l.b16 %v6240
      %v6280 = vunpack.c.l.b16 %v6241
      %v6281 = vunpack.c.l.b16 %v6242
      %v6282 = vunpack.c.l.b16 %v6243
      %v6283 = vunpack.c.l.b16 %v6244
      %v6284 = vunpack.c.l.b16 %v6245
      %v6285 = vunpack.c.l.b16 %v6246
      %v6286 = vunpack.c.l.b16 %v6247
      %v6287 = vunpack.c.l.b16 %v6248
      %v6288 = vunpack.c.l.b16 %v6249
      %v6289 = vunpack.c.l.b16 %v6250
      %v6290 = vunpack.c.l.b16 %v6251
      %v6291 = vunpack.c.l.b16 %v6252
      %v6292 = vunpack.c.l.b16 %v6253
      %v6293 = vunpack.c.l.b16 %v6254
      %v6294 = vunpack.c.l.b16 %v6255
      %v6295 = vpack.c.b16 %v6280, %v6279
      %v6296 = vpack.c.b16 %v6282, %v6281
      %v6297 = vpack.c.b16 %v6284, %v6283
      %v6298 = vpack.c.b16 %v6286, %v6285
      %v6299 = vpack.c.b16 %v6288, %v6287
      %v6300 = vpack.c.b16 %v6290, %v6289
      %v6301 = vpack.c.b16 %v6292, %v6291
      %v6302 = vpack.c.b16 %v6294, %v6293
      %6311 = vmatprep.subr.bf16.mxu0 0
      %6312 = vmatpush1.bf16.msra.mxu0 %v6295
      %6313 = vmatprep.subr.bf16.mxu0 0
      %6314 = vmatpush1.bf16.msra.mxu0 %v6296
      %6315 = vmatprep.subr.bf16.mxu0 0
      %6316 = vmatpush1.bf16.msra.mxu0 %v6297
      %6317 = vmatprep.subr.bf16.mxu0 0
      %6318 = vmatpush1.bf16.msra.mxu0 %v6298
      %6319 = vmatprep.subr.bf16.mxu0 0
      %6320 = vmatpush1.bf16.msra.mxu0 %v6299
      %6321 = vmatprep.subr.bf16.mxu0 0
      %6322 = vmatpush1.bf16.msra.mxu0 %v6300
      %6323 = vmatprep.subr.bf16.mxu0 0
      %6324 = vmatpush1.bf16.msra.mxu0 %v6301
      %6325 = vmatprep.subr.bf16.mxu0 0
      %6326 = vmatpush1.bf16.msra.mxu0 %v6302
      %6327 = vmatprep.subr.bf16.mxu0 0
      %6328 = vmatpush1.bf16.msra.mxu0 0
      %6329 = vmatprep.subr.bf16.mxu0 0
      %6330 = vmatpush1.bf16.msra.mxu0 0
      %6331 = vmatprep.subr.bf16.mxu0 0
      %6332 = vmatpush1.bf16.msra.mxu0 0
      %6333 = vmatprep.subr.bf16.mxu0 0
      %6334 = vmatpush1.bf16.msra.mxu0 0
      %6335 = vmatprep.subr.bf16.mxu0 0
      %6336 = vmatpush1.bf16.msra.mxu0 0
      %6337 = vmatprep.subr.bf16.mxu0 0
      %6338 = vmatpush1.bf16.msra.mxu0 0
      %6339 = vmatprep.subr.bf16.mxu0 0
      %6340 = vmatpush1.bf16.msra.mxu0 0
      %6341 = vmatprep.subr.bf16.mxu0 0
      %6342 = vmatpush1.bf16.msra.mxu0 0
      %6343 = vmatprep.mubr.bf16.mxu0 0
      %6344 = vmatmul.mubr.bf16.gmra.mrb[0].mxu0 %v6216
      %v6345 = vpop.f32.mrb[0].mxu0
      %v6346 = vadd.f32 %v6261, %v6345
      %v6347 = vpop.f32.mrb[0].mxu0
      %v6348 = vpop.f32.mrb[0].mxu0
      %v6349 = vadd.f32 %v6261, %v6348
      %v6350 = vpop.f32.mrb[0].mxu0
      %6351 = vmatprep.mubr.bf16.mxu0 0
      %6352 = vmatmul.mubr.bf16.gmra.mrb[0].mxu0 %v6217
      %v6353 = vpop.f32.mrb[0].mxu0
      %v6354 = vadd.f32 %v6261, %v6353
      %v6355 = vpop.f32.mrb[0].mxu0
      %v6356 = vpop.f32.mrb[0].mxu0
      %v6357 = vadd.f32 %v6261, %v6356
      %v6358 = vpop.f32.mrb[0].mxu0
      %6359 = vmatprep.mubr.bf16.mxu0 0
      %6360 = vmatmul.mubr.bf16.gmra.mrb[0].mxu0 %v6218
      %v6361 = vpop.f32.mrb[0].mxu0
      %v6362 = vadd.f32 %v6261, %v6361
      %v6363 = vpop.f32.mrb[0].mxu0
      %v6364 = vpop.f32.mrb[0].mxu0
      %v6365 = vadd.f32 %v6261, %v6364
      %v6366 = vpop.f32.mrb[0].mxu0
      %6367 = vmatprep.mubr.bf16.mxu0 0
      %6368 = vmatmul.mubr.bf16.gmra.mrb[0].mxu0 %v6219
      %v6369 = vpop.f32.mrb[0].mxu0
      %v6370 = vadd.f32 %v6261, %v6369
      %v6371 = vpop.f32.mrb[0].mxu0
      %v6372 = vpop.f32.mrb[0].mxu0
      %v6373 = vadd.f32 %v6261, %v6372
      %v6374 = vpop.f32.mrb[0].mxu0
      %6375 = vmatprep.mubr.bf16.mxu0 0
      %6376 = vmatmul.mubr.bf16.gmra.mrb[0].mxu0 %v6220
      %v6377 = vpop.f32.mrb[0].mxu0
      %v6378 = vadd.f32 %v6261, %v6377
      %v6379 = vpop.f32.mrb[0].mxu0
      %v6380 = vpop.f32.mrb[0].mxu0
      %v6381 = vadd.f32 %v6261, %v6380
      %v6382 = vpop.f32.mrb[0].mxu0
      %6383 = vmatprep.mubr.bf16.mxu0 0
      %6384 = vmatmul.mubr.bf16.gmra.mrb[0].mxu0 %v6221
      %v6385 = vpop.f32.mrb[0].mxu0
      %v6386 = vadd.f32 %v6261, %v6385
      %v6387 = vpop.f32.mrb[0].mxu0
      %v6388 = vpop.f32.mrb[0].mxu0
      %v6389 = vadd.f32 %v6261, %v6388
      %v6390 = vpop.f32.mrb[0].mxu0
      %6391 = vmatprep.mubr.bf16.mxu0 0
      %6392 = vmatmul.mubr.bf16.gmra.mrb[0].mxu0 %v6222
      %v6393 = vpop.f32.mrb[0].mxu0
      %v6394 = vadd.f32 %v6261, %v6393
      %v6395 = vpop.f32.mrb[0].mxu0
      %v6396 = vpop.f32.mrb[0].mxu0
      %v6397 = vadd.f32 %v6261, %v6396
      %v6398 = vpop.f32.mrb[0].mxu0
      %6399 = vmatprep.mubr.bf16.mxu0 0
      %6400 = vmatmul.mubr.bf16.gmra.mrb[0].mxu0 %v6223
      %v6401 = vpop.f32.mrb[0].mxu0
      %v6402 = vadd.f32 %v6261, %v6401
      %v6403 = vpop.f32.mrb[0].mxu0
      %v6404 = vpop.f32.mrb[0].mxu0
      %v6405 = vadd.f32 %v6261, %v6404
      %v6406 = vpop.f32.mrb[0].mxu0
      %6407 = vmatprep.mubr.bf16.mxu0 0
      %6408 = vmatmul.mubr.bf16.gmra.mrb[0].mxu0 %v6224
      %v6409 = vpop.f32.mrb[0].mxu0
      %v6410 = vadd.f32 %v6261, %v6409
      %v6411 = vpop.f32.mrb[0].mxu0
      %v6412 = vpop.f32.mrb[0].mxu0
      %v6413 = vadd.f32 %v6261, %v6412
      %v6414 = vpop.f32.mrb[0].mxu0
      %6415 = vmatprep.mubr.bf16.mxu0 0
      %6416 = vmatmul.mubr.bf16.gmra.mrb[0].mxu0 %v6225
      %v6417 = vpop.f32.mrb[0].mxu0
      %v6418 = vadd.f32 %v6261, %v6417
      %v6419 = vpop.f32.mrb[0].mxu0
      %v6420 = vpop.f32.mrb[0].mxu0
      %v6421 = vadd.f32 %v6261, %v6420
      %v6422 = vpop.f32.mrb[0].mxu0
      %6423 = vmatprep.mubr.bf16.mxu0 0
      %6424 = vmatmul.mubr.bf16.gmra.mrb[0].mxu0 %v6226
      %v6425 = vpop.f32.mrb[0].mxu0
      %v6426 = vadd.f32 %v6261, %v6425
      %v6427 = vpop.f32.mrb[0].mxu0
      %v6428 = vpop.f32.mrb[0].mxu0
      %v6429 = vadd.f32 %v6261, %v6428
      %v6430 = vpop.f32.mrb[0].mxu0
      %6431 = vmatprep.mubr.bf16.mxu0 0
      %6432 = vmatmul.mubr.bf16.gmra.mrb[0].mxu0 %v6227
      %v6433 = vpop.f32.mrb[0].mxu0
      %v6434 = vadd.f32 %v6261, %v6433
      %v6435 = vpop.f32.mrb[0].mxu0
      %v6436 = vpop.f32.mrb[0].mxu0
      %v6437 = vadd.f32 %v6261, %v6436
      %v6438 = vpop.f32.mrb[0].mxu0
      %6439 = vmatprep.mubr.bf16.mxu0 0
      %6440 = vmatmul.mubr.bf16.gmra.mrb[0].mxu0 %v6228
      %v6441 = vpop.f32.mrb[0].mxu0
      %v6442 = vadd.f32 %v6261, %v6441
      %v6443 = vpop.f32.mrb[0].mxu0
      %v6444 = vpop.f32.mrb[0].mxu0
      %v6445 = vadd.f32 %v6261, %v6444
      %v6446 = vpop.f32.mrb[0].mxu0
      %6447 = vmatprep.mubr.bf16.mxu0 0
      %6448 = vmatmul.mubr.bf16.gmra.mrb[0].mxu0 %v6229
      %v6449 = vpop.f32.mrb[0].mxu0
      %v6450 = vadd.f32 %v6261, %v6449
      %v6451 = vpop.f32.mrb[0].mxu0
      %v6452 = vpop.f32.mrb[0].mxu0
      %v6453 = vadd.f32 %v6261, %v6452
      %v6454 = vpop.f32.mrb[0].mxu0
      %6455 = vmatprep.mubr.bf16.mxu0 0
      %6456 = vmatmul.mubr.bf16.gmra.mrb[0].mxu0 %v6230
      %v6457 = vpop.f32.mrb[0].mxu0
      %v6458 = vadd.f32 %v6261, %v6457
      %v6459 = vpop.f32.mrb[0].mxu0
      %v6460 = vpop.f32.mrb[0].mxu0
      %v6461 = vadd.f32 %v6261, %v6460
      %v6462 = vpop.f32.mrb[0].mxu0
      %6463 = vmatprep.mubr.bf16.mxu0 0
      %6464 = vmatmul.mubr.bf16.gmra.mrb[0].mxu0 %v6231
      %v6465 = vpop.f32.mrb[0].mxu0
      %v6466 = vadd.f32 %v6261, %v6465
      %v6467 = vpop.f32.mrb[0].mxu0
      %v6468 = vpop.f32.mrb[0].mxu0
      %v6469 = vadd.f32 %v6261, %v6468
      %v6470 = vpop.f32.mrb[0].mxu0
      %6471 = vmatprep.mubr.bf16.mxu0 0
      %6472 = vmatmul.mubr.bf16.gmra.mrb[0].mxu0 %v6232
      %v6473 = vpop.f32.mrb[0].mxu0
      %v6474 = vadd.f32 %v6261, %v6473
      %v6475 = vpop.f32.mrb[0].mxu0
      %v6476 = vpop.f32.mrb[0].mxu0
      %v6477 = vadd.f32 %v6261, %v6476
      %v6478 = vpop.f32.mrb[0].mxu0
      %6479 = vmatprep.mubr.bf16.mxu0 0
      %6480 = vmatmul.mubr.bf16.gmra.mrb[0].mxu0 %v6233
      %v6481 = vpop.f32.mrb[0].mxu0
      %v6482 = vadd.f32 %v6261, %v6481
      %v6483 = vpop.f32.mrb[0].mxu0
      %v6484 = vpop.f32.mrb[0].mxu0
      %v6485 = vadd.f32 %v6261, %v6484
      %v6486 = vpop.f32.mrb[0].mxu0
      %6487 = vmatprep.mubr.bf16.mxu0 0
      %6488 = vmatmul.mubr.bf16.gmra.mrb[0].mxu0 %v6234
      %v6489 = vpop.f32.mrb[0].mxu0
      %v6490 = vadd.f32 %v6261, %v6489
      %v6491 = vpop.f32.mrb[0].mxu0
      %v6492 = vpop.f32.mrb[0].mxu0
      %v6493 = vadd.f32 %v6261, %v6492
      %v6494 = vpop.f32.mrb[0].mxu0
      %6495 = vmatprep.mubr.bf16.mxu0 0
      %6496 = vmatmul.mubr.bf16.gmra.mrb[0].mxu0 %v6235
      %v6497 = vpop.f32.mrb[0].mxu0
      %v6498 = vadd.f32 %v6261, %v6497
      %v6499 = vpop.f32.mrb[0].mxu0
      %v6500 = vpop.f32.mrb[0].mxu0
      %v6501 = vadd.f32 %v6261, %v6500
      %v6502 = vpop.f32.mrb[0].mxu0
      %6503 = vmatprep.mubr.bf16.mxu0 0
      %6504 = vmatmul.mubr.bf16.gmra.mrb[0].mxu0 %v6236
      %v6505 = vpop.f32.mrb[0].mxu0
      %v6506 = vadd.f32 %v6261, %v6505
      %v6507 = vpop.f32.mrb[0].mxu0
      %v6508 = vpop.f32.mrb[0].mxu0
      %v6509 = vadd.f32 %v6261, %v6508
      %v6510 = vpop.f32.mrb[0].mxu0
      %6511 = vmatprep.mubr.bf16.mxu0 0
      %6512 = vmatmul.mubr.bf16.gmra.mrb[0].mxu0 %v6237
      %v6513 = vpop.f32.mrb[0].mxu0
      %v6514 = vadd.f32 %v6261, %v6513
      %v6515 = vpop.f32.mrb[0].mxu0
      %v6516 = vpop.f32.mrb[0].mxu0
      %v6517 = vadd.f32 %v6261, %v6516
      %v6518 = vpop.f32.mrb[0].mxu0
      %6519 = vmatprep.mubr.bf16.mxu0 0
      %6520 = vmatmul.mubr.bf16.gmra.mrb[0].mxu0 %v6238
      %v6521 = vpop.f32.mrb[0].mxu0
      %v6522 = vadd.f32 %v6261, %v6521
      %v6523 = vpop.f32.mrb[0].mxu0
      %v6524 = vpop.f32.mrb[0].mxu0
      %v6525 = vadd.f32 %v6261, %v6524
      %v6526 = vpop.f32.mrb[0].mxu0
      %6527 = vmatprep.mubr.bf16.mxu0 0
      %6528 = vmatmul.mubr.bf16.gmra.mrb[0].mxu0 %v6239
      %v6529 = vpop.f32.mrb[0].mxu0
      %v6530 = vadd.f32 %v6261, %v6529
      %v6531 = vpop.f32.mrb[0].mxu0
      %v6532 = vpop.f32.mrb[0].mxu0
      %v6533 = vadd.f32 %v6261, %v6532
      %v6534 = vpop.f32.mrb[0].mxu0
      %6535 = vdwg.mxu0
      %v6536 = vadd.f32 %v6346, %v280
      %v6537 = vadd.f32 %v6349, %v281
      %v6538 = vadd.f32 %v6354, %v282
      %v6539 = vadd.f32 %v6357, %v283
      %v6540 = vadd.f32 %v6362, %v284
      %v6541 = vadd.f32 %v6365, %v285
      %v6542 = vadd.f32 %v6370, %v286
      %v6543 = vadd.f32 %v6373, %v287
      %v6544 = vadd.f32 %v6378, %v288
      %v6545 = vadd.f32 %v6381, %v289
      %v6546 = vadd.f32 %v6386, %v290
      %v6547 = vadd.f32 %v6389, %v291
      %v6548 = vadd.f32 %v6394, %v292
      %v6549 = vadd.f32 %v6397, %v293
      %v6550 = vadd.f32 %v6402, %v294
      %v6551 = vadd.f32 %v6405, %v295
      %v6552 = vadd.f32 %v6410, %v296
      %v6553 = vadd.f32 %v6413, %v297
      %v6554 = vadd.f32 %v6418, %v298
      %v6555 = vadd.f32 %v6421, %v299
      %v6556 = vadd.f32 %v6426, %v300
      %v6557 = vadd.f32 %v6429, %v301
      %v6558 = vadd.f32 %v6434, %v302
      %v6559 = vadd.f32 %v6437, %v303
      %v6560 = vadd.f32 %v6442, %v304
      %v6561 = vadd.f32 %v6445, %v305
      %v6562 = vadd.f32 %v6450, %v306
      %v6563 = vadd.f32 %v6453, %v307
      %v6564 = vadd.f32 %v6458, %v308
      %v6565 = vadd.f32 %v6461, %v309
      %v6566 = vadd.f32 %v6466, %v310
      %v6567 = vadd.f32 %v6469, %v311
      %v6568 = vadd.f32 %v6474, %v312
      %v6569 = vadd.f32 %v6477, %v313
      %v6570 = vadd.f32 %v6482, %v314
      %v6571 = vadd.f32 %v6485, %v315
      %v6572 = vadd.f32 %v6490, %v316
      %v6573 = vadd.f32 %v6493, %v317
      %v6574 = vadd.f32 %v6498, %v318
      %v6575 = vadd.f32 %v6501, %v319
      %v6576 = vadd.f32 %v6506, %v320
      %v6577 = vadd.f32 %v6509, %v321
      %v6578 = vadd.f32 %v6514, %v322
      %v6579 = vadd.f32 %v6517, %v323
      %v6580 = vadd.f32 %v6522, %v324
      %v6581 = vadd.f32 %v6525, %v325
      %v6582 = vadd.f32 %v6530, %v326
      %v6583 = vadd.f32 %v6533, %v327
      %v6584 = vmax.f32 %v6536, 0.0
      %v6585 = vmax.f32 %v6537, 0.0
      %v6586 = vmax.f32 %v6538, 0.0
      %v6587 = vmax.f32 %v6539, 0.0
      %v6588 = vmax.f32 %v6540, 0.0
      %v6589 = vmax.f32 %v6541, 0.0
      %v6590 = vmax.f32 %v6542, 0.0
      %v6591 = vmax.f32 %v6543, 0.0
      %v6592 = vmax.f32 %v6544, 0.0
      %v6593 = vmax.f32 %v6545, 0.0
      %v6594 = vmax.f32 %v6546, 0.0
      %v6595 = vmax.f32 %v6547, 0.0
      %v6596 = vmax.f32 %v6548, 0.0
      %v6597 = vmax.f32 %v6549, 0.0
      %v6598 = vmax.f32 %v6550, 0.0
      %v6599 = vmax.f32 %v6551, 0.0
      %v6600 = vmax.f32 %v6552, 0.0
      %v6601 = vmax.f32 %v6553, 0.0
      %v6602 = vmax.f32 %v6554, 0.0
      %v6603 = vmax.f32 %v6555, 0.0
      %v6604 = vmax.f32 %v6556, 0.0
      %v6605 = vmax.f32 %v6557, 0.0
      %v6606 = vmax.f32 %v6558, 0.0
      %v6607 = vmax.f32 %v6559, 0.0
      %v6608 = vmax.f32 %v6560, 0.0
      %v6609 = vmax.f32 %v6561, 0.0
      %v6610 = vmax.f32 %v6562, 0.0
      %v6611 = vmax.f32 %v6563, 0.0
      %v6612 = vmax.f32 %v6564, 0.0
      %v6613 = vmax.f32 %v6565, 0.0
      %v6614 = vmax.f32 %v6566, 0.0
      %v6615 = vmax.f32 %v6567, 0.0
      %v6616 = vmax.f32 %v6568, 0.0
      %v6617 = vmax.f32 %v6569, 0.0
      %v6618 = vmax.f32 %v6570, 0.0
      %v6619 = vmax.f32 %v6571, 0.0
      %v6620 = vmax.f32 %v6572, 0.0
      %v6621 = vmax.f32 %v6573, 0.0
      %v6622 = vmax.f32 %v6574, 0.0
      %v6623 = vmax.f32 %v6575, 0.0
      %v6624 = vmax.f32 %v6576, 0.0
      %v6625 = vmax.f32 %v6577, 0.0
      %v6626 = vmax.f32 %v6578, 0.0
      %v6627 = vmax.f32 %v6579, 0.0
      %v6628 = vmax.f32 %v6580, 0.0
      %v6629 = vmax.f32 %v6581, 0.0
      %v6630 = vmax.f32 %v6582, 0.0
      %v6631 = vmax.f32 %v6583, 0.0
      %6632 = vst [vmem:[%s278] sm:$0xff] %v6584
      %6633 = vst [vmem:[%s278 + $0x8] sm:$0xff] %v6585
      %6634 = vst [vmem:[%s278 + $0x10] sm:$0xff] %v6586
      %6635 = vst [vmem:[%s278 + $0x18] sm:$0xff] %v6587
      %6636 = vst [vmem:[%s278 + $0x20] sm:$0xff] %v6588
      %6637 = vst [vmem:[%s278 + $0x28] sm:$0xff] %v6589
      %6638 = vst [vmem:[%s278 + $0x30] sm:$0xff] %v6590
      %6639 = vst [vmem:[%s278 + $0x38] sm:$0xff] %v6591
      %6640 = vst [vmem:[%s278 + $0x40] sm:$0xff] %v6592
      %6641 = vst [vmem:[%s278 + $0x48] sm:$0xff] %v6593
      %6642 = vst [vmem:[%s278 + $0x50] sm:$0xff] %v6594
      %6643 = vst [vmem:[%s278 + $0x58] sm:$0xff] %v6595
      %6644 = vst [vmem:[%s278 + $0x60] sm:$0xff] %v6596
      %6645 = vst [vmem:[%s278 + $0x68] sm:$0xff] %v6597
      %6646 = vst [vmem:[%s278 + $0x70] sm:$0xff] %v6598
      %6647 = vst [vmem:[%s278 + $0x78] sm:$0xff] %v6599
      %6648 = vst [vmem:[%s278 + $0x80] sm:$0xff] %v6600
      %6649 = vst [vmem:[%s278 + $0x88] sm:$0xff] %v6601
      %6650 = vst [vmem:[%s278 + $0x90] sm:$0xff] %v6602
      %6651 = vst [vmem:[%s278 + $0x98] sm:$0xff] %v6603
      %6652 = vst [vmem:[%s278 + $0xa0] sm:$0xff] %v6604
      %6653 = vst [vmem:[%s278 + $0xa8] sm:$0xff] %v6605
      %6654 = vst [vmem:[%s278 + $0xb0] sm:$0xff] %v6606
      %6655 = vst [vmem:[%s278 + $0xb8] sm:$0xff] %v6607
      %6656 = vst [vmem:[%s278 + $0xc0] sm:$0xff] %v6608
      %6657 = vst [vmem:[%s278 + $0xc8] sm:$0xff] %v6609
      %6658 = vst [vmem:[%s278 + $0xd0] sm:$0xff] %v6610
      %6659 = vst [vmem:[%s278 + $0xd8] sm:$0xff] %v6611
      %6660 = vst [vmem:[%s278 + $0xe0] sm:$0xff] %v6612
      %6661 = vst [vmem:[%s278 + $0xe8] sm:$0xff] %v6613
      %6662 = vst [vmem:[%s278 + $0xf0] sm:$0xff] %v6614
      %6663 = vst [vmem:[%s278 + $0xf8] sm:$0xff] %v6615
      %6664 = vst [vmem:[%s278 + $0x100] sm:$0xff] %v6616
      %6665 = vst [vmem:[%s278 + $0x108] sm:$0xff] %v6617
      %6666 = vst [vmem:[%s278 + $0x110] sm:$0xff] %v6618
      %6667 = vst [vmem:[%s278 + $0x118] sm:$0xff] %v6619
      %6668 = vst [vmem:[%s278 + $0x120] sm:$0xff] %v6620
      %6669 = vst [vmem:[%s278 + $0x128] sm:$0xff] %v6621
      %6670 = vst [vmem:[%s278 + $0x130] sm:$0xff] %v6622
      %6671 = vst [vmem:[%s278 + $0x138] sm:$0xff] %v6623
      %6672 = vst [vmem:[%s278 + $0x140] sm:$0xff] %v6624
      %6673 = vst [vmem:[%s278 + $0x148] sm:$0xff] %v6625
      %6674 = vst [vmem:[%s278 + $0x150] sm:$0xff] %v6626
      %6675 = vst [vmem:[%s278 + $0x158] sm:$0xff] %v6627
      %6676 = vst [vmem:[%s278 + $0x160] sm:$0xff] %v6628
      %6677 = vst [vmem:[%s278 + $0x168] sm:$0xff] %v6629
      %6678 = vst [vmem:[%s278 + $0x170] sm:$0xff] %v6630
      %6679 = vst [vmem:[%s278 + $0x178] sm:$0xff] %v6631
      %p6680 = scmp.lt.s32.totalorder %s18, 1
      %s6681 = scalar_select %p6680, %s18, 1
      %s6682 = smul.addr %s6681, 48
      %s6683 = smul.addr %s6682, 8
      %s6684 = scalar_lea.vmem %s7, %s6683
      // Predicated region
      $region49: #{bottleneck_forward.1} parent=47 // pred_check
        %p6685 = pneg %p188
      $region50: #{bottleneck_forward.1} parent=47 // pred_check_branch
        %6687 = sbr.rel (%p6685) target = $region52
      $region51: #{bottleneck_forward.1} parent=47 // pred_region
        _
      $region52: #{bottleneck_forward.1} parent=47 // pred_fallthru
        _
    $region48: #{bottleneck_forward.1} parent=5 // pred_fallthru
      _
    %p6688 = scmp.le.s32.totalorder 2, %s13
    // Predicated region
    $region53: #{bottleneck_forward.1} parent=5 // pred_check
      %p6689 = pneg %p6688
    $region54: #{bottleneck_forward.1} parent=5 // pred_check_branch
      %6691 = sbr.rel (%p6689) target = $region56
    $region55: #{bottleneck_forward.1} parent=5 // pred_region
      %s6692 = ssub.s32 %s13, 2
      // Predicated region
      $region57: #{bottleneck_forward.1} parent=55 // pred_check
        %p6693 = pneg %p194
      $region58: #{bottleneck_forward.1} parent=55 // pred_check_branch
        %6695 = sbr.rel (%p6693) target = $region60
      $region59: #{bottleneck_forward.1} parent=55 // pred_region
        %p6696 = scmp.lt.s32.totalorder %s19, 1
        %s6697 = scalar_select %p6696, %s19, 1
        %s6698 = smul.addr %s6697, 48
        %s6699 = smul.addr %s6698, 8
        %s6700 = scalar_lea.vmem %s7, %s6699
      $region60: #{bottleneck_forward.1} parent=55 // pred_fallthru
        _
    $region56: #{bottleneck_forward.1} parent=5 // pred_fallthru
      _
  $region6: #{bottleneck_forward.1} parent=0 // loop_footer
    %s17 = sadd.s32 1, %s13
  $region7: #{bottleneck_forward.1} parent=0 // loop_footer_branch
    %12 = sbr.rel target = $region3
  $region8: #{bottleneck_forward.1} parent=0 // loop_exit
    _

</llo_original>
